<compile_context>
chip_gen: v6e
topology: v6e:2x2x1
jax: 0.10.0
libtpu: 0.0.40
codegen_flags: <defaults>
</compile_context>

<pallas_src>
import math
import functools

import jax
import jax.numpy as jnp
from jax.experimental import pallas as pl
from jax.experimental.pallas import tpu as pltpu


# ----------------------------- in-kernel helpers -----------------------------

def _layernorm(x, gamma, beta, eps=1e-5):
    # PyTorch nn.LayerNorm: biased variance, eps inside sqrt. Keep in f32.
    mu = jnp.mean(x, axis=-1, keepdims=True)
    var = jnp.mean((x - mu) ** 2, axis=-1, keepdims=True)
    return (x - mu) * jax.lax.rsqrt(var + eps) * gamma + beta


def _gelu(x):
    # nn.GELU() default = exact erf formulation. Keep in f32.
    return 0.5 * x * (1.0 + jax.lax.erf(x * (1.0 / math.sqrt(2.0))))


# ----------------------------- fused encoder kernel -----------------------------

def encoder_kernel(
    tok_ref, emb_ref, pe_ref,
    wqkv_ref, bqkv_ref, wo_ref, bo_ref,
    g1_ref, be1_ref, w1_ref, bf1_ref, w2_ref, bf2_ref, g2_ref, be2_ref,
    lng_ref, lnb_ref, fcw_ref, fcb_ref,
    o_ref,
    x_scr,
    *, n_layers, n_heads, d_k, B, T,
):
    D = pe_ref.shape[-1]
    BT = B * T
    HD = n_heads * d_k
    bf16 = jnp.bfloat16

    # ---- embedding gather: dynamic leading-dim row read per (b, t); exact f32 ----
    # TODO(synk): out-of-range token ids read an arbitrary row instead of raising like nn.Embedding.
    for i in range(BT):                                        # static loop, BT is small
        tid = tok_ref[i]                                       # scalar read from SMEM
        x_scr[pl.ds(i, 1), :] = emb_ref[tid]                   # (1, D) row copy from VMEM table
    x = x_scr[...]                                             # (BT, D) f32
    x = (x.reshape(B, T, D) + pe_ref[...]).reshape(BT, D)      # + positional encoding
    # Dropout after PE is identity at inference.

    # additive bias that keeps attention within each batch element (shared by all heads);
    # built from splat constants + concats (no iota / integer-division needed).
    bid_row = jnp.concatenate([jnp.full((T, 1), float(b), jnp.float32) for b in range(B)], axis=0)
    bid_col = jnp.concatenate([jnp.full((1, T), float(b), jnp.float32) for b in range(B)], axis=1)
    attn_bias = jnp.where(bid_row == bid_col, 0.0, -1e30)      # (BT, BT) f32

    def split_heads(m):                                        # (BT, HD) -> (H, BT, d_k)
        return jnp.stack([m[:, h * d_k:(h + 1) * d_k] for h in range(n_heads)], axis=0)

    scale = 1.0 / math.sqrt(d_k)
    for li in range(n_layers):                                 # static unrolled layer loop
        # ---- fused QKV projection: one (BT, D) x (D, 3*HD) MXU matmul ----
        xb = x.astype(bf16)
        qkv = jnp.dot(xb, wqkv_ref[li], preferred_element_type=jnp.float32) + bqkv_ref[li]
        q = qkv[:, 0:HD] * scale                               # fold 1/sqrt(d_k) into q once
        k = qkv[:, HD:2 * HD]
        v = qkv[:, 2 * HD:3 * HD]

        # ---- all heads at once: head axis is the single batch dim of the einsums ----
        qh = split_heads(q).astype(bf16)                       # (H, BT, d_k)
        kh = split_heads(k).astype(bf16)
        vh = split_heads(v).astype(bf16)
        s = jnp.einsum("hqd,hkd->hqk", qh, kh,
                       preferred_element_type=jnp.float32) + attn_bias   # (H, BT, BT) f32
        s = s - jnp.max(s, axis=-1, keepdims=True)
        p = jnp.exp(s)
        p = p / jnp.sum(p, axis=-1, keepdims=True)             # exact division (f32)
        o = jnp.einsum("hqk,hkd->hqd", p.astype(bf16), vh,
                       preferred_element_type=jnp.float32)     # (H, BT, d_k) f32

        # ---- merge heads (lane concat) + single output-projection matmul ----
        attn = jnp.concatenate([o[h] for h in range(n_heads)], axis=1)   # (BT, HD)
        attn = jnp.dot(attn.astype(bf16), wo_ref[li],
                       preferred_element_type=jnp.float32) + bo_ref[li]

        # x = ln1(x + mha(x))
        h1 = _layernorm(x + attn, g1_ref[li], be1_ref[li])

        # feed-forward: Linear(D, 4D) -> GELU -> Linear(4D, D)  (Dropout = identity)
        f = jnp.dot(h1.astype(bf16), w1_ref[li], preferred_element_type=jnp.float32) + bf1_ref[li]
        f = _gelu(f)
        f = jnp.dot(f.astype(bf16), w2_ref[li], preferred_element_type=jnp.float32) + bf2_ref[li]

        # x = ln2(h1 + ffn(h1))
        x = _layernorm(h1 + f, g2_ref[li], be2_ref[li])

    # ---- CLS token (row 0 of every batch element) + final LN + FC head ----
    cls = x.reshape(B, T, D)[:, 0, :]                          # (B, D), no per-batch concat
    cls = _layernorm(cls, lng_ref[...], lnb_ref[...])
    # lane-padded logits (dense vst); padding columns are zero weights/bias, sliced off outside.
    o_ref[...] = jnp.dot(cls.astype(bf16), fcw_ref[...],
                         preferred_element_type=jnp.float32) + fcb_ref[...]


# ----------------------------- wrapper -----------------------------

_LANE = 128


def encoder_forward(tokens, params, n_heads, d_k, n_layers):
    """Full Encoder forward as a single fused pallas_call."""
    B, T = tokens.shape
    D = params["embedding"].shape[1]
    C = params["fc_w"].shape[1]
    BT = B * T
    bf16 = jnp.bfloat16

    # fused QKV weights / biases: (L, D, 3*HD) / (L, 1, 3*HD)
    wqkv = jnp.concatenate([params["wq"], params["wk"], params["wv"]], axis=-1).astype(bf16)
    bqkv = jnp.concatenate([params["bq"], params["bk"], params["bv"]], axis=-1)

    # lane-padded classification head -> lane-dense output store
    c_pad = max(_LANE, C)
    fcw = jnp.zeros((D, c_pad), jnp.float32).at[:, :C].set(params["fc_w"]).astype(bf16)
    fcb = jnp.zeros((1, c_pad), jnp.float32).at[:, :C].set(params["fc_b"])

    args = (
        tokens.reshape(BT).astype(jnp.int32),        # token ids -> SMEM
        params["embedding"].reshape(-1, 1, D),       # (V, 1, D): dynamic leading-dim row gather
        params["pe"][:T],                            # (T, D)
        wqkv, bqkv,
        params["wo"].astype(bf16), params["bo"],
        params["g1"], params["be1"],
        params["w1"].astype(bf16), params["bf1"],
        params["w2"].astype(bf16), params["bf2"],
        params["g2"], params["be2"],
        params["ln_g"], params["ln_b"],
        fcw, fcb,
    )

    in_specs = (
        [pl.BlockSpec(memory_space=pltpu.MemorySpace.SMEM)]                 # token ids
        + [pl.BlockSpec(memory_space=pltpu.MemorySpace.VMEM)] * (len(args) - 1)
    )

    kern = functools.partial(encoder_kernel, n_layers=n_layers, n_heads=n_heads,
                             d_k=d_k, B=B, T=T)

    # Grid-less: whole problem is one block; everything stays resident in VMEM
    # (few hundred KiB at these sizes).  See TODO(synk) at top for scaling strategy.
    out = pl.pallas_call(
        kern,
        out_shape=jax.ShapeDtypeStruct((B, c_pad), jnp.float32),
        in_specs=in_specs,
        scratch_shapes=[pltpu.VMEM((BT, D), jnp.float32)],
    )(*args)
    return out[:, :C]


# ----------------------------- parameter init (deterministic) -----------------------------

def init_params(key, vocab_size, max_len, d_k, d_model, n_heads, n_layers, n_classes):
    dh = n_heads * d_k
    dff = 4 * d_model
    keys = jax.random.split(key, 2 + n_layers)

    def lin(k, fan_in, fan_out):
        return (0.02 * jax.random.normal(k, (fan_in, fan_out), jnp.float32),
                jnp.zeros((1, fan_out), jnp.float32))

    params = {}
    params["embedding"] = 0.02 * jax.random.normal(keys[0], (vocab_size, d_model), jnp.float32)

    # sinusoidal positional encoding (same formula as the PyTorch PositionalEncoding)
    position = jnp.arange(max_len, dtype=jnp.float32)[:, None]
    div_term = jnp.exp(jnp.arange(0, d_model, 2, dtype=jnp.float32) * (-math.log(10000.0) / d_model))
    pe = jnp.zeros((max_len, d_model), jnp.float32)
    pe = pe.at[:, 0::2].set(jnp.sin(position * div_term))
    pe = pe.at[:, 1::2].set(jnp.cos(position * div_term))
    params["pe"] = pe

    names = ["wq", "bq", "wk", "bk", "wv", "bv", "wo", "bo", "g1", "be1",
             "w1", "bf1", "w2", "bf2", "g2", "be2"]
    stacks = {n: [] for n in names}
    for li in range(n_layers):
        bk = jax.random.split(keys[2 + li], 6)
        wq, bq = lin(bk[0], d_model, dh)
        wk, bkb = lin(bk[1], d_model, dh)
        wv, bv = lin(bk[2], d_model, dh)
        wo, bo = lin(bk[3], dh, d_model)
        w1, bf1 = lin(bk[4], d_model, dff)
        w2, bf2 = lin(bk[5], dff, d_model)
        vals = dict(
            wq=wq, bq=bq, wk=wk, bk=bkb, wv=wv, bv=bv, wo=wo, bo=bo,
            g1=jnp.ones((1, d_model), jnp.float32), be1=jnp.zeros((1, d_model), jnp.float32),
            w1=w1, bf1=bf1, w2=w2, bf2=bf2,
            g2=jnp.ones((1, d_model), jnp.float32), be2=jnp.zeros((1, d_model), jnp.float32),
        )
        for n in names:
            stacks[n].append(vals[n])
    for n in names:
        params[n] = jnp.stack(stacks[n], axis=0)        # leading layer axis

    fc_w, fc_b = lin(keys[1], d_model, n_classes)
    params["ln_g"] = jnp.ones((1, d_model), jnp.float32)
    params["ln_b"] = jnp.zeros((1, d_model), jnp.float32)
    params["fc_w"] = fc_w
    params["fc_b"] = fc_b
    return params


# ----------------------------- main -----------------------------

if __name__ == "__main__":
    vocab_size, max_len = 100, 16
    d_k, d_model, n_heads, n_layers, n_classes = 8, 32, 4, 2, 4
    dropout_prob = 0.0  # inference: dropout is identity regardless
    B, T = 2, 8

    key = jax.random.PRNGKey(0)
    kp, kt = jax.random.split(key)
    params = init_params(kp, vocab_size, max_len, d_k, d_model, n_heads, n_layers, n_classes)
    tokens = jax.random.randint(kt, (B, T), 0, vocab_size, dtype=jnp.int32)

    out = encoder_forward(tokens, params, n_heads, d_k, n_layers)
    out = jax.block_until_ready(out)
    assert out.shape == (B, n_classes), out.shape
    print("KERNEL_OK")
</pallas_src>

<mosaic_0001>
module attributes {stable_mosaic.version = 11 : i64} {
  func.func @encoder_kernel(%arg0: memref<16xi32, #tpu.memory_space<smem>>, %arg1: memref<100x1x32xf32, #tpu.memory_space<vmem>>, %arg2: memref<8x32xf32, #tpu.memory_space<vmem>>, %arg3: memref<2x32x96xbf16, #tpu.memory_space<vmem>>, %arg4: memref<2x1x96xf32, #tpu.memory_space<vmem>>, %arg5: memref<2x32x32xbf16, #tpu.memory_space<vmem>>, %arg6: memref<2x1x32xf32, #tpu.memory_space<vmem>>, %arg7: memref<2x1x32xf32, #tpu.memory_space<vmem>>, %arg8: memref<2x1x32xf32, #tpu.memory_space<vmem>>, %arg9: memref<2x32x128xbf16, #tpu.memory_space<vmem>>, %arg10: memref<2x1x128xf32, #tpu.memory_space<vmem>>, %arg11: memref<2x128x32xbf16, #tpu.memory_space<vmem>>, %arg12: memref<2x1x32xf32, #tpu.memory_space<vmem>>, %arg13: memref<2x1x32xf32, #tpu.memory_space<vmem>>, %arg14: memref<2x1x32xf32, #tpu.memory_space<vmem>>, %arg15: memref<1x32xf32, #tpu.memory_space<vmem>>, %arg16: memref<1x32xf32, #tpu.memory_space<vmem>>, %arg17: memref<32x128xbf16, #tpu.memory_space<vmem>>, %arg18: memref<1x128xf32, #tpu.memory_space<vmem>>, %arg19: memref<2x128xf32, #tpu.memory_space<vmem>>, %arg20: memref<16x32xf32, #tpu.memory_space<vmem>>) attributes {dimension_semantics = [], scalar_prefetch = 0 : i64, scratch_operands = 1 : i64, tpu.core_type = #tpu.core_type<tc>} {
    %c0 = arith.constant 0 : index
    %0 = memref.load %arg0[%c0] : memref<16xi32, #tpu.memory_space<smem>>
    %1 = arith.index_cast %0 : i32 to index
    %c0_0 = arith.constant 0 : index
    %c0_1 = arith.constant 0 : index
    %2 = vector.load %arg1[%1, %c0_0, %c0_1] : memref<100x1x32xf32, #tpu.memory_space<vmem>>, vector<1x1x32xf32>
    %3 = vector.shape_cast %2 : vector<1x1x32xf32> to vector<1x32xf32>
    %c0_2 = arith.constant 0 : index
    %c0_3 = arith.constant 0 : index
    %4 = vector.load %arg20[%c0_2, %c0_3] : memref<16x32xf32, #tpu.memory_space<vmem>>, vector<1x32xf32>
    tpu.vector_store %arg20[%c0_2, %c0_3], %3 {strides = array<i32>} : memref<16x32xf32, #tpu.memory_space<vmem>>, vector<1x32xf32>,
    %c1 = arith.constant 1 : index
    %5 = memref.load %arg0[%c1] : memref<16xi32, #tpu.memory_space<smem>>
    %6 = arith.index_cast %5 : i32 to index
    %c0_4 = arith.constant 0 : index
    %c0_5 = arith.constant 0 : index
    %7 = vector.load %arg1[%6, %c0_4, %c0_5] : memref<100x1x32xf32, #tpu.memory_space<vmem>>, vector<1x1x32xf32>
    %8 = vector.shape_cast %7 : vector<1x1x32xf32> to vector<1x32xf32>
    %c1_6 = arith.constant 1 : index
    %c0_7 = arith.constant 0 : index
    %9 = vector.load %arg20[%c1_6, %c0_7] : memref<16x32xf32, #tpu.memory_space<vmem>>, vector<1x32xf32>
    tpu.vector_store %arg20[%c1_6, %c0_7], %8 {strides = array<i32>} : memref<16x32xf32, #tpu.memory_space<vmem>>, vector<1x32xf32>,
    %c2 = arith.constant 2 : index
    %10 = memref.load %arg0[%c2] : memref<16xi32, #tpu.memory_space<smem>>
    %11 = arith.index_cast %10 : i32 to index
    %c0_8 = arith.constant 0 : index
    %c0_9 = arith.constant 0 : index
    %12 = vector.load %arg1[%11, %c0_8, %c0_9] : memref<100x1x32xf32, #tpu.memory_space<vmem>>, vector<1x1x32xf32>
    %13 = vector.shape_cast %12 : vector<1x1x32xf32> to vector<1x32xf32>
    %c2_10 = arith.constant 2 : index
    %c0_11 = arith.constant 0 : index
    %14 = vector.load %arg20[%c2_10, %c0_11] : memref<16x32xf32, #tpu.memory_space<vmem>>, vector<1x32xf32>
    tpu.vector_store %arg20[%c2_10, %c0_11], %13 {strides = array<i32>} : memref<16x32xf32, #tpu.memory_space<vmem>>, vector<1x32xf32>,
    %c3 = arith.constant 3 : index
    %15 = memref.load %arg0[%c3] : memref<16xi32, #tpu.memory_space<smem>>
    %16 = arith.index_cast %15 : i32 to index
    %c0_12 = arith.constant 0 : index
    %c0_13 = arith.constant 0 : index
    %17 = vector.load %arg1[%16, %c0_12, %c0_13] : memref<100x1x32xf32, #tpu.memory_space<vmem>>, vector<1x1x32xf32>
    %18 = vector.shape_cast %17 : vector<1x1x32xf32> to vector<1x32xf32>
    %c3_14 = arith.constant 3 : index
    %c0_15 = arith.constant 0 : index
    %19 = vector.load %arg20[%c3_14, %c0_15] : memref<16x32xf32, #tpu.memory_space<vmem>>, vector<1x32xf32>
    tpu.vector_store %arg20[%c3_14, %c0_15], %18 {strides = array<i32>} : memref<16x32xf32, #tpu.memory_space<vmem>>, vector<1x32xf32>,
    %c4 = arith.constant 4 : index
    %20 = memref.load %arg0[%c4] : memref<16xi32, #tpu.memory_space<smem>>
    %21 = arith.index_cast %20 : i32 to index
    %c0_16 = arith.constant 0 : index
    %c0_17 = arith.constant 0 : index
    %22 = vector.load %arg1[%21, %c0_16, %c0_17] : memref<100x1x32xf32, #tpu.memory_space<vmem>>, vector<1x1x32xf32>
    %23 = vector.shape_cast %22 : vector<1x1x32xf32> to vector<1x32xf32>
    %c4_18 = arith.constant 4 : index
    %c0_19 = arith.constant 0 : index
    %24 = vector.load %arg20[%c4_18, %c0_19] : memref<16x32xf32, #tpu.memory_space<vmem>>, vector<1x32xf32>
    tpu.vector_store %arg20[%c4_18, %c0_19], %23 {strides = array<i32>} : memref<16x32xf32, #tpu.memory_space<vmem>>, vector<1x32xf32>,
    %c5 = arith.constant 5 : index
    %25 = memref.load %arg0[%c5] : memref<16xi32, #tpu.memory_space<smem>>
    %26 = arith.index_cast %25 : i32 to index
    %c0_20 = arith.constant 0 : index
    %c0_21 = arith.constant 0 : index
    %27 = vector.load %arg1[%26, %c0_20, %c0_21] : memref<100x1x32xf32, #tpu.memory_space<vmem>>, vector<1x1x32xf32>
    %28 = vector.shape_cast %27 : vector<1x1x32xf32> to vector<1x32xf32>
    %c5_22 = arith.constant 5 : index
    %c0_23 = arith.constant 0 : index
    %29 = vector.load %arg20[%c5_22, %c0_23] : memref<16x32xf32, #tpu.memory_space<vmem>>, vector<1x32xf32>
    tpu.vector_store %arg20[%c5_22, %c0_23], %28 {strides = array<i32>} : memref<16x32xf32, #tpu.memory_space<vmem>>, vector<1x32xf32>,
    %c6 = arith.constant 6 : index
    %30 = memref.load %arg0[%c6] : memref<16xi32, #tpu.memory_space<smem>>
    %31 = arith.index_cast %30 : i32 to index
    %c0_24 = arith.constant 0 : index
    %c0_25 = arith.constant 0 : index
    %32 = vector.load %arg1[%31, %c0_24, %c0_25] : memref<100x1x32xf32, #tpu.memory_space<vmem>>, vector<1x1x32xf32>
    %33 = vector.shape_cast %32 : vector<1x1x32xf32> to vector<1x32xf32>
    %c6_26 = arith.constant 6 : index
    %c0_27 = arith.constant 0 : index
    %34 = vector.load %arg20[%c6_26, %c0_27] : memref<16x32xf32, #tpu.memory_space<vmem>>, vector<1x32xf32>
    tpu.vector_store %arg20[%c6_26, %c0_27], %33 {strides = array<i32>} : memref<16x32xf32, #tpu.memory_space<vmem>>, vector<1x32xf32>,
    %c7 = arith.constant 7 : index
    %35 = memref.load %arg0[%c7] : memref<16xi32, #tpu.memory_space<smem>>
    %36 = arith.index_cast %35 : i32 to index
    %c0_28 = arith.constant 0 : index
    %c0_29 = arith.constant 0 : index
    %37 = vector.load %arg1[%36, %c0_28, %c0_29] : memref<100x1x32xf32, #tpu.memory_space<vmem>>, vector<1x1x32xf32>
    %38 = vector.shape_cast %37 : vector<1x1x32xf32> to vector<1x32xf32>
    %c7_30 = arith.constant 7 : index
    %c0_31 = arith.constant 0 : index
    %39 = vector.load %arg20[%c7_30, %c0_31] : memref<16x32xf32, #tpu.memory_space<vmem>>, vector<1x32xf32>
    tpu.vector_store %arg20[%c7_30, %c0_31], %38 {strides = array<i32>} : memref<16x32xf32, #tpu.memory_space<vmem>>, vector<1x32xf32>,
    %c8 = arith.constant 8 : index
    %40 = memref.load %arg0[%c8] : memref<16xi32, #tpu.memory_space<smem>>
    %41 = arith.index_cast %40 : i32 to index
    %c0_32 = arith.constant 0 : index
    %c0_33 = arith.constant 0 : index
    %42 = vector.load %arg1[%41, %c0_32, %c0_33] : memref<100x1x32xf32, #tpu.memory_space<vmem>>, vector<1x1x32xf32>
    %43 = vector.shape_cast %42 : vector<1x1x32xf32> to vector<1x32xf32>
    %c8_34 = arith.constant 8 : index
    %c0_35 = arith.constant 0 : index
    %44 = vector.load %arg20[%c8_34, %c0_35] : memref<16x32xf32, #tpu.memory_space<vmem>>, vector<1x32xf32>
    tpu.vector_store %arg20[%c8_34, %c0_35], %43 {strides = array<i32>} : memref<16x32xf32, #tpu.memory_space<vmem>>, vector<1x32xf32>,
    %c9 = arith.constant 9 : index
    %45 = memref.load %arg0[%c9] : memref<16xi32, #tpu.memory_space<smem>>
    %46 = arith.index_cast %45 : i32 to index
    %c0_36 = arith.constant 0 : index
    %c0_37 = arith.constant 0 : index
    %47 = vector.load %arg1[%46, %c0_36, %c0_37] : memref<100x1x32xf32, #tpu.memory_space<vmem>>, vector<1x1x32xf32>
    %48 = vector.shape_cast %47 : vector<1x1x32xf32> to vector<1x32xf32>
    %c9_38 = arith.constant 9 : index
    %c0_39 = arith.constant 0 : index
    %49 = vector.load %arg20[%c9_38, %c0_39] : memref<16x32xf32, #tpu.memory_space<vmem>>, vector<1x32xf32>
    tpu.vector_store %arg20[%c9_38, %c0_39], %48 {strides = array<i32>} : memref<16x32xf32, #tpu.memory_space<vmem>>, vector<1x32xf32>,
    %c10 = arith.constant 10 : index
    %50 = memref.load %arg0[%c10] : memref<16xi32, #tpu.memory_space<smem>>
    %51 = arith.index_cast %50 : i32 to index
    %c0_40 = arith.constant 0 : index
    %c0_41 = arith.constant 0 : index
    %52 = vector.load %arg1[%51, %c0_40, %c0_41] : memref<100x1x32xf32, #tpu.memory_space<vmem>>, vector<1x1x32xf32>
    %53 = vector.shape_cast %52 : vector<1x1x32xf32> to vector<1x32xf32>
    %c10_42 = arith.constant 10 : index
    %c0_43 = arith.constant 0 : index
    %54 = vector.load %arg20[%c10_42, %c0_43] : memref<16x32xf32, #tpu.memory_space<vmem>>, vector<1x32xf32>
    tpu.vector_store %arg20[%c10_42, %c0_43], %53 {strides = array<i32>} : memref<16x32xf32, #tpu.memory_space<vmem>>, vector<1x32xf32>,
    %c11 = arith.constant 11 : index
    %55 = memref.load %arg0[%c11] : memref<16xi32, #tpu.memory_space<smem>>
    %56 = arith.index_cast %55 : i32 to index
    %c0_44 = arith.constant 0 : index
    %c0_45 = arith.constant 0 : index
    %57 = vector.load %arg1[%56, %c0_44, %c0_45] : memref<100x1x32xf32, #tpu.memory_space<vmem>>, vector<1x1x32xf32>
    %58 = vector.shape_cast %57 : vector<1x1x32xf32> to vector<1x32xf32>
    %c11_46 = arith.constant 11 : index
    %c0_47 = arith.constant 0 : index
    %59 = vector.load %arg20[%c11_46, %c0_47] : memref<16x32xf32, #tpu.memory_space<vmem>>, vector<1x32xf32>
    tpu.vector_store %arg20[%c11_46, %c0_47], %58 {strides = array<i32>} : memref<16x32xf32, #tpu.memory_space<vmem>>, vector<1x32xf32>,
    %c12 = arith.constant 12 : index
    %60 = memref.load %arg0[%c12] : memref<16xi32, #tpu.memory_space<smem>>
    %61 = arith.index_cast %60 : i32 to index
    %c0_48 = arith.constant 0 : index
    %c0_49 = arith.constant 0 : index
    %62 = vector.load %arg1[%61, %c0_48, %c0_49] : memref<100x1x32xf32, #tpu.memory_space<vmem>>, vector<1x1x32xf32>
    %63 = vector.shape_cast %62 : vector<1x1x32xf32> to vector<1x32xf32>
    %c12_50 = arith.constant 12 : index
    %c0_51 = arith.constant 0 : index
    %64 = vector.load %arg20[%c12_50, %c0_51] : memref<16x32xf32, #tpu.memory_space<vmem>>, vector<1x32xf32>
    tpu.vector_store %arg20[%c12_50, %c0_51], %63 {strides = array<i32>} : memref<16x32xf32, #tpu.memory_space<vmem>>, vector<1x32xf32>,
    %c13 = arith.constant 13 : index
    %65 = memref.load %arg0[%c13] : memref<16xi32, #tpu.memory_space<smem>>
    %66 = arith.index_cast %65 : i32 to index
    %c0_52 = arith.constant 0 : index
    %c0_53 = arith.constant 0 : index
    %67 = vector.load %arg1[%66, %c0_52, %c0_53] : memref<100x1x32xf32, #tpu.memory_space<vmem>>, vector<1x1x32xf32>
    %68 = vector.shape_cast %67 : vector<1x1x32xf32> to vector<1x32xf32>
    %c13_54 = arith.constant 13 : index
    %c0_55 = arith.constant 0 : index
    %69 = vector.load %arg20[%c13_54, %c0_55] : memref<16x32xf32, #tpu.memory_space<vmem>>, vector<1x32xf32>
    tpu.vector_store %arg20[%c13_54, %c0_55], %68 {strides = array<i32>} : memref<16x32xf32, #tpu.memory_space<vmem>>, vector<1x32xf32>,
    %c14 = arith.constant 14 : index
    %70 = memref.load %arg0[%c14] : memref<16xi32, #tpu.memory_space<smem>>
    %71 = arith.index_cast %70 : i32 to index
    %c0_56 = arith.constant 0 : index
    %c0_57 = arith.constant 0 : index
    %72 = vector.load %arg1[%71, %c0_56, %c0_57] : memref<100x1x32xf32, #tpu.memory_space<vmem>>, vector<1x1x32xf32>
    %73 = vector.shape_cast %72 : vector<1x1x32xf32> to vector<1x32xf32>
    %c14_58 = arith.constant 14 : index
    %c0_59 = arith.constant 0 : index
    %74 = vector.load %arg20[%c14_58, %c0_59] : memref<16x32xf32, #tpu.memory_space<vmem>>, vector<1x32xf32>
    tpu.vector_store %arg20[%c14_58, %c0_59], %73 {strides = array<i32>} : memref<16x32xf32, #tpu.memory_space<vmem>>, vector<1x32xf32>,
    %c15 = arith.constant 15 : index
    %75 = memref.load %arg0[%c15] : memref<16xi32, #tpu.memory_space<smem>>
    %76 = arith.index_cast %75 : i32 to index
    %c0_60 = arith.constant 0 : index
    %c0_61 = arith.constant 0 : index
    %77 = vector.load %arg1[%76, %c0_60, %c0_61] : memref<100x1x32xf32, #tpu.memory_space<vmem>>, vector<1x1x32xf32>
    %78 = vector.shape_cast %77 : vector<1x1x32xf32> to vector<1x32xf32>
    %c15_62 = arith.constant 15 : index
    %c0_63 = arith.constant 0 : index
    %79 = vector.load %arg20[%c15_62, %c0_63] : memref<16x32xf32, #tpu.memory_space<vmem>>, vector<1x32xf32>
    tpu.vector_store %arg20[%c15_62, %c0_63], %78 {strides = array<i32>} : memref<16x32xf32, #tpu.memory_space<vmem>>, vector<1x32xf32>,
    %c0_64 = arith.constant 0 : index
    %c0_65 = arith.constant 0 : index
    %80 = vector.load %arg20[%c0_64, %c0_65] : memref<16x32xf32, #tpu.memory_space<vmem>>, vector<16x32xf32>
    %81 = vector.shape_cast %80 : vector<16x32xf32> to vector<2x8x32xf32>
    %c0_66 = arith.constant 0 : index
    %c0_67 = arith.constant 0 : index
    %82 = vector.load %arg2[%c0_66, %c0_67] : memref<8x32xf32, #tpu.memory_space<vmem>>, vector<8x32xf32>
    %83 = vector.shape_cast %82 : vector<8x32xf32> to vector<1x8x32xf32>
    %84 = vector.broadcast %83 : vector<1x8x32xf32> to vector<2x8x32xf32>
    %85 = arith.addf %81, %84 : vector<2x8x32xf32>
    %86 = vector.shape_cast %85 : vector<2x8x32xf32> to vector<16x32xf32>
    %cst = arith.constant 0.000000e+00 : f32
    %87 = vector.broadcast %cst : f32 to vector<8x1xf32>
    %cst_68 = arith.constant 1.000000e+00 : f32
    %88 = vector.broadcast %cst_68 : f32 to vector<8x1xf32>
    %89 = tpu.concatenate %87, %88 in 0 : vector<8x1xf32>, vector<8x1xf32> -> vector<16x1xf32>
    %cst_69 = arith.constant 0.000000e+00 : f32
    %90 = vector.broadcast %cst_69 : f32 to vector<1x8xf32>
    %cst_70 = arith.constant 1.000000e+00 : f32
    %91 = vector.broadcast %cst_70 : f32 to vector<1x8xf32>
    %92 = tpu.concatenate %90, %91 in 1 : vector<1x8xf32>, vector<1x8xf32> -> vector<1x16xf32>
    %93 = vector.broadcast %89 : vector<16x1xf32> to vector<16x16xf32>
    %94 = vector.broadcast %92 : vector<1x16xf32> to vector<16x16xf32>
    %95 = arith.cmpf oeq, %93, %94 : vector<16x16xf32>
    %cst_71 = arith.constant 0.000000e+00 : f32
    %cst_72 = arith.constant -1.000000e+30 : f32
    %96 = vector.broadcast %cst_71 : f32 to vector<16x16xf32>
    %97 = vector.broadcast %cst_72 : f32 to vector<16x16xf32>
    %98 = arith.select %95, %96, %97 : vector<16x16xi1>, vector<16x16xf32>
    %99 = arith.truncf %86 : vector<16x32xf32> to vector<16x32xbf16>
    %c0_73 = arith.constant 0 : index
    %c0_74 = arith.constant 0 : index
    %c0_75 = arith.constant 0 : index
    %100 = vector.load %arg3[%c0_73, %c0_74, %c0_75] : memref<2x32x96xbf16, #tpu.memory_space<vmem>>, vector<1x32x96xbf16>
    %101 = vector.shape_cast %100 : vector<1x32x96xbf16> to vector<32x96xbf16>
    %cst_76 = arith.constant dense<0.000000e+00> : vector<16x96xf32>
    %102 = tpu.matmul %99, %101, %cst_76 {dimension_numbers = #tpu.dot_dimension_numbers<[1], [0], [0], [1], [0, 0, 1, 1], [], []>} : vector<16x32xbf16>, vector<32x96xbf16>, vector<16x96xf32> -> vector<16x96xf32>
    %c0_77 = arith.constant 0 : index
    %c0_78 = arith.constant 0 : index
    %c0_79 = arith.constant 0 : index
    %103 = vector.load %arg4[%c0_77, %c0_78, %c0_79] : memref<2x1x96xf32, #tpu.memory_space<vmem>>, vector<1x1x96xf32>
    %104 = vector.shape_cast %103 : vector<1x1x96xf32> to vector<1x96xf32>
    %105 = vector.broadcast %104 : vector<1x96xf32> to vector<16x96xf32>
    %106 = arith.addf %102, %105 : vector<16x96xf32>
    %107 = vector.extract_strided_slice %106 {offsets = [0, 0], sizes = [16, 32], strides = [1, 1]} : vector<16x96xf32> to vector<16x32xf32>
    %cst_80 = arith.constant 0.353553385 : f32
    %108 = vector.broadcast %cst_80 : f32 to vector<16x32xf32>
    %109 = arith.mulf %107, %108 : vector<16x32xf32>
    %110 = vector.extract_strided_slice %106 {offsets = [0, 32], sizes = [16, 32], strides = [1, 1]} : vector<16x96xf32> to vector<16x32xf32>
    %111 = vector.extract_strided_slice %106 {offsets = [0, 64], sizes = [16, 32], strides = [1, 1]} : vector<16x96xf32> to vector<16x32xf32>
    %112 = vector.extract_strided_slice %109 {offsets = [0, 0], sizes = [16, 8], strides = [1, 1]} : vector<16x32xf32> to vector<16x8xf32>
    %113 = vector.extract_strided_slice %109 {offsets = [0, 8], sizes = [16, 8], strides = [1, 1]} : vector<16x32xf32> to vector<16x8xf32>
    %114 = vector.extract_strided_slice %109 {offsets = [0, 16], sizes = [16, 8], strides = [1, 1]} : vector<16x32xf32> to vector<16x8xf32>
    %115 = vector.extract_strided_slice %109 {offsets = [0, 24], sizes = [16, 8], strides = [1, 1]} : vector<16x32xf32> to vector<16x8xf32>
    %116 = vector.shape_cast %112 : vector<16x8xf32> to vector<1x16x8xf32>
    %117 = vector.shape_cast %113 : vector<16x8xf32> to vector<1x16x8xf32>
    %118 = vector.shape_cast %114 : vector<16x8xf32> to vector<1x16x8xf32>
    %119 = vector.shape_cast %115 : vector<16x8xf32> to vector<1x16x8xf32>
    %120 = tpu.concatenate %116, %117, %118, %119 in 0 : vector<1x16x8xf32>, vector<1x16x8xf32>, vector<1x16x8xf32>, vector<1x16x8xf32> -> vector<4x16x8xf32>
    %121 = arith.truncf %120 : vector<4x16x8xf32> to vector<4x16x8xbf16>
    %122 = vector.extract_strided_slice %110 {offsets = [0, 0], sizes = [16, 8], strides = [1, 1]} : vector<16x32xf32> to vector<16x8xf32>
    %123 = vector.extract_strided_slice %110 {offsets = [0, 8], sizes = [16, 8], strides = [1, 1]} : vector<16x32xf32> to vector<16x8xf32>
    %124 = vector.extract_strided_slice %110 {offsets = [0, 16], sizes = [16, 8], strides = [1, 1]} : vector<16x32xf32> to vector<16x8xf32>
    %125 = vector.extract_strided_slice %110 {offsets = [0, 24], sizes = [16, 8], strides = [1, 1]} : vector<16x32xf32> to vector<16x8xf32>
    %126 = vector.shape_cast %122 : vector<16x8xf32> to vector<1x16x8xf32>
    %127 = vector.shape_cast %123 : vector<16x8xf32> to vector<1x16x8xf32>
    %128 = vector.shape_cast %124 : vector<16x8xf32> to vector<1x16x8xf32>
    %129 = vector.shape_cast %125 : vector<16x8xf32> to vector<1x16x8xf32>
    %130 = tpu.concatenate %126, %127, %128, %129 in 0 : vector<1x16x8xf32>, vector<1x16x8xf32>, vector<1x16x8xf32>, vector<1x16x8xf32> -> vector<4x16x8xf32>
    %131 = arith.truncf %130 : vector<4x16x8xf32> to vector<4x16x8xbf16>
    %132 = vector.extract_strided_slice %111 {offsets = [0, 0], sizes = [16, 8], strides = [1, 1]} : vector<16x32xf32> to vector<16x8xf32>
    %133 = vector.extract_strided_slice %111 {offsets = [0, 8], sizes = [16, 8], strides = [1, 1]} : vector<16x32xf32> to vector<16x8xf32>
    %134 = vector.extract_strided_slice %111 {offsets = [0, 16], sizes = [16, 8], strides = [1, 1]} : vector<16x32xf32> to vector<16x8xf32>
    %135 = vector.extract_strided_slice %111 {offsets = [0, 24], sizes = [16, 8], strides = [1, 1]} : vector<16x32xf32> to vector<16x8xf32>
    %136 = vector.shape_cast %132 : vector<16x8xf32> to vector<1x16x8xf32>
    %137 = vector.shape_cast %133 : vector<16x8xf32> to vector<1x16x8xf32>
    %138 = vector.shape_cast %134 : vector<16x8xf32> to vector<1x16x8xf32>
    %139 = vector.shape_cast %135 : vector<16x8xf32> to vector<1x16x8xf32>
    %140 = tpu.concatenate %136, %137, %138, %139 in 0 : vector<1x16x8xf32>, vector<1x16x8xf32>, vector<1x16x8xf32>, vector<1x16x8xf32> -> vector<4x16x8xf32>
    %141 = arith.truncf %140 : vector<4x16x8xf32> to vector<4x16x8xbf16>
    "tpu.trace_start"() <{level = 10 : i32, message = "hqd,hkd->hqk"}> : () -> ()
    %cst_81 = arith.constant dense<0.000000e+00> : vector<4x16x16xf32>
    %142 = tpu.matmul %121, %131, %cst_81 {dimension_numbers = #tpu.dot_dimension_numbers<[2], [2], [1], [1], [0, 0, 0, 1, 1, 1], [0], [0]>} : vector<4x16x8xbf16>, vector<4x16x8xbf16>, vector<4x16x16xf32> -> vector<4x16x16xf32>
    "tpu.trace_stop"() : () -> ()
    %143 = vector.shape_cast %98 : vector<16x16xf32> to vector<1x16x16xf32>
    %144 = vector.broadcast %143 : vector<1x16x16xf32> to vector<4x16x16xf32>
    %145 = arith.addf %142, %144 : vector<4x16x16xf32>
    %cst_82 = arith.constant dense<0xFF800000> : vector<4x16xf32>
    %146 = vector.multi_reduction <maximumf>, %145, %cst_82 [2] : vector<4x16x16xf32> to vector<4x16xf32>
    %147 = vector.shape_cast %146 : vector<4x16xf32> to vector<4x16x1xf32>
    %148 = vector.broadcast %147 : vector<4x16x1xf32> to vector<4x16x16xf32>
    %149 = arith.subf %145, %148 : vector<4x16x16xf32>
    %150 = math.exp %149 : vector<4x16x16xf32>
    %cst_83 = arith.constant dense<0.000000e+00> : vector<4x16xf32>
    %151 = vector.multi_reduction <add>, %150, %cst_83 [2] : vector<4x16x16xf32> to vector<4x16xf32>
    %152 = vector.shape_cast %151 : vector<4x16xf32> to vector<4x16x1xf32>
    %153 = vector.broadcast %152 : vector<4x16x1xf32> to vector<4x16x16xf32>
    %154 = arith.divf %150, %153 : vector<4x16x16xf32>
    %155 = arith.truncf %154 : vector<4x16x16xf32> to vector<4x16x16xbf16>
    "tpu.trace_start"() <{level = 10 : i32, message = "hqk,hkd->hqd"}> : () -> ()
    %cst_84 = arith.constant dense<0.000000e+00> : vector<4x16x8xf32>
    %156 = tpu.matmul %155, %141, %cst_84 {dimension_numbers = #tpu.dot_dimension_numbers<[2], [1], [1], [2], [0, 0, 0, 1, 1, 2], [0], [0]>} : vector<4x16x16xbf16>, vector<4x16x8xbf16>, vector<4x16x8xf32> -> vector<4x16x8xf32>
    "tpu.trace_stop"() : () -> ()
    %157 = vector.extract_strided_slice %156 {offsets = [0, 0, 0], sizes = [1, 16, 8], strides = [1, 1, 1]} : vector<4x16x8xf32> to vector<1x16x8xf32>
    %158 = vector.shape_cast %157 : vector<1x16x8xf32> to vector<16x8xf32>
    %159 = vector.extract_strided_slice %156 {offsets = [1, 0, 0], sizes = [1, 16, 8], strides = [1, 1, 1]} : vector<4x16x8xf32> to vector<1x16x8xf32>
    %160 = vector.shape_cast %159 : vector<1x16x8xf32> to vector<16x8xf32>
    %161 = vector.extract_strided_slice %156 {offsets = [2, 0, 0], sizes = [1, 16, 8], strides = [1, 1, 1]} : vector<4x16x8xf32> to vector<1x16x8xf32>
    %162 = vector.shape_cast %161 : vector<1x16x8xf32> to vector<16x8xf32>
    %163 = vector.extract_strided_slice %156 {offsets = [3, 0, 0], sizes = [1, 16, 8], strides = [1, 1, 1]} : vector<4x16x8xf32> to vector<1x16x8xf32>
    %164 = vector.shape_cast %163 : vector<1x16x8xf32> to vector<16x8xf32>
    %165 = tpu.concatenate %158, %160, %162, %164 in 1 : vector<16x8xf32>, vector<16x8xf32>, vector<16x8xf32>, vector<16x8xf32> -> vector<16x32xf32>
    %166 = arith.truncf %165 : vector<16x32xf32> to vector<16x32xbf16>
    %c0_85 = arith.constant 0 : index
    %c0_86 = arith.constant 0 : index
    %c0_87 = arith.constant 0 : index
    %167 = vector.load %arg5[%c0_85, %c0_86, %c0_87] : memref<2x32x32xbf16, #tpu.memory_space<vmem>>, vector<1x32x32xbf16>
    %168 = vector.shape_cast %167 : vector<1x32x32xbf16> to vector<32x32xbf16>
    %cst_88 = arith.constant dense<0.000000e+00> : vector<16x32xf32>
    %169 = tpu.matmul %166, %168, %cst_88 {dimension_numbers = #tpu.dot_dimension_numbers<[1], [0], [0], [1], [0, 0, 1, 1], [], []>} : vector<16x32xbf16>, vector<32x32xbf16>, vector<16x32xf32> -> vector<16x32xf32>
    %c0_89 = arith.constant 0 : index
    %c0_90 = arith.constant 0 : index
    %c0_91 = arith.constant 0 : index
    %170 = vector.load %arg6[%c0_89, %c0_90, %c0_91] : memref<2x1x32xf32, #tpu.memory_space<vmem>>, vector<1x1x32xf32>
    %171 = vector.shape_cast %170 : vector<1x1x32xf32> to vector<1x32xf32>
    %172 = vector.broadcast %171 : vector<1x32xf32> to vector<16x32xf32>
    %173 = arith.addf %169, %172 : vector<16x32xf32>
    %174 = arith.addf %86, %173 : vector<16x32xf32>
    %c0_92 = arith.constant 0 : index
    %c0_93 = arith.constant 0 : index
    %c0_94 = arith.constant 0 : index
    %175 = vector.load %arg7[%c0_92, %c0_93, %c0_94] : memref<2x1x32xf32, #tpu.memory_space<vmem>>, vector<1x1x32xf32>
    %176 = vector.shape_cast %175 : vector<1x1x32xf32> to vector<1x32xf32>
    %c0_95 = arith.constant 0 : index
    %c0_96 = arith.constant 0 : index
    %c0_97 = arith.constant 0 : index
    %177 = vector.load %arg8[%c0_95, %c0_96, %c0_97] : memref<2x1x32xf32, #tpu.memory_space<vmem>>, vector<1x1x32xf32>
    %178 = vector.shape_cast %177 : vector<1x1x32xf32> to vector<1x32xf32>
    %cst_98 = arith.constant dense<0.000000e+00> : vector<16xf32>
    %179 = vector.multi_reduction <add>, %174, %cst_98 [1] : vector<16x32xf32> to vector<16xf32>
    %180 = vector.shape_cast %179 : vector<16xf32> to vector<16x1xf32>
    %cst_99 = arith.constant 3.200000e+01 : f32
    %181 = vector.broadcast %cst_99 : f32 to vector<16x1xf32>
    %182 = arith.divf %180, %181 : vector<16x1xf32>
    %183 = vector.broadcast %182 : vector<16x1xf32> to vector<16x32xf32>
    %184 = arith.subf %174, %183 : vector<16x32xf32>
    %185 = arith.mulf %184, %184 : vector<16x32xf32>
    %cst_100 = arith.constant dense<0.000000e+00> : vector<16xf32>
    %186 = vector.multi_reduction <add>, %185, %cst_100 [1] : vector<16x32xf32> to vector<16xf32>
    %187 = vector.shape_cast %186 : vector<16xf32> to vector<16x1xf32>
    %cst_101 = arith.constant 3.200000e+01 : f32
    %188 = vector.broadcast %cst_101 : f32 to vector<16x1xf32>
    %189 = arith.divf %187, %188 : vector<16x1xf32>
    %190 = vector.broadcast %182 : vector<16x1xf32> to vector<16x32xf32>
    %191 = arith.subf %174, %190 : vector<16x32xf32>
    %cst_102 = arith.constant 9.99999974E-6 : f32
    %192 = vector.broadcast %cst_102 : f32 to vector<16x1xf32>
    %193 = arith.addf %189, %192 : vector<16x1xf32>
    %194 = math.rsqrt %193 : vector<16x1xf32>
    %195 = vector.broadcast %194 : vector<16x1xf32> to vector<16x32xf32>
    %196 = arith.mulf %191, %195 : vector<16x32xf32>
    %197 = vector.broadcast %176 : vector<1x32xf32> to vector<16x32xf32>
    %198 = arith.mulf %196, %197 : vector<16x32xf32>
    %199 = vector.broadcast %178 : vector<1x32xf32> to vector<16x32xf32>
    %200 = arith.addf %198, %199 : vector<16x32xf32>
    %201 = arith.truncf %200 : vector<16x32xf32> to vector<16x32xbf16>
    %c0_103 = arith.constant 0 : index
    %c0_104 = arith.constant 0 : index
    %c0_105 = arith.constant 0 : index
    %202 = vector.load %arg9[%c0_103, %c0_104, %c0_105] : memref<2x32x128xbf16, #tpu.memory_space<vmem>>, vector<1x32x128xbf16>
    %203 = vector.shape_cast %202 : vector<1x32x128xbf16> to vector<32x128xbf16>
    %cst_106 = arith.constant dense<0.000000e+00> : vector<16x128xf32>
    %204 = tpu.matmul %201, %203, %cst_106 {dimension_numbers = #tpu.dot_dimension_numbers<[1], [0], [0], [1], [0, 0, 1, 1], [], []>} : vector<16x32xbf16>, vector<32x128xbf16>, vector<16x128xf32> -> vector<16x128xf32>
    %c0_107 = arith.constant 0 : index
    %c0_108 = arith.constant 0 : index
    %c0_109 = arith.constant 0 : index
    %205 = vector.load %arg10[%c0_107, %c0_108, %c0_109] : memref<2x1x128xf32, #tpu.memory_space<vmem>>, vector<1x1x128xf32>
    %206 = vector.shape_cast %205 : vector<1x1x128xf32> to vector<1x128xf32>
    %207 = vector.broadcast %206 : vector<1x128xf32> to vector<16x128xf32>
    %208 = arith.addf %204, %207 : vector<16x128xf32>
    %cst_110 = arith.constant 5.000000e-01 : f32
    %209 = vector.broadcast %cst_110 : f32 to vector<16x128xf32>
    %210 = arith.mulf %209, %208 : vector<16x128xf32>
    %cst_111 = arith.constant 0.707106769 : f32
    %211 = vector.broadcast %cst_111 : f32 to vector<16x128xf32>
    %212 = arith.mulf %208, %211 : vector<16x128xf32>
    %213 = math.erf %212 : vector<16x128xf32>
    %cst_112 = arith.constant 1.000000e+00 : f32
    %214 = vector.broadcast %cst_112 : f32 to vector<16x128xf32>
    %215 = arith.addf %214, %213 : vector<16x128xf32>
    %216 = arith.mulf %210, %215 : vector<16x128xf32>
    %217 = arith.truncf %216 : vector<16x128xf32> to vector<16x128xbf16>
    %c0_113 = arith.constant 0 : index
    %c0_114 = arith.constant 0 : index
    %c0_115 = arith.constant 0 : index
    %218 = vector.load %arg11[%c0_113, %c0_114, %c0_115] : memref<2x128x32xbf16, #tpu.memory_space<vmem>>, vector<1x128x32xbf16>
    %219 = vector.shape_cast %218 : vector<1x128x32xbf16> to vector<128x32xbf16>
    %cst_116 = arith.constant dense<0.000000e+00> : vector<16x32xf32>
    %220 = tpu.matmul %217, %219, %cst_116 {dimension_numbers = #tpu.dot_dimension_numbers<[1], [0], [0], [1], [0, 0, 1, 1], [], []>} : vector<16x128xbf16>, vector<128x32xbf16>, vector<16x32xf32> -> vector<16x32xf32>
    %c0_117 = arith.constant 0 : index
    %c0_118 = arith.constant 0 : index
    %c0_119 = arith.constant 0 : index
    %221 = vector.load %arg12[%c0_117, %c0_118, %c0_119] : memref<2x1x32xf32, #tpu.memory_space<vmem>>, vector<1x1x32xf32>
    %222 = vector.shape_cast %221 : vector<1x1x32xf32> to vector<1x32xf32>
    %223 = vector.broadcast %222 : vector<1x32xf32> to vector<16x32xf32>
    %224 = arith.addf %220, %223 : vector<16x32xf32>
    %225 = arith.addf %200, %224 : vector<16x32xf32>
    %c0_120 = arith.constant 0 : index
    %c0_121 = arith.constant 0 : index
    %c0_122 = arith.constant 0 : index
    %226 = vector.load %arg13[%c0_120, %c0_121, %c0_122] : memref<2x1x32xf32, #tpu.memory_space<vmem>>, vector<1x1x32xf32>
    %227 = vector.shape_cast %226 : vector<1x1x32xf32> to vector<1x32xf32>
    %c0_123 = arith.constant 0 : index
    %c0_124 = arith.constant 0 : index
    %c0_125 = arith.constant 0 : index
    %228 = vector.load %arg14[%c0_123, %c0_124, %c0_125] : memref<2x1x32xf32, #tpu.memory_space<vmem>>, vector<1x1x32xf32>
    %229 = vector.shape_cast %228 : vector<1x1x32xf32> to vector<1x32xf32>
    %cst_126 = arith.constant dense<0.000000e+00> : vector<16xf32>
    %230 = vector.multi_reduction <add>, %225, %cst_126 [1] : vector<16x32xf32> to vector<16xf32>
    %231 = vector.shape_cast %230 : vector<16xf32> to vector<16x1xf32>
    %cst_127 = arith.constant 3.200000e+01 : f32
    %232 = vector.broadcast %cst_127 : f32 to vector<16x1xf32>
    %233 = arith.divf %231, %232 : vector<16x1xf32>
    %234 = vector.broadcast %233 : vector<16x1xf32> to vector<16x32xf32>
    %235 = arith.subf %225, %234 : vector<16x32xf32>
    %236 = arith.mulf %235, %235 : vector<16x32xf32>
    %cst_128 = arith.constant dense<0.000000e+00> : vector<16xf32>
    %237 = vector.multi_reduction <add>, %236, %cst_128 [1] : vector<16x32xf32> to vector<16xf32>
    %238 = vector.shape_cast %237 : vector<16xf32> to vector<16x1xf32>
    %cst_129 = arith.constant 3.200000e+01 : f32
    %239 = vector.broadcast %cst_129 : f32 to vector<16x1xf32>
    %240 = arith.divf %238, %239 : vector<16x1xf32>
    %241 = vector.broadcast %233 : vector<16x1xf32> to vector<16x32xf32>
    %242 = arith.subf %225, %241 : vector<16x32xf32>
    %cst_130 = arith.constant 9.99999974E-6 : f32
    %243 = vector.broadcast %cst_130 : f32 to vector<16x1xf32>
    %244 = arith.addf %240, %243 : vector<16x1xf32>
    %245 = math.rsqrt %244 : vector<16x1xf32>
    %246 = vector.broadcast %245 : vector<16x1xf32> to vector<16x32xf32>
    %247 = arith.mulf %242, %246 : vector<16x32xf32>
    %248 = vector.broadcast %227 : vector<1x32xf32> to vector<16x32xf32>
    %249 = arith.mulf %247, %248 : vector<16x32xf32>
    %250 = vector.broadcast %229 : vector<1x32xf32> to vector<16x32xf32>
    %251 = arith.addf %249, %250 : vector<16x32xf32>
    %252 = arith.truncf %251 : vector<16x32xf32> to vector<16x32xbf16>
    %c1_131 = arith.constant 1 : index
    %c0_132 = arith.constant 0 : index
    %c0_133 = arith.constant 0 : index
    %253 = vector.load %arg3[%c1_131, %c0_132, %c0_133] : memref<2x32x96xbf16, #tpu.memory_space<vmem>>, vector<1x32x96xbf16>
    %254 = vector.shape_cast %253 : vector<1x32x96xbf16> to vector<32x96xbf16>
    %cst_134 = arith.constant dense<0.000000e+00> : vector<16x96xf32>
    %255 = tpu.matmul %252, %254, %cst_134 {dimension_numbers = #tpu.dot_dimension_numbers<[1], [0], [0], [1], [0, 0, 1, 1], [], []>} : vector<16x32xbf16>, vector<32x96xbf16>, vector<16x96xf32> -> vector<16x96xf32>
    %c1_135 = arith.constant 1 : index
    %c0_136 = arith.constant 0 : index
    %c0_137 = arith.constant 0 : index
    %256 = vector.load %arg4[%c1_135, %c0_136, %c0_137] : memref<2x1x96xf32, #tpu.memory_space<vmem>>, vector<1x1x96xf32>
    %257 = vector.shape_cast %256 : vector<1x1x96xf32> to vector<1x96xf32>
    %258 = vector.broadcast %257 : vector<1x96xf32> to vector<16x96xf32>
    %259 = arith.addf %255, %258 : vector<16x96xf32>
    %260 = vector.extract_strided_slice %259 {offsets = [0, 0], sizes = [16, 32], strides = [1, 1]} : vector<16x96xf32> to vector<16x32xf32>
    %cst_138 = arith.constant 0.353553385 : f32
    %261 = vector.broadcast %cst_138 : f32 to vector<16x32xf32>
    %262 = arith.mulf %260, %261 : vector<16x32xf32>
    %263 = vector.extract_strided_slice %259 {offsets = [0, 32], sizes = [16, 32], strides = [1, 1]} : vector<16x96xf32> to vector<16x32xf32>
    %264 = vector.extract_strided_slice %259 {offsets = [0, 64], sizes = [16, 32], strides = [1, 1]} : vector<16x96xf32> to vector<16x32xf32>
    %265 = vector.extract_strided_slice %262 {offsets = [0, 0], sizes = [16, 8], strides = [1, 1]} : vector<16x32xf32> to vector<16x8xf32>
    %266 = vector.extract_strided_slice %262 {offsets = [0, 8], sizes = [16, 8], strides = [1, 1]} : vector<16x32xf32> to vector<16x8xf32>
    %267 = vector.extract_strided_slice %262 {offsets = [0, 16], sizes = [16, 8], strides = [1, 1]} : vector<16x32xf32> to vector<16x8xf32>
    %268 = vector.extract_strided_slice %262 {offsets = [0, 24], sizes = [16, 8], strides = [1, 1]} : vector<16x32xf32> to vector<16x8xf32>
    %269 = vector.shape_cast %265 : vector<16x8xf32> to vector<1x16x8xf32>
    %270 = vector.shape_cast %266 : vector<16x8xf32> to vector<1x16x8xf32>
    %271 = vector.shape_cast %267 : vector<16x8xf32> to vector<1x16x8xf32>
    %272 = vector.shape_cast %268 : vector<16x8xf32> to vector<1x16x8xf32>
    %273 = tpu.concatenate %269, %270, %271, %272 in 0 : vector<1x16x8xf32>, vector<1x16x8xf32>, vector<1x16x8xf32>, vector<1x16x8xf32> -> vector<4x16x8xf32>
    %274 = arith.truncf %273 : vector<4x16x8xf32> to vector<4x16x8xbf16>
    %275 = vector.extract_strided_slice %263 {offsets = [0, 0], sizes = [16, 8], strides = [1, 1]} : vector<16x32xf32> to vector<16x8xf32>
    %276 = vector.extract_strided_slice %263 {offsets = [0, 8], sizes = [16, 8], strides = [1, 1]} : vector<16x32xf32> to vector<16x8xf32>
    %277 = vector.extract_strided_slice %263 {offsets = [0, 16], sizes = [16, 8], strides = [1, 1]} : vector<16x32xf32> to vector<16x8xf32>
    %278 = vector.extract_strided_slice %263 {offsets = [0, 24], sizes = [16, 8], strides = [1, 1]} : vector<16x32xf32> to vector<16x8xf32>
    %279 = vector.shape_cast %275 : vector<16x8xf32> to vector<1x16x8xf32>
    %280 = vector.shape_cast %276 : vector<16x8xf32> to vector<1x16x8xf32>
    %281 = vector.shape_cast %277 : vector<16x8xf32> to vector<1x16x8xf32>
    %282 = vector.shape_cast %278 : vector<16x8xf32> to vector<1x16x8xf32>
    %283 = tpu.concatenate %279, %280, %281, %282 in 0 : vector<1x16x8xf32>, vector<1x16x8xf32>, vector<1x16x8xf32>, vector<1x16x8xf32> -> vector<4x16x8xf32>
    %284 = arith.truncf %283 : vector<4x16x8xf32> to vector<4x16x8xbf16>
    %285 = vector.extract_strided_slice %264 {offsets = [0, 0], sizes = [16, 8], strides = [1, 1]} : vector<16x32xf32> to vector<16x8xf32>
    %286 = vector.extract_strided_slice %264 {offsets = [0, 8], sizes = [16, 8], strides = [1, 1]} : vector<16x32xf32> to vector<16x8xf32>
    %287 = vector.extract_strided_slice %264 {offsets = [0, 16], sizes = [16, 8], strides = [1, 1]} : vector<16x32xf32> to vector<16x8xf32>
    %288 = vector.extract_strided_slice %264 {offsets = [0, 24], sizes = [16, 8], strides = [1, 1]} : vector<16x32xf32> to vector<16x8xf32>
    %289 = vector.shape_cast %285 : vector<16x8xf32> to vector<1x16x8xf32>
    %290 = vector.shape_cast %286 : vector<16x8xf32> to vector<1x16x8xf32>
    %291 = vector.shape_cast %287 : vector<16x8xf32> to vector<1x16x8xf32>
    %292 = vector.shape_cast %288 : vector<16x8xf32> to vector<1x16x8xf32>
    %293 = tpu.concatenate %289, %290, %291, %292 in 0 : vector<1x16x8xf32>, vector<1x16x8xf32>, vector<1x16x8xf32>, vector<1x16x8xf32> -> vector<4x16x8xf32>
    %294 = arith.truncf %293 : vector<4x16x8xf32> to vector<4x16x8xbf16>
    "tpu.trace_start"() <{level = 10 : i32, message = "hqd,hkd->hqk"}> : () -> ()
    %cst_139 = arith.constant dense<0.000000e+00> : vector<4x16x16xf32>
    %295 = tpu.matmul %274, %284, %cst_139 {dimension_numbers = #tpu.dot_dimension_numbers<[2], [2], [1], [1], [0, 0, 0, 1, 1, 1], [0], [0]>} : vector<4x16x8xbf16>, vector<4x16x8xbf16>, vector<4x16x16xf32> -> vector<4x16x16xf32>
    "tpu.trace_stop"() : () -> ()
    %296 = vector.shape_cast %98 : vector<16x16xf32> to vector<1x16x16xf32>
    %297 = vector.broadcast %296 : vector<1x16x16xf32> to vector<4x16x16xf32>
    %298 = arith.addf %295, %297 : vector<4x16x16xf32>
    %cst_140 = arith.constant dense<0xFF800000> : vector<4x16xf32>
    %299 = vector.multi_reduction <maximumf>, %298, %cst_140 [2] : vector<4x16x16xf32> to vector<4x16xf32>
    %300 = vector.shape_cast %299 : vector<4x16xf32> to vector<4x16x1xf32>
    %301 = vector.broadcast %300 : vector<4x16x1xf32> to vector<4x16x16xf32>
    %302 = arith.subf %298, %301 : vector<4x16x16xf32>
    %303 = math.exp %302 : vector<4x16x16xf32>
    %cst_141 = arith.constant dense<0.000000e+00> : vector<4x16xf32>
    %304 = vector.multi_reduction <add>, %303, %cst_141 [2] : vector<4x16x16xf32> to vector<4x16xf32>
    %305 = vector.shape_cast %304 : vector<4x16xf32> to vector<4x16x1xf32>
    %306 = vector.broadcast %305 : vector<4x16x1xf32> to vector<4x16x16xf32>
    %307 = arith.divf %303, %306 : vector<4x16x16xf32>
    %308 = arith.truncf %307 : vector<4x16x16xf32> to vector<4x16x16xbf16>
    "tpu.trace_start"() <{level = 10 : i32, message = "hqk,hkd->hqd"}> : () -> ()
    %cst_142 = arith.constant dense<0.000000e+00> : vector<4x16x8xf32>
    %309 = tpu.matmul %308, %294, %cst_142 {dimension_numbers = #tpu.dot_dimension_numbers<[2], [1], [1], [2], [0, 0, 0, 1, 1, 2], [0], [0]>} : vector<4x16x16xbf16>, vector<4x16x8xbf16>, vector<4x16x8xf32> -> vector<4x16x8xf32>
    "tpu.trace_stop"() : () -> ()
    %310 = vector.extract_strided_slice %309 {offsets = [0, 0, 0], sizes = [1, 16, 8], strides = [1, 1, 1]} : vector<4x16x8xf32> to vector<1x16x8xf32>
    %311 = vector.shape_cast %310 : vector<1x16x8xf32> to vector<16x8xf32>
    %312 = vector.extract_strided_slice %309 {offsets = [1, 0, 0], sizes = [1, 16, 8], strides = [1, 1, 1]} : vector<4x16x8xf32> to vector<1x16x8xf32>
    %313 = vector.shape_cast %312 : vector<1x16x8xf32> to vector<16x8xf32>
    %314 = vector.extract_strided_slice %309 {offsets = [2, 0, 0], sizes = [1, 16, 8], strides = [1, 1, 1]} : vector<4x16x8xf32> to vector<1x16x8xf32>
    %315 = vector.shape_cast %314 : vector<1x16x8xf32> to vector<16x8xf32>
    %316 = vector.extract_strided_slice %309 {offsets = [3, 0, 0], sizes = [1, 16, 8], strides = [1, 1, 1]} : vector<4x16x8xf32> to vector<1x16x8xf32>
    %317 = vector.shape_cast %316 : vector<1x16x8xf32> to vector<16x8xf32>
    %318 = tpu.concatenate %311, %313, %315, %317 in 1 : vector<16x8xf32>, vector<16x8xf32>, vector<16x8xf32>, vector<16x8xf32> -> vector<16x32xf32>
    %319 = arith.truncf %318 : vector<16x32xf32> to vector<16x32xbf16>
    %c1_143 = arith.constant 1 : index
    %c0_144 = arith.constant 0 : index
    %c0_145 = arith.constant 0 : index
    %320 = vector.load %arg5[%c1_143, %c0_144, %c0_145] : memref<2x32x32xbf16, #tpu.memory_space<vmem>>, vector<1x32x32xbf16>
    %321 = vector.shape_cast %320 : vector<1x32x32xbf16> to vector<32x32xbf16>
    %cst_146 = arith.constant dense<0.000000e+00> : vector<16x32xf32>
    %322 = tpu.matmul %319, %321, %cst_146 {dimension_numbers = #tpu.dot_dimension_numbers<[1], [0], [0], [1], [0, 0, 1, 1], [], []>} : vector<16x32xbf16>, vector<32x32xbf16>, vector<16x32xf32> -> vector<16x32xf32>
    %c1_147 = arith.constant 1 : index
    %c0_148 = arith.constant 0 : index
    %c0_149 = arith.constant 0 : index
    %323 = vector.load %arg6[%c1_147, %c0_148, %c0_149] : memref<2x1x32xf32, #tpu.memory_space<vmem>>, vector<1x1x32xf32>
    %324 = vector.shape_cast %323 : vector<1x1x32xf32> to vector<1x32xf32>
    %325 = vector.broadcast %324 : vector<1x32xf32> to vector<16x32xf32>
    %326 = arith.addf %322, %325 : vector<16x32xf32>
    %327 = arith.addf %251, %326 : vector<16x32xf32>
    %c1_150 = arith.constant 1 : index
    %c0_151 = arith.constant 0 : index
    %c0_152 = arith.constant 0 : index
    %328 = vector.load %arg7[%c1_150, %c0_151, %c0_152] : memref<2x1x32xf32, #tpu.memory_space<vmem>>, vector<1x1x32xf32>
    %329 = vector.shape_cast %328 : vector<1x1x32xf32> to vector<1x32xf32>
    %c1_153 = arith.constant 1 : index
    %c0_154 = arith.constant 0 : index
    %c0_155 = arith.constant 0 : index
    %330 = vector.load %arg8[%c1_153, %c0_154, %c0_155] : memref<2x1x32xf32, #tpu.memory_space<vmem>>, vector<1x1x32xf32>
    %331 = vector.shape_cast %330 : vector<1x1x32xf32> to vector<1x32xf32>
    %cst_156 = arith.constant dense<0.000000e+00> : vector<16xf32>
    %332 = vector.multi_reduction <add>, %327, %cst_156 [1] : vector<16x32xf32> to vector<16xf32>
    %333 = vector.shape_cast %332 : vector<16xf32> to vector<16x1xf32>
    %cst_157 = arith.constant 3.200000e+01 : f32
    %334 = vector.broadcast %cst_157 : f32 to vector<16x1xf32>
    %335 = arith.divf %333, %334 : vector<16x1xf32>
    %336 = vector.broadcast %335 : vector<16x1xf32> to vector<16x32xf32>
    %337 = arith.subf %327, %336 : vector<16x32xf32>
    %338 = arith.mulf %337, %337 : vector<16x32xf32>
    %cst_158 = arith.constant dense<0.000000e+00> : vector<16xf32>
    %339 = vector.multi_reduction <add>, %338, %cst_158 [1] : vector<16x32xf32> to vector<16xf32>
    %340 = vector.shape_cast %339 : vector<16xf32> to vector<16x1xf32>
    %cst_159 = arith.constant 3.200000e+01 : f32
    %341 = vector.broadcast %cst_159 : f32 to vector<16x1xf32>
    %342 = arith.divf %340, %341 : vector<16x1xf32>
    %343 = vector.broadcast %335 : vector<16x1xf32> to vector<16x32xf32>
    %344 = arith.subf %327, %343 : vector<16x32xf32>
    %cst_160 = arith.constant 9.99999974E-6 : f32
    %345 = vector.broadcast %cst_160 : f32 to vector<16x1xf32>
    %346 = arith.addf %342, %345 : vector<16x1xf32>
    %347 = math.rsqrt %346 : vector<16x1xf32>
    %348 = vector.broadcast %347 : vector<16x1xf32> to vector<16x32xf32>
    %349 = arith.mulf %344, %348 : vector<16x32xf32>
    %350 = vector.broadcast %329 : vector<1x32xf32> to vector<16x32xf32>
    %351 = arith.mulf %349, %350 : vector<16x32xf32>
    %352 = vector.broadcast %331 : vector<1x32xf32> to vector<16x32xf32>
    %353 = arith.addf %351, %352 : vector<16x32xf32>
    %354 = arith.truncf %353 : vector<16x32xf32> to vector<16x32xbf16>
    %c1_161 = arith.constant 1 : index
    %c0_162 = arith.constant 0 : index
    %c0_163 = arith.constant 0 : index
    %355 = vector.load %arg9[%c1_161, %c0_162, %c0_163] : memref<2x32x128xbf16, #tpu.memory_space<vmem>>, vector<1x32x128xbf16>
    %356 = vector.shape_cast %355 : vector<1x32x128xbf16> to vector<32x128xbf16>
    %cst_164 = arith.constant dense<0.000000e+00> : vector<16x128xf32>
    %357 = tpu.matmul %354, %356, %cst_164 {dimension_numbers = #tpu.dot_dimension_numbers<[1], [0], [0], [1], [0, 0, 1, 1], [], []>} : vector<16x32xbf16>, vector<32x128xbf16>, vector<16x128xf32> -> vector<16x128xf32>
    %c1_165 = arith.constant 1 : index
    %c0_166 = arith.constant 0 : index
    %c0_167 = arith.constant 0 : index
    %358 = vector.load %arg10[%c1_165, %c0_166, %c0_167] : memref<2x1x128xf32, #tpu.memory_space<vmem>>, vector<1x1x128xf32>
    %359 = vector.shape_cast %358 : vector<1x1x128xf32> to vector<1x128xf32>
    %360 = vector.broadcast %359 : vector<1x128xf32> to vector<16x128xf32>
    %361 = arith.addf %357, %360 : vector<16x128xf32>
    %cst_168 = arith.constant 5.000000e-01 : f32
    %362 = vector.broadcast %cst_168 : f32 to vector<16x128xf32>
    %363 = arith.mulf %362, %361 : vector<16x128xf32>
    %cst_169 = arith.constant 0.707106769 : f32
    %364 = vector.broadcast %cst_169 : f32 to vector<16x128xf32>
    %365 = arith.mulf %361, %364 : vector<16x128xf32>
    %366 = math.erf %365 : vector<16x128xf32>
    %cst_170 = arith.constant 1.000000e+00 : f32
    %367 = vector.broadcast %cst_170 : f32 to vector<16x128xf32>
    %368 = arith.addf %367, %366 : vector<16x128xf32>
    %369 = arith.mulf %363, %368 : vector<16x128xf32>
    %370 = arith.truncf %369 : vector<16x128xf32> to vector<16x128xbf16>
    %c1_171 = arith.constant 1 : index
    %c0_172 = arith.constant 0 : index
    %c0_173 = arith.constant 0 : index
    %371 = vector.load %arg11[%c1_171, %c0_172, %c0_173] : memref<2x128x32xbf16, #tpu.memory_space<vmem>>, vector<1x128x32xbf16>
    %372 = vector.shape_cast %371 : vector<1x128x32xbf16> to vector<128x32xbf16>
    %cst_174 = arith.constant dense<0.000000e+00> : vector<16x32xf32>
    %373 = tpu.matmul %370, %372, %cst_174 {dimension_numbers = #tpu.dot_dimension_numbers<[1], [0], [0], [1], [0, 0, 1, 1], [], []>} : vector<16x128xbf16>, vector<128x32xbf16>, vector<16x32xf32> -> vector<16x32xf32>
    %c1_175 = arith.constant 1 : index
    %c0_176 = arith.constant 0 : index
    %c0_177 = arith.constant 0 : index
    %374 = vector.load %arg12[%c1_175, %c0_176, %c0_177] : memref<2x1x32xf32, #tpu.memory_space<vmem>>, vector<1x1x32xf32>
    %375 = vector.shape_cast %374 : vector<1x1x32xf32> to vector<1x32xf32>
    %376 = vector.broadcast %375 : vector<1x32xf32> to vector<16x32xf32>
    %377 = arith.addf %373, %376 : vector<16x32xf32>
    %378 = arith.addf %353, %377 : vector<16x32xf32>
    %c1_178 = arith.constant 1 : index
    %c0_179 = arith.constant 0 : index
    %c0_180 = arith.constant 0 : index
    %379 = vector.load %arg13[%c1_178, %c0_179, %c0_180] : memref<2x1x32xf32, #tpu.memory_space<vmem>>, vector<1x1x32xf32>
    %380 = vector.shape_cast %379 : vector<1x1x32xf32> to vector<1x32xf32>
    %c1_181 = arith.constant 1 : index
    %c0_182 = arith.constant 0 : index
    %c0_183 = arith.constant 0 : index
    %381 = vector.load %arg14[%c1_181, %c0_182, %c0_183] : memref<2x1x32xf32, #tpu.memory_space<vmem>>, vector<1x1x32xf32>
    %382 = vector.shape_cast %381 : vector<1x1x32xf32> to vector<1x32xf32>
    %cst_184 = arith.constant dense<0.000000e+00> : vector<16xf32>
    %383 = vector.multi_reduction <add>, %378, %cst_184 [1] : vector<16x32xf32> to vector<16xf32>
    %384 = vector.shape_cast %383 : vector<16xf32> to vector<16x1xf32>
    %cst_185 = arith.constant 3.200000e+01 : f32
    %385 = vector.broadcast %cst_185 : f32 to vector<16x1xf32>
    %386 = arith.divf %384, %385 : vector<16x1xf32>
    %387 = vector.broadcast %386 : vector<16x1xf32> to vector<16x32xf32>
    %388 = arith.subf %378, %387 : vector<16x32xf32>
    %389 = arith.mulf %388, %388 : vector<16x32xf32>
    %cst_186 = arith.constant dense<0.000000e+00> : vector<16xf32>
    %390 = vector.multi_reduction <add>, %389, %cst_186 [1] : vector<16x32xf32> to vector<16xf32>
    %391 = vector.shape_cast %390 : vector<16xf32> to vector<16x1xf32>
    %cst_187 = arith.constant 3.200000e+01 : f32
    %392 = vector.broadcast %cst_187 : f32 to vector<16x1xf32>
    %393 = arith.divf %391, %392 : vector<16x1xf32>
    %394 = vector.broadcast %386 : vector<16x1xf32> to vector<16x32xf32>
    %395 = arith.subf %378, %394 : vector<16x32xf32>
    %cst_188 = arith.constant 9.99999974E-6 : f32
    %396 = vector.broadcast %cst_188 : f32 to vector<16x1xf32>
    %397 = arith.addf %393, %396 : vector<16x1xf32>
    %398 = math.rsqrt %397 : vector<16x1xf32>
    %399 = vector.broadcast %398 : vector<16x1xf32> to vector<16x32xf32>
    %400 = arith.mulf %395, %399 : vector<16x32xf32>
    %401 = vector.broadcast %380 : vector<1x32xf32> to vector<16x32xf32>
    %402 = arith.mulf %400, %401 : vector<16x32xf32>
    %403 = vector.broadcast %382 : vector<1x32xf32> to vector<16x32xf32>
    %404 = arith.addf %402, %403 : vector<16x32xf32>
    %405 = vector.shape_cast %404 : vector<16x32xf32> to vector<2x8x32xf32>
    %406 = vector.extract_strided_slice %405 {offsets = [0, 0, 0], sizes = [2, 1, 32], strides = [1, 1, 1]} : vector<2x8x32xf32> to vector<2x1x32xf32>
    %407 = vector.shape_cast %406 : vector<2x1x32xf32> to vector<2x32xf32>
    %c0_189 = arith.constant 0 : index
    %c0_190 = arith.constant 0 : index
    %408 = vector.load %arg15[%c0_189, %c0_190] : memref<1x32xf32, #tpu.memory_space<vmem>>, vector<1x32xf32>
    %c0_191 = arith.constant 0 : index
    %c0_192 = arith.constant 0 : index
    %409 = vector.load %arg16[%c0_191, %c0_192] : memref<1x32xf32, #tpu.memory_space<vmem>>, vector<1x32xf32>
    %cst_193 = arith.constant dense<0.000000e+00> : vector<2xf32>
    %410 = vector.multi_reduction <add>, %407, %cst_193 [1] : vector<2x32xf32> to vector<2xf32>
    %411 = vector.shape_cast %410 : vector<2xf32> to vector<2x1xf32>
    %cst_194 = arith.constant 3.200000e+01 : f32
    %412 = vector.broadcast %cst_194 : f32 to vector<2x1xf32>
    %413 = arith.divf %411, %412 : vector<2x1xf32>
    %414 = vector.broadcast %413 : vector<2x1xf32> to vector<2x32xf32>
    %415 = arith.subf %407, %414 : vector<2x32xf32>
    %416 = arith.mulf %415, %415 : vector<2x32xf32>
    %cst_195 = arith.constant dense<0.000000e+00> : vector<2xf32>
    %417 = vector.multi_reduction <add>, %416, %cst_195 [1] : vector<2x32xf32> to vector<2xf32>
    %418 = vector.shape_cast %417 : vector<2xf32> to vector<2x1xf32>
    %cst_196 = arith.constant 3.200000e+01 : f32
    %419 = vector.broadcast %cst_196 : f32 to vector<2x1xf32>
    %420 = arith.divf %418, %419 : vector<2x1xf32>
    %421 = vector.broadcast %413 : vector<2x1xf32> to vector<2x32xf32>
    %422 = arith.subf %407, %421 : vector<2x32xf32>
    %cst_197 = arith.constant 9.99999974E-6 : f32
    %423 = vector.broadcast %cst_197 : f32 to vector<2x1xf32>
    %424 = arith.addf %420, %423 : vector<2x1xf32>
    %425 = math.rsqrt %424 : vector<2x1xf32>
    %426 = vector.broadcast %425 : vector<2x1xf32> to vector<2x32xf32>
    %427 = arith.mulf %422, %426 : vector<2x32xf32>
    %428 = vector.broadcast %408 : vector<1x32xf32> to vector<2x32xf32>
    %429 = arith.mulf %427, %428 : vector<2x32xf32>
    %430 = vector.broadcast %409 : vector<1x32xf32> to vector<2x32xf32>
    %431 = arith.addf %429, %430 : vector<2x32xf32>
    %432 = arith.truncf %431 : vector<2x32xf32> to vector<2x32xbf16>
    %c0_198 = arith.constant 0 : index
    %c0_199 = arith.constant 0 : index
    %433 = vector.load %arg17[%c0_198, %c0_199] : memref<32x128xbf16, #tpu.memory_space<vmem>>, vector<32x128xbf16>
    %cst_200 = arith.constant dense<0.000000e+00> : vector<2x128xf32>
    %434 = tpu.matmul %432, %433, %cst_200 {dimension_numbers = #tpu.dot_dimension_numbers<[1], [0], [0], [1], [0, 0, 1, 1], [], []>} : vector<2x32xbf16>, vector<32x128xbf16>, vector<2x128xf32> -> vector<2x128xf32>
    %c0_201 = arith.constant 0 : index
    %c0_202 = arith.constant 0 : index
    %435 = vector.load %arg18[%c0_201, %c0_202] : memref<1x128xf32, #tpu.memory_space<vmem>>, vector<1x128xf32>
    %436 = vector.broadcast %435 : vector<1x128xf32> to vector<2x128xf32>
    %437 = arith.addf %434, %436 : vector<2x128xf32>
    %c0_203 = arith.constant 0 : index
    %c0_204 = arith.constant 0 : index
    %438 = vector.load %arg19[%c0_203, %c0_204] : memref<2x128xf32, #tpu.memory_space<vmem>>, vector<2x128xf32>
    tpu.vector_store %arg19[%c0_203, %c0_204], %437 {strides = array<i32>} : memref<2x128xf32, #tpu.memory_space<vmem>>, vector<2x128xf32>,
    return
  }
}

</mosaic_0001>

<llo_original>
// kernel: tpu_custom_call.1
$region0: #{tpu_custom_call.1}
  #allocation0 [shape = 'u32[]', space=smem, size = 0x4, offset = 0x4, fixed_abs, tag = 'smem constant byte address 0x4 - core index']
  #allocation1 [shape = 'u32[144,128]{1,0:T(1,128)}', space=vmem, size = 0x12000, scoped, tag = 'internal scratch']
  #allocation2 [shape = 'f32[16,32]{1,0:T(8,128)}', space=vmem, size = 0x2000, scoped, tag = 'scratch operand']
  %s0 = inlined_call_operand.vmem [shape: s32[16], index: 0, kind: input, shape index: {}]
  %s1 = inlined_call_operand.vmem [shape: f32[100,1,32], index: 1, kind: input, shape index: {}]
  %s2 = inlined_call_operand.vmem [shape: f32[8,32], index: 2, kind: input, shape index: {}]
  %s3 = inlined_call_operand.vmem [shape: bf16[2,32,96], index: 3, kind: input, shape index: {}]
  %s4 = inlined_call_operand.vmem [shape: f32[2,1,96], index: 4, kind: input, shape index: {}]
  %s5 = inlined_call_operand.vmem [shape: bf16[2,32,32], index: 5, kind: input, shape index: {}]
  %s6 = inlined_call_operand.vmem [shape: f32[2,1,32], index: 6, kind: input, shape index: {}]
  %s7 = inlined_call_operand.vmem [shape: f32[2,1,32], index: 7, kind: input, shape index: {}]
  %s8 = inlined_call_operand.vmem [shape: f32[2,1,32], index: 8, kind: input, shape index: {}]
  %s9 = inlined_call_operand.vmem [shape: bf16[2,32,128], index: 9, kind: input, shape index: {}]
  %s10 = inlined_call_operand.vmem [shape: f32[2,1,128], index: 10, kind: input, shape index: {}]
  %s11 = inlined_call_operand.vmem [shape: bf16[2,128,32], index: 11, kind: input, shape index: {}]
  %s12 = inlined_call_operand.vmem [shape: f32[2,1,32], index: 12, kind: input, shape index: {}]
  %s13 = inlined_call_operand.vmem [shape: f32[2,1,32], index: 13, kind: input, shape index: {}]
  %s14 = inlined_call_operand.vmem [shape: f32[2,1,32], index: 14, kind: input, shape index: {}]
  %s15 = inlined_call_operand.vmem [shape: f32[1,32], index: 15, kind: input, shape index: {}]
  %s16 = inlined_call_operand.vmem [shape: f32[1,32], index: 16, kind: input, shape index: {}]
  %s17 = inlined_call_operand.vmem [shape: bf16[32,128], index: 17, kind: input, shape index: {}]
  %s18 = inlined_call_operand.vmem [shape: f32[1,128], index: 18, kind: input, shape index: {}]
  %s19 = inlined_call_operand.hbm [shape: f32[2,128], index: 19, kind: output, shape index: {}]
  %s20 = sld [smem:[#allocation0]]
  $region90: #{tpu_custom_call.1} parent=0
    _
  %s22 = ssub.s32 1, %s20
  %s23 = scalar_select 0, %s22, %s20
  $region1: #{tpu_custom_call.1} parent=0
    #allocation3 [shape = 'u8[512]{0}', space=smem, size = 0x200, scoped, tag = 'input window, operand 0, single buffered']
    #allocation4 [shape = 's32[1]{0}', space=sflag, size = 0x4, scoped, tag = 'scoped memory for tpu_custom_call.1']
    #allocation5 [shape = 's32[1]{0}', space=sflag, size = 0x4, scoped, tag = 'scoped memory for tpu_custom_call.1']
    #allocation6 [shape = 'u8[1024]{0}', space=vmem, size = 0x400, scoped, tag = 'output window, operand 0, single buffered']
    %24 = vsyncpa [#allocation5], 0
    %25 = vsyncpa [#allocation4], 0
    // Predicated region
    $region2: #{tpu_custom_call.1} parent=1 // pred_check
      _
    $region3: #{tpu_custom_call.1} parent=1 // pred_check_branch
      %27 = sbr.rel (0) target = $region5
    $region4: #{tpu_custom_call.1} parent=1 // pred_region
      %s29 = ssub.s32 16, 16
      %30 = vsyncadd [#allocation5], %s29
      %s32 = sshll.u32 %s0, 4
      %s33 = int_to_ptr.vmem [resolvable:$true] %s32
      %35 = dma.vmem_to_smem %s33, 16, [#allocation3], [#allocation5]
    $region5: #{tpu_custom_call.1} parent=1 // pred_fallthru
      _
    // Predicated region
    $region6: #{tpu_custom_call.1} parent=1 // pred_check
      _
    $region7: #{tpu_custom_call.1} parent=1 // pred_check_branch
      %37 = sbr.rel (0) target = $region9
    $region8: #{tpu_custom_call.1} parent=1 // pred_region
      _
    $region9: #{tpu_custom_call.1} parent=1 // pred_fallthru
      _
    // Predicated region
    $region10: #{tpu_custom_call.1} parent=1 // pred_check
      _
    $region11: #{tpu_custom_call.1} parent=1 // pred_check_branch
      %39 = sbr.rel (0) target = $region13
    $region12: #{tpu_custom_call.1} parent=1 // pred_region
      _
    $region13: #{tpu_custom_call.1} parent=1 // pred_fallthru
      _
    // Predicated region
    $region14: #{tpu_custom_call.1} parent=1 // pred_check
      _
    $region15: #{tpu_custom_call.1} parent=1 // pred_check_branch
      %41 = sbr.rel (0) target = $region17
    $region16: #{tpu_custom_call.1} parent=1 // pred_region
      _
    $region17: #{tpu_custom_call.1} parent=1 // pred_fallthru
      _
    // Predicated region
    $region18: #{tpu_custom_call.1} parent=1 // pred_check
      _
    $region19: #{tpu_custom_call.1} parent=1 // pred_check_branch
      %43 = sbr.rel (0) target = $region21
    $region20: #{tpu_custom_call.1} parent=1 // pred_region
      _
    $region21: #{tpu_custom_call.1} parent=1 // pred_fallthru
      _
    // Predicated region
    $region22: #{tpu_custom_call.1} parent=1 // pred_check
      _
    $region23: #{tpu_custom_call.1} parent=1 // pred_check_branch
      %45 = sbr.rel (0) target = $region25
    $region24: #{tpu_custom_call.1} parent=1 // pred_region
      _
    $region25: #{tpu_custom_call.1} parent=1 // pred_fallthru
      _
    // Predicated region
    $region26: #{tpu_custom_call.1} parent=1 // pred_check
      _
    $region27: #{tpu_custom_call.1} parent=1 // pred_check_branch
      %47 = sbr.rel (0) target = $region29
    $region28: #{tpu_custom_call.1} parent=1 // pred_region
      _
    $region29: #{tpu_custom_call.1} parent=1 // pred_fallthru
      _
    // Predicated region
    $region30: #{tpu_custom_call.1} parent=1 // pred_check
      _
    $region31: #{tpu_custom_call.1} parent=1 // pred_check_branch
      %49 = sbr.rel (0) target = $region33
    $region32: #{tpu_custom_call.1} parent=1 // pred_region
      _
    $region33: #{tpu_custom_call.1} parent=1 // pred_fallthru
      _
    // Predicated region
    $region34: #{tpu_custom_call.1} parent=1 // pred_check
      _
    $region35: #{tpu_custom_call.1} parent=1 // pred_check_branch
      %51 = sbr.rel (0) target = $region37
    $region36: #{tpu_custom_call.1} parent=1 // pred_region
      _
    $region37: #{tpu_custom_call.1} parent=1 // pred_fallthru
      _
    // Predicated region
    $region38: #{tpu_custom_call.1} parent=1 // pred_check
      _
    $region39: #{tpu_custom_call.1} parent=1 // pred_check_branch
      %53 = sbr.rel (0) target = $region41
    $region40: #{tpu_custom_call.1} parent=1 // pred_region
      _
    $region41: #{tpu_custom_call.1} parent=1 // pred_fallthru
      _
    // Predicated region
    $region42: #{tpu_custom_call.1} parent=1 // pred_check
      _
    $region43: #{tpu_custom_call.1} parent=1 // pred_check_branch
      %55 = sbr.rel (0) target = $region45
    $region44: #{tpu_custom_call.1} parent=1 // pred_region
      _
    $region45: #{tpu_custom_call.1} parent=1 // pred_fallthru
      _
    // Predicated region
    $region46: #{tpu_custom_call.1} parent=1 // pred_check
      _
    $region47: #{tpu_custom_call.1} parent=1 // pred_check_branch
      %57 = sbr.rel (0) target = $region49
    $region48: #{tpu_custom_call.1} parent=1 // pred_region
      _
    $region49: #{tpu_custom_call.1} parent=1 // pred_fallthru
      _
    // Predicated region
    $region50: #{tpu_custom_call.1} parent=1 // pred_check
      _
    $region51: #{tpu_custom_call.1} parent=1 // pred_check_branch
      %59 = sbr.rel (0) target = $region53
    $region52: #{tpu_custom_call.1} parent=1 // pred_region
      _
    $region53: #{tpu_custom_call.1} parent=1 // pred_fallthru
      _
    // Predicated region
    $region54: #{tpu_custom_call.1} parent=1 // pred_check
      _
    $region55: #{tpu_custom_call.1} parent=1 // pred_check_branch
      %61 = sbr.rel (0) target = $region57
    $region56: #{tpu_custom_call.1} parent=1 // pred_region
      _
    $region57: #{tpu_custom_call.1} parent=1 // pred_fallthru
      _
    // Predicated region
    $region58: #{tpu_custom_call.1} parent=1 // pred_check
      _
    $region59: #{tpu_custom_call.1} parent=1 // pred_check_branch
      %63 = sbr.rel (0) target = $region61
    $region60: #{tpu_custom_call.1} parent=1 // pred_region
      _
    $region61: #{tpu_custom_call.1} parent=1 // pred_fallthru
      _
    // Predicated region
    $region62: #{tpu_custom_call.1} parent=1 // pred_check
      _
    $region63: #{tpu_custom_call.1} parent=1 // pred_check_branch
      %65 = sbr.rel (0) target = $region65
    $region64: #{tpu_custom_call.1} parent=1 // pred_region
      _
    $region65: #{tpu_custom_call.1} parent=1 // pred_fallthru
      _
    // Predicated region
    $region66: #{tpu_custom_call.1} parent=1 // pred_check
      _
    $region67: #{tpu_custom_call.1} parent=1 // pred_check_branch
      %67 = sbr.rel (0) target = $region69
    $region68: #{tpu_custom_call.1} parent=1 // pred_region
      _
    $region69: #{tpu_custom_call.1} parent=1 // pred_fallthru
      _
    // Predicated region
    $region70: #{tpu_custom_call.1} parent=1 // pred_check
      _
    $region71: #{tpu_custom_call.1} parent=1 // pred_check_branch
      %69 = sbr.rel (0) target = $region73
    $region72: #{tpu_custom_call.1} parent=1 // pred_region
      _
    $region73: #{tpu_custom_call.1} parent=1 // pred_fallthru
      _
    // Predicated region
    $region74: #{tpu_custom_call.1} parent=1 // pred_check
      _
    $region75: #{tpu_custom_call.1} parent=1 // pred_check_branch
      %71 = sbr.rel (0) target = $region77
    $region76: #{tpu_custom_call.1} parent=1 // pred_region
      _
    $region77: #{tpu_custom_call.1} parent=1 // pred_fallthru
      _
    // Predicated region
    $region78: #{tpu_custom_call.1} parent=1 // pred_check
      _
    $region79: #{tpu_custom_call.1} parent=1 // pred_check_branch
      %73 = sbr.rel (0) target = $region81
    $region80: #{tpu_custom_call.1} parent=1 // pred_region
      %74 = dma.done [#allocation5], 16
    $region81: #{tpu_custom_call.1} parent=1 // pred_fallthru
      _
    %75 = sfence
    %s77 = sld [smem:[#allocation3]]
    %s78 = scalar_lea.vmem %s1, %s77
    %v79 = vld [vmem:[%s78] sm:$0x1]
    %vm80 = vcmask 253952
    %81 = vst.msk [vmem:[#allocation2] sm:$0x1] %vm80, %v79
    %s82 = sld [smem:[#allocation3 + $0x1]]
    %s83 = scalar_lea.vmem %s1, %s82
    %v84 = vld [vmem:[%s83] sm:$0x1]
    %85 = vst.msk [vmem:[#allocation2 + $0x1] sm:$0x1] %vm80, %v84
    %s86 = sld [smem:[#allocation3 + $0x2]]
    %s87 = scalar_lea.vmem %s1, %s86
    %v88 = vld [vmem:[%s87] sm:$0x1]
    %89 = vst.msk [vmem:[#allocation2 + $0x2] sm:$0x1] %vm80, %v88
    %s90 = sld [smem:[#allocation3 + $0x3]]
    %s91 = scalar_lea.vmem %s1, %s90
    %v92 = vld [vmem:[%s91] sm:$0x1]
    %93 = vst.msk [vmem:[#allocation2 + $0x3] sm:$0x1] %vm80, %v92
    %s94 = sld [smem:[#allocation3 + $0x4]]
    %s95 = scalar_lea.vmem %s1, %s94
    %v96 = vld [vmem:[%s95] sm:$0x1]
    %97 = vst.msk [vmem:[#allocation2 + $0x4] sm:$0x1] %vm80, %v96
    %s98 = sld [smem:[#allocation3 + $0x5]]
    %s99 = scalar_lea.vmem %s1, %s98
    %v100 = vld [vmem:[%s99] sm:$0x1]
    %101 = vst.msk [vmem:[#allocation2 + $0x5] sm:$0x1] %vm80, %v100
    %s102 = sld [smem:[#allocation3 + $0x6]]
    %s103 = scalar_lea.vmem %s1, %s102
    %v104 = vld [vmem:[%s103] sm:$0x1]
    %105 = vst.msk [vmem:[#allocation2 + $0x6] sm:$0x1] %vm80, %v104
    %s106 = sld [smem:[#allocation3 + $0x7]]
    %s107 = scalar_lea.vmem %s1, %s106
    %v108 = vld [vmem:[%s107] sm:$0x1]
    %109 = vst.msk [vmem:[#allocation2 + $0x7] sm:$0x1] %vm80, %v108
    %s110 = sld [smem:[#allocation3 + $0x8]]
    %s111 = scalar_lea.vmem %s1, %s110
    %v112 = vld [vmem:[%s111] sm:$0x1]
    %113 = vst.msk [vmem:[#allocation2 + $0x8] sm:$0x1] %vm80, %v112
    %s114 = sld [smem:[#allocation3 + $0x9]]
    %s115 = scalar_lea.vmem %s1, %s114
    %v116 = vld [vmem:[%s115] sm:$0x1]
    %117 = vst.msk [vmem:[#allocation2 + $0x9] sm:$0x1] %vm80, %v116
    %s118 = sld [smem:[#allocation3 + $0xa]]
    %s119 = scalar_lea.vmem %s1, %s118
    %v120 = vld [vmem:[%s119] sm:$0x1]
    %121 = vst.msk [vmem:[#allocation2 + $0xa] sm:$0x1] %vm80, %v120
    %s122 = sld [smem:[#allocation3 + $0xb]]
    %s123 = scalar_lea.vmem %s1, %s122
    %v124 = vld [vmem:[%s123] sm:$0x1]
    %125 = vst.msk [vmem:[#allocation2 + $0xb] sm:$0x1] %vm80, %v124
    %s126 = sld [smem:[#allocation3 + $0xc]]
    %s127 = scalar_lea.vmem %s1, %s126
    %v128 = vld [vmem:[%s127] sm:$0x1]
    %129 = vst.msk [vmem:[#allocation2 + $0xc] sm:$0x1] %vm80, %v128
    %s130 = sld [smem:[#allocation3 + $0xd]]
    %s131 = scalar_lea.vmem %s1, %s130
    %v132 = vld [vmem:[%s131] sm:$0x1]
    %133 = vst.msk [vmem:[#allocation2 + $0xd] sm:$0x1] %vm80, %v132
    %s134 = sld [smem:[#allocation3 + $0xe]]
    %s135 = scalar_lea.vmem %s1, %s134
    %v136 = vld [vmem:[%s135] sm:$0x1]
    %137 = vst.msk [vmem:[#allocation2 + $0xe] sm:$0x1] %vm80, %v136
    %s138 = sld [smem:[#allocation3 + $0xf]]
    %s139 = scalar_lea.vmem %s1, %s138
    %v140 = vld [vmem:[%s139] sm:$0x1]
    %141 = vst.msk [vmem:[#allocation2 + $0xf] sm:$0x1] %vm80, %v140
    %v142 = vld [vmem:[#allocation2] sm:$0xff]
    %v143 = vld [vmem:[#allocation2 + $0x8] sm:$0xff]
    %v144 = vld [vmem:[%s2] sm:$0xff]
    %v145 = vadd.f32 %v142, %v144
    %v146 = vadd.f32 %v143, %v144
    %vm147 = vcmask 64512
    %v148 = vsel %vm147, 0.0, 1.0
    %150 = vset.pattern.permute.xlu0 0
    %151 = vperm.xlu0 %150, 0.0
    %v152 = vpop.permute.xlu0 %151
    %155 = vset.pattern.permute.xlu0 0
    %156 = vperm.xlu0 %155, 1.0
    %v157 = vpop.permute.xlu0 %156
    %v159 = vlaneseq
    %v160 = vshrl.u32 %v159, 7
    %v161 = vsub.s32 0, %v160
    %v162 = vrot.slane %v148, %v161
    %vm163 = vcmp.eq.f32.partialorder %v152, %v162
    %vm164 = vcmp.eq.f32.partialorder %v157, %v162
    %v165 = vsel %vm163, 0.0, -1e+30
    %v166 = vsel %vm164, 0.0, -1e+30
    %v167 = vpack.c.bf16 %v146, %v145
    %v168 = vld [vmem:[%s3] sm:$0xf]
    %v169 = vld [vmem:[%s3 + $0x4] sm:$0xf]
    %v170 = vld [vmem:[%s3 + $0x8] sm:$0xf]
    %v171 = vld [vmem:[%s3 + $0xc] sm:$0xf]
    %v172 = vld [vmem:[%s4] sm:$0x1]
    %v174 = vlaneseq
    %v175 = vshrl.u32 %v174, 7
    %v176 = vsub.s32 0, %v175
    %v177 = vrot.slane %v172, %v176
    %v183 = vunpack.c.l.b16 %v168
    %v184 = vunpack.c.l.b16 %v169
    %v185 = vunpack.c.l.b16 %v170
    %v186 = vunpack.c.l.b16 %v171
    %v187 = vpack.c.b16 %v184, %v183
    %v188 = vpack.c.b16 %v186, %v185
    %vm191 = vcmask 261120
    %v193 = vsel %vm191, %v167, 0
    %195 = vmatprep.subr.bf16.mxu0 0
    %196 = vmatpush1.bf16.msra.mxu0 0
    %197 = vmatprep.subr.bf16.mxu0 0
    %198 = vmatpush1.bf16.msra.mxu0 0
    %199 = vmatprep.subr.bf16.mxu0 0
    %200 = vmatpush1.bf16.msra.mxu0 0
    %201 = vmatprep.subr.bf16.mxu0 0
    %202 = vmatpush1.bf16.msra.mxu0 0
    %203 = vmatprep.subr.bf16.mxu0 0
    %204 = vmatpush1.bf16.msra.mxu0 0
    %205 = vmatprep.subr.bf16.mxu0 0
    %206 = vmatpush1.bf16.msra.mxu0 0
    %207 = vmatprep.subr.bf16.mxu0 0
    %208 = vmatpush1.bf16.msra.mxu0 %v188
    %209 = vmatprep.subr.bf16.mxu0 0
    %210 = vmatpush1.bf16.msra.mxu0 %v187
    %211 = vmatprep.subr.bf16.mxu0 0
    %212 = vmatpush2.bf16.msra.mxu0 0
    %213 = vmatprep.subr.bf16.mxu0 0
    %214 = vmatpush2.bf16.msra.mxu0 0
    %215 = vmatprep.subr.bf16.mxu0 0
    %216 = vmatpush2.bf16.msra.mxu0 0
    %217 = vmatprep.subr.bf16.mxu0 0
    %218 = vmatpush2.bf16.msra.mxu0 0
    %219 = vmatprep.subr.bf16.mxu0 0
    %220 = vmatpush2.bf16.msra.mxu0 0
    %221 = vmatprep.subr.bf16.mxu0 0
    %222 = vmatpush2.bf16.msra.mxu0 0
    %223 = vmatprep.subr.bf16.mxu0 0
    %224 = vmatpush2.bf16.msra.mxu0 0
    %225 = vmatprep.subr.bf16.mxu0 0
    %226 = vmatpush2.bf16.msra.mxu0 0
    %227 = vmatprep.mubr.bf16.mxu0 0
    %228 = vmatmul.mubr.bf16.gmra.mxu0 %v193
    %v229 = vpop.f32.mrf.mxu0
    %v230 = vadd.f32 %v177, %v229
    %v231 = vpop.f32.mrf.mxu0
    %v232 = vpop.f32.mrf.mxu0
    %v233 = vadd.f32 %v177, %v232
    %v234 = vpop.f32.mrf.mxu0
    %235 = vdwg.mxu0
    %v236 = vmul.f32 %v230, 0.35355338
    %v237 = vmul.f32 %v233, 0.35355338
    %240 = vrot.lane.b32.xlu0 %v236, 120
    %v241 = vpop.permute.xlu0 %240
    %242 = vrot.lane.b32.xlu0 %v237, 120
    %v243 = vpop.permute.xlu0 %242
    %246 = vrot.lane.b32.xlu0 %v236, 112
    %v247 = vpop.permute.xlu0 %246
    %248 = vrot.lane.b32.xlu0 %v237, 112
    %v249 = vpop.permute.xlu0 %248
    %252 = vrot.lane.b32.xlu0 %v236, 104
    %v253 = vpop.permute.xlu0 %252
    %254 = vrot.lane.b32.xlu0 %v237, 104
    %v255 = vpop.permute.xlu0 %254
    %v258 = vpack.c.bf16 %v237, %v236
    %v259 = vpack.c.bf16 %v243, %v241
    %v260 = vpack.c.bf16 %v249, %v247
    %v261 = vpack.c.bf16 %v255, %v253
    %264 = vrot.lane.b32.xlu0 %v230, 120
    %v265 = vpop.permute.xlu0 %264
    %266 = vrot.lane.b32.xlu0 %v233, 120
    %v267 = vpop.permute.xlu0 %266
    %270 = vrot.lane.b32.xlu0 %v230, 112
    %v271 = vpop.permute.xlu0 %270
    %272 = vrot.lane.b32.xlu0 %v233, 112
    %v273 = vpop.permute.xlu0 %272
    %276 = vrot.lane.b32.xlu0 %v230, 104
    %v277 = vpop.permute.xlu0 %276
    %278 = vrot.lane.b32.xlu0 %v233, 104
    %v279 = vpop.permute.xlu0 %278
    %v282 = vpack.c.bf16 %v233, %v230
    %v283 = vpack.c.bf16 %v267, %v265
    %v284 = vpack.c.bf16 %v273, %v271
    %v285 = vpack.c.bf16 %v279, %v277
    %287 = vrot.lane.b32.xlu0 %v282, 96
    %v288 = vpop.permute.xlu0 %287
    %v290 = vsel %vm147, %v258, 0
    %v293 = vsel %vm147, %v288, 0
    %295 = vmatprep.subr.bf16.mxu0 0
    %296 = vmatpush1.bf16.xpose.msra.mxu0 0
    %297 = vmatprep.subr.bf16.mxu0 0
    %298 = vmatpush1.bf16.xpose.msra.mxu0 0
    %299 = vmatprep.subr.bf16.mxu0 0
    %300 = vmatpush1.bf16.xpose.msra.mxu0 0
    %301 = vmatprep.subr.bf16.mxu0 0
    %302 = vmatpush1.bf16.xpose.msra.mxu0 0
    %303 = vmatprep.subr.bf16.mxu0 0
    %304 = vmatpush1.bf16.xpose.msra.mxu0 0
    %305 = vmatprep.subr.bf16.mxu0 0
    %306 = vmatpush1.bf16.xpose.msra.mxu0 0
    %307 = vmatprep.subr.bf16.mxu0 0
    %308 = vmatpush1.bf16.xpose.msra.mxu0 0
    %309 = vmatprep.subr.bf16.mxu0 0
    %310 = vmatpush1.bf16.xpose.msra.mxu0 %v293
    %311 = vmatprep.subr.bf16.mxu0 0
    %312 = vmatpush2.bf16.xpose.msra.mxu0 0
    %313 = vmatprep.subr.bf16.mxu0 0
    %314 = vmatpush2.bf16.xpose.msra.mxu0 0
    %315 = vmatprep.subr.bf16.mxu0 0
    %316 = vmatpush2.bf16.xpose.msra.mxu0 0
    %317 = vmatprep.subr.bf16.mxu0 0
    %318 = vmatpush2.bf16.xpose.msra.mxu0 0
    %319 = vmatprep.subr.bf16.mxu0 0
    %320 = vmatpush2.bf16.xpose.msra.mxu0 0
    %321 = vmatprep.subr.bf16.mxu0 0
    %322 = vmatpush2.bf16.xpose.msra.mxu0 0
    %323 = vmatprep.subr.bf16.mxu0 0
    %324 = vmatpush2.bf16.xpose.msra.mxu0 0
    %325 = vmatprep.subr.bf16.mxu0 0
    %326 = vmatpush2.bf16.xpose.msra.mxu0 0
    %327 = vmatprep.mubr.bf16.mxu0 0
    %328 = vmatmul.mubr.bf16.gmra.mxu0 %v290
    %v329 = vpop.f32.mrf.mxu0
    %v330 = vadd.f32 %v165, %v329
    %v331 = vpop.f32.mrf.mxu0
    %v332 = vpop.f32.mrf.mxu0
    %v333 = vadd.f32 %v166, %v332
    %v334 = vpop.f32.mrf.mxu0
    %335 = vdwg.mxu0
    %337 = vrot.lane.b32.xlu0 %v283, 96
    %v338 = vpop.permute.xlu0 %337
    %v340 = vsel %vm147, %v259, 0
    %v343 = vsel %vm147, %v338, 0
    %345 = vmatprep.subr.bf16.mxu0 0
    %346 = vmatpush1.bf16.xpose.msra.mxu0 0
    %347 = vmatprep.subr.bf16.mxu0 0
    %348 = vmatpush1.bf16.xpose.msra.mxu0 0
    %349 = vmatprep.subr.bf16.mxu0 0
    %350 = vmatpush1.bf16.xpose.msra.mxu0 0
    %351 = vmatprep.subr.bf16.mxu0 0
    %352 = vmatpush1.bf16.xpose.msra.mxu0 0
    %353 = vmatprep.subr.bf16.mxu0 0
    %354 = vmatpush1.bf16.xpose.msra.mxu0 0
    %355 = vmatprep.subr.bf16.mxu0 0
    %356 = vmatpush1.bf16.xpose.msra.mxu0 0
    %357 = vmatprep.subr.bf16.mxu0 0
    %358 = vmatpush1.bf16.xpose.msra.mxu0 0
    %359 = vmatprep.subr.bf16.mxu0 0
    %360 = vmatpush1.bf16.xpose.msra.mxu0 %v343
    %361 = vmatprep.subr.bf16.mxu0 0
    %362 = vmatpush2.bf16.xpose.msra.mxu0 0
    %363 = vmatprep.subr.bf16.mxu0 0
    %364 = vmatpush2.bf16.xpose.msra.mxu0 0
    %365 = vmatprep.subr.bf16.mxu0 0
    %366 = vmatpush2.bf16.xpose.msra.mxu0 0
    %367 = vmatprep.subr.bf16.mxu0 0
    %368 = vmatpush2.bf16.xpose.msra.mxu0 0
    %369 = vmatprep.subr.bf16.mxu0 0
    %370 = vmatpush2.bf16.xpose.msra.mxu0 0
    %371 = vmatprep.subr.bf16.mxu0 0
    %372 = vmatpush2.bf16.xpose.msra.mxu0 0
    %373 = vmatprep.subr.bf16.mxu0 0
    %374 = vmatpush2.bf16.xpose.msra.mxu0 0
    %375 = vmatprep.subr.bf16.mxu0 0
    %376 = vmatpush2.bf16.xpose.msra.mxu0 0
    %377 = vmatprep.mubr.bf16.mxu0 0
    %378 = vmatmul.mubr.bf16.gmra.mxu0 %v340
    %v379 = vpop.f32.mrf.mxu0
    %v380 = vadd.f32 %v165, %v379
    %v381 = vpop.f32.mrf.mxu0
    %v382 = vpop.f32.mrf.mxu0
    %v383 = vadd.f32 %v166, %v382
    %v384 = vpop.f32.mrf.mxu0
    %385 = vdwg.mxu0
    %387 = vrot.lane.b32.xlu0 %v284, 96
    %v388 = vpop.permute.xlu0 %387
    %v390 = vsel %vm147, %v260, 0
    %v393 = vsel %vm147, %v388, 0
    %395 = vmatprep.subr.bf16.mxu0 0
    %396 = vmatpush1.bf16.xpose.msra.mxu0 0
    %397 = vmatprep.subr.bf16.mxu0 0
    %398 = vmatpush1.bf16.xpose.msra.mxu0 0
    %399 = vmatprep.subr.bf16.mxu0 0
    %400 = vmatpush1.bf16.xpose.msra.mxu0 0
    %401 = vmatprep.subr.bf16.mxu0 0
    %402 = vmatpush1.bf16.xpose.msra.mxu0 0
    %403 = vmatprep.subr.bf16.mxu0 0
    %404 = vmatpush1.bf16.xpose.msra.mxu0 0
    %405 = vmatprep.subr.bf16.mxu0 0
    %406 = vmatpush1.bf16.xpose.msra.mxu0 0
    %407 = vmatprep.subr.bf16.mxu0 0
    %408 = vmatpush1.bf16.xpose.msra.mxu0 0
    %409 = vmatprep.subr.bf16.mxu0 0
    %410 = vmatpush1.bf16.xpose.msra.mxu0 %v393
    %411 = vmatprep.subr.bf16.mxu0 0
    %412 = vmatpush2.bf16.xpose.msra.mxu0 0
    %413 = vmatprep.subr.bf16.mxu0 0
    %414 = vmatpush2.bf16.xpose.msra.mxu0 0
    %415 = vmatprep.subr.bf16.mxu0 0
    %416 = vmatpush2.bf16.xpose.msra.mxu0 0
    %417 = vmatprep.subr.bf16.mxu0 0
    %418 = vmatpush2.bf16.xpose.msra.mxu0 0
    %419 = vmatprep.subr.bf16.mxu0 0
    %420 = vmatpush2.bf16.xpose.msra.mxu0 0
    %421 = vmatprep.subr.bf16.mxu0 0
    %422 = vmatpush2.bf16.xpose.msra.mxu0 0
    %423 = vmatprep.subr.bf16.mxu0 0
    %424 = vmatpush2.bf16.xpose.msra.mxu0 0
    %425 = vmatprep.subr.bf16.mxu0 0
    %426 = vmatpush2.bf16.xpose.msra.mxu0 0
    %427 = vmatprep.mubr.bf16.mxu0 0
    %428 = vmatmul.mubr.bf16.gmra.mxu0 %v390
    %v429 = vpop.f32.mrf.mxu0
    %v430 = vadd.f32 %v165, %v429
    %v431 = vpop.f32.mrf.mxu0
    %v432 = vpop.f32.mrf.mxu0
    %v433 = vadd.f32 %v166, %v432
    %v434 = vpop.f32.mrf.mxu0
    %435 = vdwg.mxu0
    %437 = vrot.lane.b32.xlu0 %v285, 96
    %v438 = vpop.permute.xlu0 %437
    %v440 = vsel %vm147, %v261, 0
    %v443 = vsel %vm147, %v438, 0
    %445 = vmatprep.subr.bf16.mxu0 0
    %446 = vmatpush1.bf16.xpose.msra.mxu0 0
    %447 = vmatprep.subr.bf16.mxu0 0
    %448 = vmatpush1.bf16.xpose.msra.mxu0 0
    %449 = vmatprep.subr.bf16.mxu0 0
    %450 = vmatpush1.bf16.xpose.msra.mxu0 0
    %451 = vmatprep.subr.bf16.mxu0 0
    %452 = vmatpush1.bf16.xpose.msra.mxu0 0
    %453 = vmatprep.subr.bf16.mxu0 0
    %454 = vmatpush1.bf16.xpose.msra.mxu0 0
    %455 = vmatprep.subr.bf16.mxu0 0
    %456 = vmatpush1.bf16.xpose.msra.mxu0 0
    %457 = vmatprep.subr.bf16.mxu0 0
    %458 = vmatpush1.bf16.xpose.msra.mxu0 0
    %459 = vmatprep.subr.bf16.mxu0 0
    %460 = vmatpush1.bf16.xpose.msra.mxu0 %v443
    %461 = vmatprep.subr.bf16.mxu0 0
    %462 = vmatpush2.bf16.xpose.msra.mxu0 0
    %463 = vmatprep.subr.bf16.mxu0 0
    %464 = vmatpush2.bf16.xpose.msra.mxu0 0
    %465 = vmatprep.subr.bf16.mxu0 0
    %466 = vmatpush2.bf16.xpose.msra.mxu0 0
    %467 = vmatprep.subr.bf16.mxu0 0
    %468 = vmatpush2.bf16.xpose.msra.mxu0 0
    %469 = vmatprep.subr.bf16.mxu0 0
    %470 = vmatpush2.bf16.xpose.msra.mxu0 0
    %471 = vmatprep.subr.bf16.mxu0 0
    %472 = vmatpush2.bf16.xpose.msra.mxu0 0
    %473 = vmatprep.subr.bf16.mxu0 0
    %474 = vmatpush2.bf16.xpose.msra.mxu0 0
    %475 = vmatprep.subr.bf16.mxu0 0
    %476 = vmatpush2.bf16.xpose.msra.mxu0 0
    %477 = vmatprep.mubr.bf16.mxu0 0
    %478 = vmatmul.mubr.bf16.gmra.mxu0 %v440
    %v479 = vpop.f32.mrf.mxu0
    %v480 = vadd.f32 %v165, %v479
    %v481 = vpop.f32.mrf.mxu0
    %v482 = vpop.f32.mrf.mxu0
    %v483 = vadd.f32 %v166, %v482
    %v484 = vpop.f32.mrf.mxu0
    %485 = vdwg.mxu0
    %vm486 = vcmask 130048
    %v487 = vsel %vm486, %v330, -inf
    %488 = vmax.xlane.f32.xlu0 %v487
    %v489 = vpop.xlane.xlu0 %488
    %v490 = vsel %vm486, %v333, -inf
    %491 = vmax.xlane.f32.xlu0 %v490
    %v492 = vpop.xlane.xlu0 %491
    %v493 = vsel %vm486, %v380, -inf
    %494 = vmax.xlane.f32.xlu0 %v493
    %v495 = vpop.xlane.xlu0 %494
    %v496 = vsel %vm486, %v383, -inf
    %497 = vmax.xlane.f32.xlu0 %v496
    %v498 = vpop.xlane.xlu0 %497
    %v499 = vsel %vm486, %v430, -inf
    %500 = vmax.xlane.f32.xlu0 %v499
    %v501 = vpop.xlane.xlu0 %500
    %v502 = vsel %vm486, %v433, -inf
    %503 = vmax.xlane.f32.xlu0 %v502
    %v504 = vpop.xlane.xlu0 %503
    %v505 = vsel %vm486, %v480, -inf
    %506 = vmax.xlane.f32.xlu0 %v505
    %v507 = vpop.xlane.xlu0 %506
    %v508 = vsel %vm486, %v483, -inf
    %509 = vmax.xlane.f32.xlu0 %v508
    %v510 = vpop.xlane.xlu0 %509
    %v511 = vsub.f32 %v330, %v489
    %v512 = vsub.f32 %v333, %v492
    %v513 = vsub.f32 %v380, %v495
    %v514 = vsub.f32 %v383, %v498
    %v515 = vsub.f32 %v430, %v501
    %v516 = vsub.f32 %v433, %v504
    %v517 = vsub.f32 %v480, %v507
    %v518 = vsub.f32 %v483, %v510
    %v519 = vmul.f32 %v511, 1.442695
    %v520 = vpow.pop %v519
    %v521 = vmul.f32 %v512, 1.442695
    %v522 = vpow.pop %v521
    %v523 = vmul.f32 %v513, 1.442695
    %v524 = vpow.pop %v523
    %v525 = vmul.f32 %v514, 1.442695
    %v526 = vpow.pop %v525
    %v527 = vmul.f32 %v515, 1.442695
    %v528 = vpow.pop %v527
    %v529 = vmul.f32 %v516, 1.442695
    %v530 = vpow.pop %v529
    %v531 = vmul.f32 %v517, 1.442695
    %v532 = vpow.pop %v531
    %v533 = vmul.f32 %v518, 1.442695
    %v534 = vpow.pop %v533
    %v535 = vsel %vm486, %v520, 0.0
    %536 = vadd.xlane.f32.xlu0 %v535
    %v537 = vpop.xlane.xlu0 %536
    %v538 = vsel %vm486, %v522, 0.0
    %539 = vadd.xlane.f32.xlu0 %v538
    %v540 = vpop.xlane.xlu0 %539
    %v541 = vsel %vm486, %v524, 0.0
    %542 = vadd.xlane.f32.xlu0 %v541
    %v543 = vpop.xlane.xlu0 %542
    %v544 = vsel %vm486, %v526, 0.0
    %545 = vadd.xlane.f32.xlu0 %v544
    %v546 = vpop.xlane.xlu0 %545
    %v547 = vsel %vm486, %v528, 0.0
    %548 = vadd.xlane.f32.xlu0 %v547
    %v549 = vpop.xlane.xlu0 %548
    %v550 = vsel %vm486, %v530, 0.0
    %551 = vadd.xlane.f32.xlu0 %v550
    %v552 = vpop.xlane.xlu0 %551
    %v553 = vsel %vm486, %v532, 0.0
    %554 = vadd.xlane.f32.xlu0 %v553
    %v555 = vpop.xlane.xlu0 %554
    %v556 = vsel %vm486, %v534, 0.0
    %557 = vadd.xlane.f32.xlu0 %v556
    %v558 = vpop.xlane.xlu0 %557
    %v559 = vrcp.pop %v537
    %v560 = vmul.f32 %v520, %v559
    %v561 = vrcp.pop %v540
    %v562 = vmul.f32 %v522, %v561
    %v563 = vrcp.pop %v543
    %v564 = vmul.f32 %v524, %v563
    %v565 = vrcp.pop %v546
    %v566 = vmul.f32 %v526, %v565
    %v567 = vrcp.pop %v549
    %v568 = vmul.f32 %v528, %v567
    %v569 = vrcp.pop %v552
    %v570 = vmul.f32 %v530, %v569
    %v571 = vrcp.pop %v555
    %v572 = vmul.f32 %v532, %v571
    %v573 = vrcp.pop %v558
    %v574 = vmul.f32 %v534, %v573
    %v575 = vpack.c.bf16 %v562, %v560
    %v576 = vpack.c.bf16 %v566, %v564
    %v577 = vpack.c.bf16 %v570, %v568
    %v578 = vpack.c.bf16 %v574, %v572
    %579 = vrot.lane.b32.xlu0 %v282, 64
    %v580 = vpop.permute.xlu0 %579
    %v583 = vsel %vm486, %v575, 0
    %585 = vmatprep.subr.bf16.mxu0 0
    %586 = vmatpush1.bf16.msra.mxu0 0
    %587 = vmatprep.subr.bf16.mxu0 0
    %588 = vmatpush1.bf16.msra.mxu0 0
    %589 = vmatprep.subr.bf16.mxu0 0
    %590 = vmatpush1.bf16.msra.mxu0 0
    %591 = vmatprep.subr.bf16.mxu0 0
    %592 = vmatpush1.bf16.msra.mxu0 0
    %593 = vmatprep.subr.bf16.mxu0 0
    %594 = vmatpush1.bf16.msra.mxu0 0
    %595 = vmatprep.subr.bf16.mxu0 0
    %596 = vmatpush1.bf16.msra.mxu0 0
    %597 = vmatprep.subr.bf16.mxu0 0
    %598 = vmatpush1.bf16.msra.mxu0 0
    %599 = vmatprep.subr.bf16.mxu0 0
    %600 = vmatpush1.bf16.msra.mxu0 %v580
    %601 = vmatprep.subr.bf16.mxu0 0
    %602 = vmatpush2.bf16.msra.mxu0 0
    %603 = vmatprep.subr.bf16.mxu0 0
    %604 = vmatpush2.bf16.msra.mxu0 0
    %605 = vmatprep.subr.bf16.mxu0 0
    %606 = vmatpush2.bf16.msra.mxu0 0
    %607 = vmatprep.subr.bf16.mxu0 0
    %608 = vmatpush2.bf16.msra.mxu0 0
    %609 = vmatprep.subr.bf16.mxu0 0
    %610 = vmatpush2.bf16.msra.mxu0 0
    %611 = vmatprep.subr.bf16.mxu0 0
    %612 = vmatpush2.bf16.msra.mxu0 0
    %613 = vmatprep.subr.bf16.mxu0 0
    %614 = vmatpush2.bf16.msra.mxu0 0
    %615 = vmatprep.subr.bf16.mxu0 0
    %616 = vmatpush2.bf16.msra.mxu0 0
    %617 = vmatprep.mubr.bf16.mxu0 0
    %618 = vmatmul.mubr.bf16.gmra.mxu0 %v583
    %v619 = vpop.f32.mrf.mxu0
    %v620 = vadd.f32 0.0, %v619
    %v621 = vpop.f32.mrf.mxu0
    %v622 = vpop.f32.mrf.mxu0
    %v623 = vadd.f32 0.0, %v622
    %v624 = vpop.f32.mrf.mxu0
    %625 = vdwg.mxu0
    %626 = vrot.lane.b32.xlu0 %v283, 64
    %v627 = vpop.permute.xlu0 %626
    %v630 = vsel %vm486, %v576, 0
    %632 = vmatprep.subr.bf16.mxu0 0
    %633 = vmatpush1.bf16.msra.mxu0 0
    %634 = vmatprep.subr.bf16.mxu0 0
    %635 = vmatpush1.bf16.msra.mxu0 0
    %636 = vmatprep.subr.bf16.mxu0 0
    %637 = vmatpush1.bf16.msra.mxu0 0
    %638 = vmatprep.subr.bf16.mxu0 0
    %639 = vmatpush1.bf16.msra.mxu0 0
    %640 = vmatprep.subr.bf16.mxu0 0
    %641 = vmatpush1.bf16.msra.mxu0 0
    %642 = vmatprep.subr.bf16.mxu0 0
    %643 = vmatpush1.bf16.msra.mxu0 0
    %644 = vmatprep.subr.bf16.mxu0 0
    %645 = vmatpush1.bf16.msra.mxu0 0
    %646 = vmatprep.subr.bf16.mxu0 0
    %647 = vmatpush1.bf16.msra.mxu0 %v627
    %648 = vmatprep.subr.bf16.mxu0 0
    %649 = vmatpush2.bf16.msra.mxu0 0
    %650 = vmatprep.subr.bf16.mxu0 0
    %651 = vmatpush2.bf16.msra.mxu0 0
    %652 = vmatprep.subr.bf16.mxu0 0
    %653 = vmatpush2.bf16.msra.mxu0 0
    %654 = vmatprep.subr.bf16.mxu0 0
    %655 = vmatpush2.bf16.msra.mxu0 0
    %656 = vmatprep.subr.bf16.mxu0 0
    %657 = vmatpush2.bf16.msra.mxu0 0
    %658 = vmatprep.subr.bf16.mxu0 0
    %659 = vmatpush2.bf16.msra.mxu0 0
    %660 = vmatprep.subr.bf16.mxu0 0
    %661 = vmatpush2.bf16.msra.mxu0 0
    %662 = vmatprep.subr.bf16.mxu0 0
    %663 = vmatpush2.bf16.msra.mxu0 0
    %664 = vmatprep.mubr.bf16.mxu0 0
    %665 = vmatmul.mubr.bf16.gmra.mxu0 %v630
    %v666 = vpop.f32.mrf.mxu0
    %v667 = vadd.f32 0.0, %v666
    %v668 = vpop.f32.mrf.mxu0
    %v669 = vpop.f32.mrf.mxu0
    %v670 = vadd.f32 0.0, %v669
    %v671 = vpop.f32.mrf.mxu0
    %672 = vdwg.mxu0
    %673 = vrot.lane.b32.xlu0 %v284, 64
    %v674 = vpop.permute.xlu0 %673
    %v677 = vsel %vm486, %v577, 0
    %679 = vmatprep.subr.bf16.mxu0 0
    %680 = vmatpush1.bf16.msra.mxu0 0
    %681 = vmatprep.subr.bf16.mxu0 0
    %682 = vmatpush1.bf16.msra.mxu0 0
    %683 = vmatprep.subr.bf16.mxu0 0
    %684 = vmatpush1.bf16.msra.mxu0 0
    %685 = vmatprep.subr.bf16.mxu0 0
    %686 = vmatpush1.bf16.msra.mxu0 0
    %687 = vmatprep.subr.bf16.mxu0 0
    %688 = vmatpush1.bf16.msra.mxu0 0
    %689 = vmatprep.subr.bf16.mxu0 0
    %690 = vmatpush1.bf16.msra.mxu0 0
    %691 = vmatprep.subr.bf16.mxu0 0
    %692 = vmatpush1.bf16.msra.mxu0 0
    %693 = vmatprep.subr.bf16.mxu0 0
    %694 = vmatpush1.bf16.msra.mxu0 %v674
    %695 = vmatprep.subr.bf16.mxu0 0
    %696 = vmatpush2.bf16.msra.mxu0 0
    %697 = vmatprep.subr.bf16.mxu0 0
    %698 = vmatpush2.bf16.msra.mxu0 0
    %699 = vmatprep.subr.bf16.mxu0 0
    %700 = vmatpush2.bf16.msra.mxu0 0
    %701 = vmatprep.subr.bf16.mxu0 0
    %702 = vmatpush2.bf16.msra.mxu0 0
    %703 = vmatprep.subr.bf16.mxu0 0
    %704 = vmatpush2.bf16.msra.mxu0 0
    %705 = vmatprep.subr.bf16.mxu0 0
    %706 = vmatpush2.bf16.msra.mxu0 0
    %707 = vmatprep.subr.bf16.mxu0 0
    %708 = vmatpush2.bf16.msra.mxu0 0
    %709 = vmatprep.subr.bf16.mxu0 0
    %710 = vmatpush2.bf16.msra.mxu0 0
    %711 = vmatprep.mubr.bf16.mxu0 0
    %712 = vmatmul.mubr.bf16.gmra.mxu0 %v677
    %v713 = vpop.f32.mrf.mxu0
    %v714 = vadd.f32 0.0, %v713
    %v715 = vpop.f32.mrf.mxu0
    %v716 = vpop.f32.mrf.mxu0
    %v717 = vadd.f32 0.0, %v716
    %v718 = vpop.f32.mrf.mxu0
    %719 = vdwg.mxu0
    %720 = vrot.lane.b32.xlu0 %v285, 64
    %v721 = vpop.permute.xlu0 %720
    %v724 = vsel %vm486, %v578, 0
    %726 = vmatprep.subr.bf16.mxu0 0
    %727 = vmatpush1.bf16.msra.mxu0 0
    %728 = vmatprep.subr.bf16.mxu0 0
    %729 = vmatpush1.bf16.msra.mxu0 0
    %730 = vmatprep.subr.bf16.mxu0 0
    %731 = vmatpush1.bf16.msra.mxu0 0
    %732 = vmatprep.subr.bf16.mxu0 0
    %733 = vmatpush1.bf16.msra.mxu0 0
    %734 = vmatprep.subr.bf16.mxu0 0
    %735 = vmatpush1.bf16.msra.mxu0 0
    %736 = vmatprep.subr.bf16.mxu0 0
    %737 = vmatpush1.bf16.msra.mxu0 0
    %738 = vmatprep.subr.bf16.mxu0 0
    %739 = vmatpush1.bf16.msra.mxu0 0
    %740 = vmatprep.subr.bf16.mxu0 0
    %741 = vmatpush1.bf16.msra.mxu0 %v721
    %742 = vmatprep.subr.bf16.mxu0 0
    %743 = vmatpush2.bf16.msra.mxu0 0
    %744 = vmatprep.subr.bf16.mxu0 0
    %745 = vmatpush2.bf16.msra.mxu0 0
    %746 = vmatprep.subr.bf16.mxu0 0
    %747 = vmatpush2.bf16.msra.mxu0 0
    %748 = vmatprep.subr.bf16.mxu0 0
    %749 = vmatpush2.bf16.msra.mxu0 0
    %750 = vmatprep.subr.bf16.mxu0 0
    %751 = vmatpush2.bf16.msra.mxu0 0
    %752 = vmatprep.subr.bf16.mxu0 0
    %753 = vmatpush2.bf16.msra.mxu0 0
    %754 = vmatprep.subr.bf16.mxu0 0
    %755 = vmatpush2.bf16.msra.mxu0 0
    %756 = vmatprep.subr.bf16.mxu0 0
    %757 = vmatpush2.bf16.msra.mxu0 0
    %758 = vmatprep.mubr.bf16.mxu0 0
    %759 = vmatmul.mubr.bf16.gmra.mxu0 %v724
    %v760 = vpop.f32.mrf.mxu0
    %v761 = vadd.f32 0.0, %v760
    %v762 = vpop.f32.mrf.mxu0
    %v763 = vpop.f32.mrf.mxu0
    %v764 = vadd.f32 0.0, %v763
    %v765 = vpop.f32.mrf.mxu0
    %766 = vdwg.mxu0
    %769 = vrot.lane.b32.xlu0 %v667, 8
    %v770 = vpop.permute.xlu0 %769
    %771 = vrot.lane.b32.xlu0 %v670, 8
    %v772 = vpop.permute.xlu0 %771
    %777 = vrot.lane.b32.xlu0 %v714, 16
    %v778 = vpop.permute.xlu0 %777
    %779 = vrot.lane.b32.xlu0 %v717, 16
    %v780 = vpop.permute.xlu0 %779
    %785 = vrot.lane.b32.xlu0 %v761, 24
    %v786 = vpop.permute.xlu0 %785
    %787 = vrot.lane.b32.xlu0 %v764, 24
    %v788 = vpop.permute.xlu0 %787
    %v791 = vsel %vm147, %v620, %v770
    %v792 = vsel %vm147, %v623, %v772
    %v793 = vsel %vm486, %v791, %v778
    %v794 = vsel %vm486, %v792, %v780
    %vm795 = vcmask 195584
    %v796 = vsel %vm795, %v793, %v786
    %v797 = vsel %vm795, %v794, %v788
    %v798 = vpack.c.bf16 %v797, %v796
    %v799 = vld [vmem:[%s5] sm:$0xf]
    %v800 = vld [vmem:[%s5 + $0x4] sm:$0xf]
    %v801 = vld [vmem:[%s5 + $0x8] sm:$0xf]
    %v802 = vld [vmem:[%s5 + $0xc] sm:$0xf]
    %v803 = vld [vmem:[%s6] sm:$0x1]
    %v805 = vlaneseq
    %v806 = vshrl.u32 %v805, 7
    %v807 = vsub.s32 0, %v806
    %v808 = vrot.slane %v803, %v807
    %v814 = vunpack.c.l.b16 %v799
    %v815 = vunpack.c.l.b16 %v800
    %v816 = vunpack.c.l.b16 %v801
    %v817 = vunpack.c.l.b16 %v802
    %v818 = vpack.c.b16 %v815, %v814
    %v819 = vpack.c.b16 %v817, %v816
    %v823 = vsel %vm191, %v798, 0
    %825 = vmatprep.subr.bf16.mxu0 0
    %826 = vmatpush1.bf16.msra.mxu0 0
    %827 = vmatprep.subr.bf16.mxu0 0
    %828 = vmatpush1.bf16.msra.mxu0 0
    %829 = vmatprep.subr.bf16.mxu0 0
    %830 = vmatpush1.bf16.msra.mxu0 0
    %831 = vmatprep.subr.bf16.mxu0 0
    %832 = vmatpush1.bf16.msra.mxu0 0
    %833 = vmatprep.subr.bf16.mxu0 0
    %834 = vmatpush1.bf16.msra.mxu0 0
    %835 = vmatprep.subr.bf16.mxu0 0
    %836 = vmatpush1.bf16.msra.mxu0 0
    %837 = vmatprep.subr.bf16.mxu0 0
    %838 = vmatpush1.bf16.msra.mxu0 %v819
    %839 = vmatprep.subr.bf16.mxu0 0
    %840 = vmatpush1.bf16.msra.mxu0 %v818
    %841 = vmatprep.subr.bf16.mxu0 0
    %842 = vmatpush2.bf16.msra.mxu0 0
    %843 = vmatprep.subr.bf16.mxu0 0
    %844 = vmatpush2.bf16.msra.mxu0 0
    %845 = vmatprep.subr.bf16.mxu0 0
    %846 = vmatpush2.bf16.msra.mxu0 0
    %847 = vmatprep.subr.bf16.mxu0 0
    %848 = vmatpush2.bf16.msra.mxu0 0
    %849 = vmatprep.subr.bf16.mxu0 0
    %850 = vmatpush2.bf16.msra.mxu0 0
    %851 = vmatprep.subr.bf16.mxu0 0
    %852 = vmatpush2.bf16.msra.mxu0 0
    %853 = vmatprep.subr.bf16.mxu0 0
    %854 = vmatpush2.bf16.msra.mxu0 0
    %855 = vmatprep.subr.bf16.mxu0 0
    %856 = vmatpush2.bf16.msra.mxu0 0
    %857 = vmatprep.mubr.bf16.mxu0 0
    %858 = vmatmul.mubr.bf16.gmra.mxu0 %v823
    %v859 = vpop.f32.mrf.mxu0
    %v860 = vadd.f32 %v808, %v859
    %v861 = vpop.f32.mrf.mxu0
    %v862 = vpop.f32.mrf.mxu0
    %v863 = vadd.f32 %v808, %v862
    %v864 = vpop.f32.mrf.mxu0
    %865 = vdwg.mxu0
    %v866 = vadd.f32 %v145, %v860
    %v867 = vadd.f32 %v146, %v863
    %v868 = vld [vmem:[%s7] sm:$0x1]
    %v869 = vld [vmem:[%s8] sm:$0x1]
    %v870 = vsel %vm191, %v866, 0.0
    %871 = vadd.xlane.f32.xlu0 %v870
    %v872 = vpop.xlane.xlu0 %871
    %v873 = vsel %vm191, %v867, 0.0
    %874 = vadd.xlane.f32.xlu0 %v873
    %v875 = vpop.xlane.xlu0 %874
    %v876 = vrcp.pop 32.0
    %v877 = vmul.f32 %v872, %v876
    %v878 = vmul.f32 %v875, %v876
    %v879 = vsub.f32 %v866, %v877
    %v880 = vsub.f32 %v867, %v878
    %v881 = vmul.f32 %v879, %v879
    %v882 = vmul.f32 %v880, %v880
    %v883 = vsel %vm191, %v881, 0.0
    %884 = vadd.xlane.f32.xlu0 %v883
    %v885 = vpop.xlane.xlu0 %884
    %v886 = vsel %vm191, %v882, 0.0
    %887 = vadd.xlane.f32.xlu0 %v886
    %v888 = vpop.xlane.xlu0 %887
    %v889 = vmul.f32 %v885, %v876
    %v890 = vmul.f32 %v888, %v876
    %v891 = vadd.f32 %v889, 1e-05
    %v892 = vadd.f32 %v890, 1e-05
    %v893 = vrsqrt.pop %v891
    %v894 = vrsqrt.pop %v892
    %v895 = vmul.f32 %v879, %v893
    %v896 = vmul.f32 %v880, %v894
    %v898 = vlaneseq
    %v899 = vshrl.u32 %v898, 7
    %v900 = vsub.s32 0, %v899
    %v901 = vrot.slane %v868, %v900
    %v903 = vmul.f32 %v895, %v901
    %v904 = vmul.f32 %v896, %v901
    %v906 = vlaneseq
    %v907 = vshrl.u32 %v906, 7
    %v908 = vsub.s32 0, %v907
    %v909 = vrot.slane %v869, %v908
    %v911 = vadd.f32 %v903, %v909
    %v912 = vadd.f32 %v904, %v909
    %v913 = vpack.c.bf16 %v912, %v911
    %v914 = vld [vmem:[%s9] sm:$0xf]
    %v915 = vld [vmem:[%s9 + $0x4] sm:$0xf]
    %v916 = vld [vmem:[%s9 + $0x8] sm:$0xf]
    %v917 = vld [vmem:[%s9 + $0xc] sm:$0xf]
    %v918 = vld [vmem:[%s10] sm:$0x1]
    %v920 = vlaneseq
    %v921 = vshrl.u32 %v920, 7
    %v922 = vsub.s32 0, %v921
    %v923 = vrot.slane %v918, %v922
    %v929 = vunpack.c.l.b16 %v914
    %v930 = vunpack.c.l.b16 %v915
    %v931 = vunpack.c.l.b16 %v916
    %v932 = vunpack.c.l.b16 %v917
    %v933 = vpack.c.b16 %v930, %v929
    %v934 = vpack.c.b16 %v932, %v931
    %v938 = vsel %vm191, %v913, 0
    %940 = vmatprep.subr.bf16.mxu0 0
    %941 = vmatpush1.bf16.msra.mxu0 0
    %942 = vmatprep.subr.bf16.mxu0 0
    %943 = vmatpush1.bf16.msra.mxu0 0
    %944 = vmatprep.subr.bf16.mxu0 0
    %945 = vmatpush1.bf16.msra.mxu0 0
    %946 = vmatprep.subr.bf16.mxu0 0
    %947 = vmatpush1.bf16.msra.mxu0 0
    %948 = vmatprep.subr.bf16.mxu0 0
    %949 = vmatpush1.bf16.msra.mxu0 0
    %950 = vmatprep.subr.bf16.mxu0 0
    %951 = vmatpush1.bf16.msra.mxu0 0
    %952 = vmatprep.subr.bf16.mxu0 0
    %953 = vmatpush1.bf16.msra.mxu0 %v934
    %954 = vmatprep.subr.bf16.mxu0 0
    %955 = vmatpush1.bf16.msra.mxu0 %v933
    %956 = vmatprep.subr.bf16.mxu0 0
    %957 = vmatpush2.bf16.msra.mxu0 0
    %958 = vmatprep.subr.bf16.mxu0 0
    %959 = vmatpush2.bf16.msra.mxu0 0
    %960 = vmatprep.subr.bf16.mxu0 0
    %961 = vmatpush2.bf16.msra.mxu0 0
    %962 = vmatprep.subr.bf16.mxu0 0
    %963 = vmatpush2.bf16.msra.mxu0 0
    %964 = vmatprep.subr.bf16.mxu0 0
    %965 = vmatpush2.bf16.msra.mxu0 0
    %966 = vmatprep.subr.bf16.mxu0 0
    %967 = vmatpush2.bf16.msra.mxu0 0
    %968 = vmatprep.subr.bf16.mxu0 0
    %969 = vmatpush2.bf16.msra.mxu0 0
    %970 = vmatprep.subr.bf16.mxu0 0
    %971 = vmatpush2.bf16.msra.mxu0 0
    %972 = vmatprep.mubr.bf16.mxu0 0
    %973 = vmatmul.mubr.bf16.gmra.mxu0 %v938
    %v974 = vpop.f32.mrf.mxu0
    %v975 = vadd.f32 %v923, %v974
    %v976 = vpop.f32.mrf.mxu0
    %v977 = vpop.f32.mrf.mxu0
    %v978 = vadd.f32 %v923, %v977
    %v979 = vpop.f32.mrf.mxu0
    %980 = vdwg.mxu0
    %v981 = vmul.f32 %v975, 0.5
    %v982 = vmul.f32 %v978, 0.5
    %v983 = vmul.f32 %v975, 0.70710677
    %v984 = vmul.f32 %v978, 0.70710677
    %v985 = verf.f32.pop %v983
    %v986 = verf.f32.pop %v984
    %v987 = vadd.f32 %v985, 1.0
    %v988 = vadd.f32 %v986, 1.0
    %v989 = vmul.f32 %v981, %v987
    %v990 = vmul.f32 %v982, %v988
    %v991 = vpack.c.bf16 %v990, %v989
    %v992 = vld [vmem:[%s11] sm:$0xf]
    %v993 = vld [vmem:[%s11 + $0x4] sm:$0xf]
    %v994 = vld [vmem:[%s11 + $0x8] sm:$0xf]
    %v995 = vld [vmem:[%s11 + $0xc] sm:$0xf]
    %v996 = vld [vmem:[%s11 + $0x10] sm:$0xf]
    %v997 = vld [vmem:[%s11 + $0x14] sm:$0xf]
    %v998 = vld [vmem:[%s11 + $0x18] sm:$0xf]
    %v999 = vld [vmem:[%s11 + $0x1c] sm:$0xf]
    %v1000 = vld [vmem:[%s11 + $0x20] sm:$0xf]
    %v1001 = vld [vmem:[%s11 + $0x24] sm:$0xf]
    %v1002 = vld [vmem:[%s11 + $0x28] sm:$0xf]
    %v1003 = vld [vmem:[%s11 + $0x2c] sm:$0xf]
    %v1004 = vld [vmem:[%s11 + $0x30] sm:$0xf]
    %v1005 = vld [vmem:[%s11 + $0x34] sm:$0xf]
    %v1006 = vld [vmem:[%s11 + $0x38] sm:$0xf]
    %v1007 = vld [vmem:[%s11 + $0x3c] sm:$0xf]
    %v1008 = vld [vmem:[%s12] sm:$0x1]
    %v1010 = vlaneseq
    %v1011 = vshrl.u32 %v1010, 7
    %v1012 = vsub.s32 0, %v1011
    %v1013 = vrot.slane %v1008, %v1012
    %v1031 = vunpack.c.l.b16 %v992
    %v1032 = vunpack.c.l.b16 %v993
    %v1033 = vunpack.c.l.b16 %v994
    %v1034 = vunpack.c.l.b16 %v995
    %v1035 = vunpack.c.l.b16 %v996
    %v1036 = vunpack.c.l.b16 %v997
    %v1037 = vunpack.c.l.b16 %v998
    %v1038 = vunpack.c.l.b16 %v999
    %v1039 = vunpack.c.l.b16 %v1000
    %v1040 = vunpack.c.l.b16 %v1001
    %v1041 = vunpack.c.l.b16 %v1002
    %v1042 = vunpack.c.l.b16 %v1003
    %v1043 = vunpack.c.l.b16 %v1004
    %v1044 = vunpack.c.l.b16 %v1005
    %v1045 = vunpack.c.l.b16 %v1006
    %v1046 = vunpack.c.l.b16 %v1007
    %v1047 = vpack.c.b16 %v1032, %v1031
    %v1048 = vpack.c.b16 %v1034, %v1033
    %v1049 = vpack.c.b16 %v1036, %v1035
    %v1050 = vpack.c.b16 %v1038, %v1037
    %v1051 = vpack.c.b16 %v1040, %v1039
    %v1052 = vpack.c.b16 %v1042, %v1041
    %v1053 = vpack.c.b16 %v1044, %v1043
    %v1054 = vpack.c.b16 %v1046, %v1045
    %1063 = vmatprep.subr.bf16.mxu0 0
    %1064 = vmatpush1.bf16.msra.mxu0 %v1054
    %1065 = vmatprep.subr.bf16.mxu0 0
    %1066 = vmatpush1.bf16.msra.mxu0 %v1053
    %1067 = vmatprep.subr.bf16.mxu0 0
    %1068 = vmatpush1.bf16.msra.mxu0 %v1052
    %1069 = vmatprep.subr.bf16.mxu0 0
    %1070 = vmatpush1.bf16.msra.mxu0 %v1051
    %1071 = vmatprep.subr.bf16.mxu0 0
    %1072 = vmatpush1.bf16.msra.mxu0 %v1050
    %1073 = vmatprep.subr.bf16.mxu0 0
    %1074 = vmatpush1.bf16.msra.mxu0 %v1049
    %1075 = vmatprep.subr.bf16.mxu0 0
    %1076 = vmatpush1.bf16.msra.mxu0 %v1048
    %1077 = vmatprep.subr.bf16.mxu0 0
    %1078 = vmatpush1.bf16.msra.mxu0 %v1047
    %1079 = vmatprep.subr.bf16.mxu0 0
    %1080 = vmatpush2.bf16.msra.mxu0 0
    %1081 = vmatprep.subr.bf16.mxu0 0
    %1082 = vmatpush2.bf16.msra.mxu0 0
    %1083 = vmatprep.subr.bf16.mxu0 0
    %1084 = vmatpush2.bf16.msra.mxu0 0
    %1085 = vmatprep.subr.bf16.mxu0 0
    %1086 = vmatpush2.bf16.msra.mxu0 0
    %1087 = vmatprep.subr.bf16.mxu0 0
    %1088 = vmatpush2.bf16.msra.mxu0 0
    %1089 = vmatprep.subr.bf16.mxu0 0
    %1090 = vmatpush2.bf16.msra.mxu0 0
    %1091 = vmatprep.subr.bf16.mxu0 0
    %1092 = vmatpush2.bf16.msra.mxu0 0
    %1093 = vmatprep.subr.bf16.mxu0 0
    %1094 = vmatpush2.bf16.msra.mxu0 0
    %1095 = vmatprep.mubr.bf16.mxu0 0
    %1096 = vmatmul.mubr.bf16.gmra.mxu0 %v991
    %v1097 = vpop.f32.mrf.mxu0
    %v1098 = vadd.f32 %v1013, %v1097
    %v1099 = vpop.f32.mrf.mxu0
    %v1100 = vpop.f32.mrf.mxu0
    %v1101 = vadd.f32 %v1013, %v1100
    %v1102 = vpop.f32.mrf.mxu0
    %1103 = vdwg.mxu0
    %v1104 = vadd.f32 %v911, %v1098
    %v1105 = vadd.f32 %v912, %v1101
    %v1106 = vld [vmem:[%s13] sm:$0x1]
    %v1107 = vld [vmem:[%s14] sm:$0x1]
    %v1108 = vsel %vm191, %v1104, 0.0
    %1109 = vadd.xlane.f32.xlu0 %v1108
    %v1110 = vpop.xlane.xlu0 %1109
    %v1111 = vsel %vm191, %v1105, 0.0
    %1112 = vadd.xlane.f32.xlu0 %v1111
    %v1113 = vpop.xlane.xlu0 %1112
    %v1114 = vmul.f32 %v1110, %v876
    %v1115 = vmul.f32 %v1113, %v876
    %v1116 = vsub.f32 %v1104, %v1114
    %v1117 = vsub.f32 %v1105, %v1115
    %v1118 = vmul.f32 %v1116, %v1116
    %v1119 = vmul.f32 %v1117, %v1117
    %v1120 = vsel %vm191, %v1118, 0.0
    %1121 = vadd.xlane.f32.xlu0 %v1120
    %v1122 = vpop.xlane.xlu0 %1121
    %v1123 = vsel %vm191, %v1119, 0.0
    %1124 = vadd.xlane.f32.xlu0 %v1123
    %v1125 = vpop.xlane.xlu0 %1124
    %v1126 = vmul.f32 %v1122, %v876
    %v1127 = vmul.f32 %v1125, %v876
    %v1128 = vadd.f32 %v1126, 1e-05
    %v1129 = vadd.f32 %v1127, 1e-05
    %v1130 = vrsqrt.pop %v1128
    %v1131 = vrsqrt.pop %v1129
    %v1132 = vmul.f32 %v1116, %v1130
    %v1133 = vmul.f32 %v1117, %v1131
    %v1135 = vlaneseq
    %v1136 = vshrl.u32 %v1135, 7
    %v1137 = vsub.s32 0, %v1136
    %v1138 = vrot.slane %v1106, %v1137
    %v1140 = vmul.f32 %v1132, %v1138
    %v1141 = vmul.f32 %v1133, %v1138
    %v1143 = vlaneseq
    %v1144 = vshrl.u32 %v1143, 7
    %v1145 = vsub.s32 0, %v1144
    %v1146 = vrot.slane %v1107, %v1145
    %v1148 = vadd.f32 %v1140, %v1146
    %v1149 = vadd.f32 %v1141, %v1146
    %v1150 = vpack.c.bf16 %v1149, %v1148
    %s1151 = scalar_lea.vmem %s3, 16
    %v1152 = vld [vmem:[%s1151] sm:$0xf]
    %v1153 = vld [vmem:[%s1151 + $0x4] sm:$0xf]
    %v1154 = vld [vmem:[%s1151 + $0x8] sm:$0xf]
    %v1155 = vld [vmem:[%s1151 + $0xc] sm:$0xf]
    %s1156 = scalar_lea.vmem %s4, 1
    %v1157 = vld [vmem:[%s1156] sm:$0x1]
    %v1159 = vlaneseq
    %v1160 = vshrl.u32 %v1159, 7
    %v1161 = vsub.s32 0, %v1160
    %v1162 = vrot.slane %v1157, %v1161
    %v1168 = vunpack.c.l.b16 %v1152
    %v1169 = vunpack.c.l.b16 %v1153
    %v1170 = vunpack.c.l.b16 %v1154
    %v1171 = vunpack.c.l.b16 %v1155
    %v1172 = vpack.c.b16 %v1169, %v1168
    %v1173 = vpack.c.b16 %v1171, %v1170
    %v1177 = vsel %vm191, %v1150, 0
    %1179 = vmatprep.subr.bf16.mxu0 0
    %1180 = vmatpush1.bf16.msra.mxu0 0
    %1181 = vmatprep.subr.bf16.mxu0 0
    %1182 = vmatpush1.bf16.msra.mxu0 0
    %1183 = vmatprep.subr.bf16.mxu0 0
    %1184 = vmatpush1.bf16.msra.mxu0 0
    %1185 = vmatprep.subr.bf16.mxu0 0
    %1186 = vmatpush1.bf16.msra.mxu0 0
    %1187 = vmatprep.subr.bf16.mxu0 0
    %1188 = vmatpush1.bf16.msra.mxu0 0
    %1189 = vmatprep.subr.bf16.mxu0 0
    %1190 = vmatpush1.bf16.msra.mxu0 0
    %1191 = vmatprep.subr.bf16.mxu0 0
    %1192 = vmatpush1.bf16.msra.mxu0 %v1173
    %1193 = vmatprep.subr.bf16.mxu0 0
    %1194 = vmatpush1.bf16.msra.mxu0 %v1172
    %1195 = vmatprep.subr.bf16.mxu0 0
    %1196 = vmatpush2.bf16.msra.mxu0 0
    %1197 = vmatprep.subr.bf16.mxu0 0
    %1198 = vmatpush2.bf16.msra.mxu0 0
    %1199 = vmatprep.subr.bf16.mxu0 0
    %1200 = vmatpush2.bf16.msra.mxu0 0
    %1201 = vmatprep.subr.bf16.mxu0 0
    %1202 = vmatpush2.bf16.msra.mxu0 0
    %1203 = vmatprep.subr.bf16.mxu0 0
    %1204 = vmatpush2.bf16.msra.mxu0 0
    %1205 = vmatprep.subr.bf16.mxu0 0
    %1206 = vmatpush2.bf16.msra.mxu0 0
    %1207 = vmatprep.subr.bf16.mxu0 0
    %1208 = vmatpush2.bf16.msra.mxu0 0
    %1209 = vmatprep.subr.bf16.mxu0 0
    %1210 = vmatpush2.bf16.msra.mxu0 0
    %1211 = vmatprep.mubr.bf16.mxu0 0
    %1212 = vmatmul.mubr.bf16.gmra.mxu0 %v1177
    %v1213 = vpop.f32.mrf.mxu0
    %v1214 = vadd.f32 %v1162, %v1213
    %v1215 = vpop.f32.mrf.mxu0
    %v1216 = vpop.f32.mrf.mxu0
    %v1217 = vadd.f32 %v1162, %v1216
    %v1218 = vpop.f32.mrf.mxu0
    %1219 = vdwg.mxu0
    %v1220 = vmul.f32 %v1214, 0.35355338
    %v1221 = vmul.f32 %v1217, 0.35355338
    %1224 = vrot.lane.b32.xlu0 %v1220, 120
    %v1225 = vpop.permute.xlu0 %1224
    %1226 = vrot.lane.b32.xlu0 %v1221, 120
    %v1227 = vpop.permute.xlu0 %1226
    %1230 = vrot.lane.b32.xlu0 %v1220, 112
    %v1231 = vpop.permute.xlu0 %1230
    %1232 = vrot.lane.b32.xlu0 %v1221, 112
    %v1233 = vpop.permute.xlu0 %1232
    %1236 = vrot.lane.b32.xlu0 %v1220, 104
    %v1237 = vpop.permute.xlu0 %1236
    %1238 = vrot.lane.b32.xlu0 %v1221, 104
    %v1239 = vpop.permute.xlu0 %1238
    %v1242 = vpack.c.bf16 %v1221, %v1220
    %v1243 = vpack.c.bf16 %v1227, %v1225
    %v1244 = vpack.c.bf16 %v1233, %v1231
    %v1245 = vpack.c.bf16 %v1239, %v1237
    %1248 = vrot.lane.b32.xlu0 %v1214, 120
    %v1249 = vpop.permute.xlu0 %1248
    %1250 = vrot.lane.b32.xlu0 %v1217, 120
    %v1251 = vpop.permute.xlu0 %1250
    %1254 = vrot.lane.b32.xlu0 %v1214, 112
    %v1255 = vpop.permute.xlu0 %1254
    %1256 = vrot.lane.b32.xlu0 %v1217, 112
    %v1257 = vpop.permute.xlu0 %1256
    %1260 = vrot.lane.b32.xlu0 %v1214, 104
    %v1261 = vpop.permute.xlu0 %1260
    %1262 = vrot.lane.b32.xlu0 %v1217, 104
    %v1263 = vpop.permute.xlu0 %1262
    %v1266 = vpack.c.bf16 %v1217, %v1214
    %v1267 = vpack.c.bf16 %v1251, %v1249
    %v1268 = vpack.c.bf16 %v1257, %v1255
    %v1269 = vpack.c.bf16 %v1263, %v1261
    %1271 = vrot.lane.b32.xlu0 %v1266, 96
    %v1272 = vpop.permute.xlu0 %1271
    %v1274 = vsel %vm147, %v1242, 0
    %v1277 = vsel %vm147, %v1272, 0
    %1279 = vmatprep.subr.bf16.mxu0 0
    %1280 = vmatpush1.bf16.xpose.msra.mxu0 0
    %1281 = vmatprep.subr.bf16.mxu0 0
    %1282 = vmatpush1.bf16.xpose.msra.mxu0 0
    %1283 = vmatprep.subr.bf16.mxu0 0
    %1284 = vmatpush1.bf16.xpose.msra.mxu0 0
    %1285 = vmatprep.subr.bf16.mxu0 0
    %1286 = vmatpush1.bf16.xpose.msra.mxu0 0
    %1287 = vmatprep.subr.bf16.mxu0 0
    %1288 = vmatpush1.bf16.xpose.msra.mxu0 0
    %1289 = vmatprep.subr.bf16.mxu0 0
    %1290 = vmatpush1.bf16.xpose.msra.mxu0 0
    %1291 = vmatprep.subr.bf16.mxu0 0
    %1292 = vmatpush1.bf16.xpose.msra.mxu0 0
    %1293 = vmatprep.subr.bf16.mxu0 0
    %1294 = vmatpush1.bf16.xpose.msra.mxu0 %v1277
    %1295 = vmatprep.subr.bf16.mxu0 0
    %1296 = vmatpush2.bf16.xpose.msra.mxu0 0
    %1297 = vmatprep.subr.bf16.mxu0 0
    %1298 = vmatpush2.bf16.xpose.msra.mxu0 0
    %1299 = vmatprep.subr.bf16.mxu0 0
    %1300 = vmatpush2.bf16.xpose.msra.mxu0 0
    %1301 = vmatprep.subr.bf16.mxu0 0
    %1302 = vmatpush2.bf16.xpose.msra.mxu0 0
    %1303 = vmatprep.subr.bf16.mxu0 0
    %1304 = vmatpush2.bf16.xpose.msra.mxu0 0
    %1305 = vmatprep.subr.bf16.mxu0 0
    %1306 = vmatpush2.bf16.xpose.msra.mxu0 0
    %1307 = vmatprep.subr.bf16.mxu0 0
    %1308 = vmatpush2.bf16.xpose.msra.mxu0 0
    %1309 = vmatprep.subr.bf16.mxu0 0
    %1310 = vmatpush2.bf16.xpose.msra.mxu0 0
    %1311 = vmatprep.mubr.bf16.mxu0 0
    %1312 = vmatmul.mubr.bf16.gmra.mxu0 %v1274
    %v1313 = vpop.f32.mrf.mxu0
    %v1314 = vadd.f32 %v165, %v1313
    %v1315 = vpop.f32.mrf.mxu0
    %v1316 = vpop.f32.mrf.mxu0
    %v1317 = vadd.f32 %v166, %v1316
    %v1318 = vpop.f32.mrf.mxu0
    %1319 = vdwg.mxu0
    %1321 = vrot.lane.b32.xlu0 %v1267, 96
    %v1322 = vpop.permute.xlu0 %1321
    %v1324 = vsel %vm147, %v1243, 0
    %v1327 = vsel %vm147, %v1322, 0
    %1329 = vmatprep.subr.bf16.mxu0 0
    %1330 = vmatpush1.bf16.xpose.msra.mxu0 0
    %1331 = vmatprep.subr.bf16.mxu0 0
    %1332 = vmatpush1.bf16.xpose.msra.mxu0 0
    %1333 = vmatprep.subr.bf16.mxu0 0
    %1334 = vmatpush1.bf16.xpose.msra.mxu0 0
    %1335 = vmatprep.subr.bf16.mxu0 0
    %1336 = vmatpush1.bf16.xpose.msra.mxu0 0
    %1337 = vmatprep.subr.bf16.mxu0 0
    %1338 = vmatpush1.bf16.xpose.msra.mxu0 0
    %1339 = vmatprep.subr.bf16.mxu0 0
    %1340 = vmatpush1.bf16.xpose.msra.mxu0 0
    %1341 = vmatprep.subr.bf16.mxu0 0
    %1342 = vmatpush1.bf16.xpose.msra.mxu0 0
    %1343 = vmatprep.subr.bf16.mxu0 0
    %1344 = vmatpush1.bf16.xpose.msra.mxu0 %v1327
    %1345 = vmatprep.subr.bf16.mxu0 0
    %1346 = vmatpush2.bf16.xpose.msra.mxu0 0
    %1347 = vmatprep.subr.bf16.mxu0 0
    %1348 = vmatpush2.bf16.xpose.msra.mxu0 0
    %1349 = vmatprep.subr.bf16.mxu0 0
    %1350 = vmatpush2.bf16.xpose.msra.mxu0 0
    %1351 = vmatprep.subr.bf16.mxu0 0
    %1352 = vmatpush2.bf16.xpose.msra.mxu0 0
    %1353 = vmatprep.subr.bf16.mxu0 0
    %1354 = vmatpush2.bf16.xpose.msra.mxu0 0
    %1355 = vmatprep.subr.bf16.mxu0 0
    %1356 = vmatpush2.bf16.xpose.msra.mxu0 0
    %1357 = vmatprep.subr.bf16.mxu0 0
    %1358 = vmatpush2.bf16.xpose.msra.mxu0 0
    %1359 = vmatprep.subr.bf16.mxu0 0
    %1360 = vmatpush2.bf16.xpose.msra.mxu0 0
    %1361 = vmatprep.mubr.bf16.mxu0 0
    %1362 = vmatmul.mubr.bf16.gmra.mxu0 %v1324
    %v1363 = vpop.f32.mrf.mxu0
    %v1364 = vadd.f32 %v165, %v1363
    %v1365 = vpop.f32.mrf.mxu0
    %v1366 = vpop.f32.mrf.mxu0
    %v1367 = vadd.f32 %v166, %v1366
    %v1368 = vpop.f32.mrf.mxu0
    %1369 = vdwg.mxu0
    %1371 = vrot.lane.b32.xlu0 %v1268, 96
    %v1372 = vpop.permute.xlu0 %1371
    %v1374 = vsel %vm147, %v1244, 0
    %v1377 = vsel %vm147, %v1372, 0
    %1379 = vmatprep.subr.bf16.mxu0 0
    %1380 = vmatpush1.bf16.xpose.msra.mxu0 0
    %1381 = vmatprep.subr.bf16.mxu0 0
    %1382 = vmatpush1.bf16.xpose.msra.mxu0 0
    %1383 = vmatprep.subr.bf16.mxu0 0
    %1384 = vmatpush1.bf16.xpose.msra.mxu0 0
    %1385 = vmatprep.subr.bf16.mxu0 0
    %1386 = vmatpush1.bf16.xpose.msra.mxu0 0
    %1387 = vmatprep.subr.bf16.mxu0 0
    %1388 = vmatpush1.bf16.xpose.msra.mxu0 0
    %1389 = vmatprep.subr.bf16.mxu0 0
    %1390 = vmatpush1.bf16.xpose.msra.mxu0 0
    %1391 = vmatprep.subr.bf16.mxu0 0
    %1392 = vmatpush1.bf16.xpose.msra.mxu0 0
    %1393 = vmatprep.subr.bf16.mxu0 0
    %1394 = vmatpush1.bf16.xpose.msra.mxu0 %v1377
    %1395 = vmatprep.subr.bf16.mxu0 0
    %1396 = vmatpush2.bf16.xpose.msra.mxu0 0
    %1397 = vmatprep.subr.bf16.mxu0 0
    %1398 = vmatpush2.bf16.xpose.msra.mxu0 0
    %1399 = vmatprep.subr.bf16.mxu0 0
    %1400 = vmatpush2.bf16.xpose.msra.mxu0 0
    %1401 = vmatprep.subr.bf16.mxu0 0
    %1402 = vmatpush2.bf16.xpose.msra.mxu0 0
    %1403 = vmatprep.subr.bf16.mxu0 0
    %1404 = vmatpush2.bf16.xpose.msra.mxu0 0
    %1405 = vmatprep.subr.bf16.mxu0 0
    %1406 = vmatpush2.bf16.xpose.msra.mxu0 0
    %1407 = vmatprep.subr.bf16.mxu0 0
    %1408 = vmatpush2.bf16.xpose.msra.mxu0 0
    %1409 = vmatprep.subr.bf16.mxu0 0
    %1410 = vmatpush2.bf16.xpose.msra.mxu0 0
    %1411 = vmatprep.mubr.bf16.mxu0 0
    %1412 = vmatmul.mubr.bf16.gmra.mxu0 %v1374
    %v1413 = vpop.f32.mrf.mxu0
    %v1414 = vadd.f32 %v165, %v1413
    %v1415 = vpop.f32.mrf.mxu0
    %v1416 = vpop.f32.mrf.mxu0
    %v1417 = vadd.f32 %v166, %v1416
    %v1418 = vpop.f32.mrf.mxu0
    %1419 = vdwg.mxu0
    %1421 = vrot.lane.b32.xlu0 %v1269, 96
    %v1422 = vpop.permute.xlu0 %1421
    %v1424 = vsel %vm147, %v1245, 0
    %v1427 = vsel %vm147, %v1422, 0
    %1429 = vmatprep.subr.bf16.mxu0 0
    %1430 = vmatpush1.bf16.xpose.msra.mxu0 0
    %1431 = vmatprep.subr.bf16.mxu0 0
    %1432 = vmatpush1.bf16.xpose.msra.mxu0 0
    %1433 = vmatprep.subr.bf16.mxu0 0
    %1434 = vmatpush1.bf16.xpose.msra.mxu0 0
    %1435 = vmatprep.subr.bf16.mxu0 0
    %1436 = vmatpush1.bf16.xpose.msra.mxu0 0
    %1437 = vmatprep.subr.bf16.mxu0 0
    %1438 = vmatpush1.bf16.xpose.msra.mxu0 0
    %1439 = vmatprep.subr.bf16.mxu0 0
    %1440 = vmatpush1.bf16.xpose.msra.mxu0 0
    %1441 = vmatprep.subr.bf16.mxu0 0
    %1442 = vmatpush1.bf16.xpose.msra.mxu0 0
    %1443 = vmatprep.subr.bf16.mxu0 0
    %1444 = vmatpush1.bf16.xpose.msra.mxu0 %v1427
    %1445 = vmatprep.subr.bf16.mxu0 0
    %1446 = vmatpush2.bf16.xpose.msra.mxu0 0
    %1447 = vmatprep.subr.bf16.mxu0 0
    %1448 = vmatpush2.bf16.xpose.msra.mxu0 0
    %1449 = vmatprep.subr.bf16.mxu0 0
    %1450 = vmatpush2.bf16.xpose.msra.mxu0 0
    %1451 = vmatprep.subr.bf16.mxu0 0
    %1452 = vmatpush2.bf16.xpose.msra.mxu0 0
    %1453 = vmatprep.subr.bf16.mxu0 0
    %1454 = vmatpush2.bf16.xpose.msra.mxu0 0
    %1455 = vmatprep.subr.bf16.mxu0 0
    %1456 = vmatpush2.bf16.xpose.msra.mxu0 0
    %1457 = vmatprep.subr.bf16.mxu0 0
    %1458 = vmatpush2.bf16.xpose.msra.mxu0 0
    %1459 = vmatprep.subr.bf16.mxu0 0
    %1460 = vmatpush2.bf16.xpose.msra.mxu0 0
    %1461 = vmatprep.mubr.bf16.mxu0 0
    %1462 = vmatmul.mubr.bf16.gmra.mxu0 %v1424
    %v1463 = vpop.f32.mrf.mxu0
    %v1464 = vadd.f32 %v165, %v1463
    %v1465 = vpop.f32.mrf.mxu0
    %v1466 = vpop.f32.mrf.mxu0
    %v1467 = vadd.f32 %v166, %v1466
    %v1468 = vpop.f32.mrf.mxu0
    %1469 = vdwg.mxu0
    %v1470 = vsel %vm486, %v1314, -inf
    %1471 = vmax.xlane.f32.xlu0 %v1470
    %v1472 = vpop.xlane.xlu0 %1471
    %v1473 = vsel %vm486, %v1317, -inf
    %1474 = vmax.xlane.f32.xlu0 %v1473
    %v1475 = vpop.xlane.xlu0 %1474
    %v1476 = vsel %vm486, %v1364, -inf
    %1477 = vmax.xlane.f32.xlu0 %v1476
    %v1478 = vpop.xlane.xlu0 %1477
    %v1479 = vsel %vm486, %v1367, -inf
    %1480 = vmax.xlane.f32.xlu0 %v1479
    %v1481 = vpop.xlane.xlu0 %1480
    %v1482 = vsel %vm486, %v1414, -inf
    %1483 = vmax.xlane.f32.xlu0 %v1482
    %v1484 = vpop.xlane.xlu0 %1483
    %v1485 = vsel %vm486, %v1417, -inf
    %1486 = vmax.xlane.f32.xlu0 %v1485
    %v1487 = vpop.xlane.xlu0 %1486
    %v1488 = vsel %vm486, %v1464, -inf
    %1489 = vmax.xlane.f32.xlu0 %v1488
    %v1490 = vpop.xlane.xlu0 %1489
    %v1491 = vsel %vm486, %v1467, -inf
    %1492 = vmax.xlane.f32.xlu0 %v1491
    %v1493 = vpop.xlane.xlu0 %1492
    %v1494 = vsub.f32 %v1314, %v1472
    %v1495 = vsub.f32 %v1317, %v1475
    %v1496 = vsub.f32 %v1364, %v1478
    %v1497 = vsub.f32 %v1367, %v1481
    %v1498 = vsub.f32 %v1414, %v1484
    %v1499 = vsub.f32 %v1417, %v1487
    %v1500 = vsub.f32 %v1464, %v1490
    %v1501 = vsub.f32 %v1467, %v1493
    %v1502 = vmul.f32 %v1494, 1.442695
    %v1503 = vpow.pop %v1502
    %v1504 = vmul.f32 %v1495, 1.442695
    %v1505 = vpow.pop %v1504
    %v1506 = vmul.f32 %v1496, 1.442695
    %v1507 = vpow.pop %v1506
    %v1508 = vmul.f32 %v1497, 1.442695
    %v1509 = vpow.pop %v1508
    %v1510 = vmul.f32 %v1498, 1.442695
    %v1511 = vpow.pop %v1510
    %v1512 = vmul.f32 %v1499, 1.442695
    %v1513 = vpow.pop %v1512
    %v1514 = vmul.f32 %v1500, 1.442695
    %v1515 = vpow.pop %v1514
    %v1516 = vmul.f32 %v1501, 1.442695
    %v1517 = vpow.pop %v1516
    %v1518 = vsel %vm486, %v1503, 0.0
    %1519 = vadd.xlane.f32.xlu0 %v1518
    %v1520 = vpop.xlane.xlu0 %1519
    %v1521 = vsel %vm486, %v1505, 0.0
    %1522 = vadd.xlane.f32.xlu0 %v1521
    %v1523 = vpop.xlane.xlu0 %1522
    %v1524 = vsel %vm486, %v1507, 0.0
    %1525 = vadd.xlane.f32.xlu0 %v1524
    %v1526 = vpop.xlane.xlu0 %1525
    %v1527 = vsel %vm486, %v1509, 0.0
    %1528 = vadd.xlane.f32.xlu0 %v1527
    %v1529 = vpop.xlane.xlu0 %1528
    %v1530 = vsel %vm486, %v1511, 0.0
    %1531 = vadd.xlane.f32.xlu0 %v1530
    %v1532 = vpop.xlane.xlu0 %1531
    %v1533 = vsel %vm486, %v1513, 0.0
    %1534 = vadd.xlane.f32.xlu0 %v1533
    %v1535 = vpop.xlane.xlu0 %1534
    %v1536 = vsel %vm486, %v1515, 0.0
    %1537 = vadd.xlane.f32.xlu0 %v1536
    %v1538 = vpop.xlane.xlu0 %1537
    %v1539 = vsel %vm486, %v1517, 0.0
    %1540 = vadd.xlane.f32.xlu0 %v1539
    %v1541 = vpop.xlane.xlu0 %1540
    %v1542 = vrcp.pop %v1520
    %v1543 = vmul.f32 %v1503, %v1542
    %v1544 = vrcp.pop %v1523
    %v1545 = vmul.f32 %v1505, %v1544
    %v1546 = vrcp.pop %v1526
    %v1547 = vmul.f32 %v1507, %v1546
    %v1548 = vrcp.pop %v1529
    %v1549 = vmul.f32 %v1509, %v1548
    %v1550 = vrcp.pop %v1532
    %v1551 = vmul.f32 %v1511, %v1550
    %v1552 = vrcp.pop %v1535
    %v1553 = vmul.f32 %v1513, %v1552
    %v1554 = vrcp.pop %v1538
    %v1555 = vmul.f32 %v1515, %v1554
    %v1556 = vrcp.pop %v1541
    %v1557 = vmul.f32 %v1517, %v1556
    %v1558 = vpack.c.bf16 %v1545, %v1543
    %v1559 = vpack.c.bf16 %v1549, %v1547
    %v1560 = vpack.c.bf16 %v1553, %v1551
    %v1561 = vpack.c.bf16 %v1557, %v1555
    %1562 = vrot.lane.b32.xlu0 %v1266, 64
    %v1563 = vpop.permute.xlu0 %1562
    %v1566 = vsel %vm486, %v1558, 0
    %1568 = vmatprep.subr.bf16.mxu0 0
    %1569 = vmatpush1.bf16.msra.mxu0 0
    %1570 = vmatprep.subr.bf16.mxu0 0
    %1571 = vmatpush1.bf16.msra.mxu0 0
    %1572 = vmatprep.subr.bf16.mxu0 0
    %1573 = vmatpush1.bf16.msra.mxu0 0
    %1574 = vmatprep.subr.bf16.mxu0 0
    %1575 = vmatpush1.bf16.msra.mxu0 0
    %1576 = vmatprep.subr.bf16.mxu0 0
    %1577 = vmatpush1.bf16.msra.mxu0 0
    %1578 = vmatprep.subr.bf16.mxu0 0
    %1579 = vmatpush1.bf16.msra.mxu0 0
    %1580 = vmatprep.subr.bf16.mxu0 0
    %1581 = vmatpush1.bf16.msra.mxu0 0
    %1582 = vmatprep.subr.bf16.mxu0 0
    %1583 = vmatpush1.bf16.msra.mxu0 %v1563
    %1584 = vmatprep.subr.bf16.mxu0 0
    %1585 = vmatpush2.bf16.msra.mxu0 0
    %1586 = vmatprep.subr.bf16.mxu0 0
    %1587 = vmatpush2.bf16.msra.mxu0 0
    %1588 = vmatprep.subr.bf16.mxu0 0
    %1589 = vmatpush2.bf16.msra.mxu0 0
    %1590 = vmatprep.subr.bf16.mxu0 0
    %1591 = vmatpush2.bf16.msra.mxu0 0
    %1592 = vmatprep.subr.bf16.mxu0 0
    %1593 = vmatpush2.bf16.msra.mxu0 0
    %1594 = vmatprep.subr.bf16.mxu0 0
    %1595 = vmatpush2.bf16.msra.mxu0 0
    %1596 = vmatprep.subr.bf16.mxu0 0
    %1597 = vmatpush2.bf16.msra.mxu0 0
    %1598 = vmatprep.subr.bf16.mxu0 0
    %1599 = vmatpush2.bf16.msra.mxu0 0
    %1600 = vmatprep.mubr.bf16.mxu0 0
    %1601 = vmatmul.mubr.bf16.gmra.mxu0 %v1566
    %v1602 = vpop.f32.mrf.mxu0
    %v1603 = vadd.f32 0.0, %v1602
    %v1604 = vpop.f32.mrf.mxu0
    %v1605 = vpop.f32.mrf.mxu0
    %v1606 = vadd.f32 0.0, %v1605
    %v1607 = vpop.f32.mrf.mxu0
    %1608 = vdwg.mxu0
    %1609 = vrot.lane.b32.xlu0 %v1267, 64
    %v1610 = vpop.permute.xlu0 %1609
    %v1613 = vsel %vm486, %v1559, 0
    %1615 = vmatprep.subr.bf16.mxu0 0
    %1616 = vmatpush1.bf16.msra.mxu0 0
    %1617 = vmatprep.subr.bf16.mxu0 0
    %1618 = vmatpush1.bf16.msra.mxu0 0
    %1619 = vmatprep.subr.bf16.mxu0 0
    %1620 = vmatpush1.bf16.msra.mxu0 0
    %1621 = vmatprep.subr.bf16.mxu0 0
    %1622 = vmatpush1.bf16.msra.mxu0 0
    %1623 = vmatprep.subr.bf16.mxu0 0
    %1624 = vmatpush1.bf16.msra.mxu0 0
    %1625 = vmatprep.subr.bf16.mxu0 0
    %1626 = vmatpush1.bf16.msra.mxu0 0
    %1627 = vmatprep.subr.bf16.mxu0 0
    %1628 = vmatpush1.bf16.msra.mxu0 0
    %1629 = vmatprep.subr.bf16.mxu0 0
    %1630 = vmatpush1.bf16.msra.mxu0 %v1610
    %1631 = vmatprep.subr.bf16.mxu0 0
    %1632 = vmatpush2.bf16.msra.mxu0 0
    %1633 = vmatprep.subr.bf16.mxu0 0
    %1634 = vmatpush2.bf16.msra.mxu0 0
    %1635 = vmatprep.subr.bf16.mxu0 0
    %1636 = vmatpush2.bf16.msra.mxu0 0
    %1637 = vmatprep.subr.bf16.mxu0 0
    %1638 = vmatpush2.bf16.msra.mxu0 0
    %1639 = vmatprep.subr.bf16.mxu0 0
    %1640 = vmatpush2.bf16.msra.mxu0 0
    %1641 = vmatprep.subr.bf16.mxu0 0
    %1642 = vmatpush2.bf16.msra.mxu0 0
    %1643 = vmatprep.subr.bf16.mxu0 0
    %1644 = vmatpush2.bf16.msra.mxu0 0
    %1645 = vmatprep.subr.bf16.mxu0 0
    %1646 = vmatpush2.bf16.msra.mxu0 0
    %1647 = vmatprep.mubr.bf16.mxu0 0
    %1648 = vmatmul.mubr.bf16.gmra.mxu0 %v1613
    %v1649 = vpop.f32.mrf.mxu0
    %v1650 = vadd.f32 0.0, %v1649
    %v1651 = vpop.f32.mrf.mxu0
    %v1652 = vpop.f32.mrf.mxu0
    %v1653 = vadd.f32 0.0, %v1652
    %v1654 = vpop.f32.mrf.mxu0
    %1655 = vdwg.mxu0
    %1656 = vrot.lane.b32.xlu0 %v1268, 64
    %v1657 = vpop.permute.xlu0 %1656
    %v1660 = vsel %vm486, %v1560, 0
    %1662 = vmatprep.subr.bf16.mxu0 0
    %1663 = vmatpush1.bf16.msra.mxu0 0
    %1664 = vmatprep.subr.bf16.mxu0 0
    %1665 = vmatpush1.bf16.msra.mxu0 0
    %1666 = vmatprep.subr.bf16.mxu0 0
    %1667 = vmatpush1.bf16.msra.mxu0 0
    %1668 = vmatprep.subr.bf16.mxu0 0
    %1669 = vmatpush1.bf16.msra.mxu0 0
    %1670 = vmatprep.subr.bf16.mxu0 0
    %1671 = vmatpush1.bf16.msra.mxu0 0
    %1672 = vmatprep.subr.bf16.mxu0 0
    %1673 = vmatpush1.bf16.msra.mxu0 0
    %1674 = vmatprep.subr.bf16.mxu0 0
    %1675 = vmatpush1.bf16.msra.mxu0 0
    %1676 = vmatprep.subr.bf16.mxu0 0
    %1677 = vmatpush1.bf16.msra.mxu0 %v1657
    %1678 = vmatprep.subr.bf16.mxu0 0
    %1679 = vmatpush2.bf16.msra.mxu0 0
    %1680 = vmatprep.subr.bf16.mxu0 0
    %1681 = vmatpush2.bf16.msra.mxu0 0
    %1682 = vmatprep.subr.bf16.mxu0 0
    %1683 = vmatpush2.bf16.msra.mxu0 0
    %1684 = vmatprep.subr.bf16.mxu0 0
    %1685 = vmatpush2.bf16.msra.mxu0 0
    %1686 = vmatprep.subr.bf16.mxu0 0
    %1687 = vmatpush2.bf16.msra.mxu0 0
    %1688 = vmatprep.subr.bf16.mxu0 0
    %1689 = vmatpush2.bf16.msra.mxu0 0
    %1690 = vmatprep.subr.bf16.mxu0 0
    %1691 = vmatpush2.bf16.msra.mxu0 0
    %1692 = vmatprep.subr.bf16.mxu0 0
    %1693 = vmatpush2.bf16.msra.mxu0 0
    %1694 = vmatprep.mubr.bf16.mxu0 0
    %1695 = vmatmul.mubr.bf16.gmra.mxu0 %v1660
    %v1696 = vpop.f32.mrf.mxu0
    %v1697 = vadd.f32 0.0, %v1696
    %v1698 = vpop.f32.mrf.mxu0
    %v1699 = vpop.f32.mrf.mxu0
    %v1700 = vadd.f32 0.0, %v1699
    %v1701 = vpop.f32.mrf.mxu0
    %1702 = vdwg.mxu0
    %1703 = vrot.lane.b32.xlu0 %v1269, 64
    %v1704 = vpop.permute.xlu0 %1703
    %v1707 = vsel %vm486, %v1561, 0
    %1709 = vmatprep.subr.bf16.mxu0 0
    %1710 = vmatpush1.bf16.msra.mxu0 0
    %1711 = vmatprep.subr.bf16.mxu0 0
    %1712 = vmatpush1.bf16.msra.mxu0 0
    %1713 = vmatprep.subr.bf16.mxu0 0
    %1714 = vmatpush1.bf16.msra.mxu0 0
    %1715 = vmatprep.subr.bf16.mxu0 0
    %1716 = vmatpush1.bf16.msra.mxu0 0
    %1717 = vmatprep.subr.bf16.mxu0 0
    %1718 = vmatpush1.bf16.msra.mxu0 0
    %1719 = vmatprep.subr.bf16.mxu0 0
    %1720 = vmatpush1.bf16.msra.mxu0 0
    %1721 = vmatprep.subr.bf16.mxu0 0
    %1722 = vmatpush1.bf16.msra.mxu0 0
    %1723 = vmatprep.subr.bf16.mxu0 0
    %1724 = vmatpush1.bf16.msra.mxu0 %v1704
    %1725 = vmatprep.subr.bf16.mxu0 0
    %1726 = vmatpush2.bf16.msra.mxu0 0
    %1727 = vmatprep.subr.bf16.mxu0 0
    %1728 = vmatpush2.bf16.msra.mxu0 0
    %1729 = vmatprep.subr.bf16.mxu0 0
    %1730 = vmatpush2.bf16.msra.mxu0 0
    %1731 = vmatprep.subr.bf16.mxu0 0
    %1732 = vmatpush2.bf16.msra.mxu0 0
    %1733 = vmatprep.subr.bf16.mxu0 0
    %1734 = vmatpush2.bf16.msra.mxu0 0
    %1735 = vmatprep.subr.bf16.mxu0 0
    %1736 = vmatpush2.bf16.msra.mxu0 0
    %1737 = vmatprep.subr.bf16.mxu0 0
    %1738 = vmatpush2.bf16.msra.mxu0 0
    %1739 = vmatprep.subr.bf16.mxu0 0
    %1740 = vmatpush2.bf16.msra.mxu0 0
    %1741 = vmatprep.mubr.bf16.mxu0 0
    %1742 = vmatmul.mubr.bf16.gmra.mxu0 %v1707
    %v1743 = vpop.f32.mrf.mxu0
    %v1744 = vadd.f32 0.0, %v1743
    %v1745 = vpop.f32.mrf.mxu0
    %v1746 = vpop.f32.mrf.mxu0
    %v1747 = vadd.f32 0.0, %v1746
    %v1748 = vpop.f32.mrf.mxu0
    %1749 = vdwg.mxu0
    %1752 = vrot.lane.b32.xlu0 %v1650, 8
    %v1753 = vpop.permute.xlu0 %1752
    %1754 = vrot.lane.b32.xlu0 %v1653, 8
    %v1755 = vpop.permute.xlu0 %1754
    %1760 = vrot.lane.b32.xlu0 %v1697, 16
    %v1761 = vpop.permute.xlu0 %1760
    %1762 = vrot.lane.b32.xlu0 %v1700, 16
    %v1763 = vpop.permute.xlu0 %1762
    %1768 = vrot.lane.b32.xlu0 %v1744, 24
    %v1769 = vpop.permute.xlu0 %1768
    %1770 = vrot.lane.b32.xlu0 %v1747, 24
    %v1771 = vpop.permute.xlu0 %1770
    %v1774 = vsel %vm147, %v1603, %v1753
    %v1775 = vsel %vm147, %v1606, %v1755
    %v1776 = vsel %vm486, %v1774, %v1761
    %v1777 = vsel %vm486, %v1775, %v1763
    %v1778 = vsel %vm795, %v1776, %v1769
    %v1779 = vsel %vm795, %v1777, %v1771
    %v1780 = vpack.c.bf16 %v1779, %v1778
    %s1781 = scalar_lea.vmem %s5, 16
    %v1782 = vld [vmem:[%s1781] sm:$0xf]
    %v1783 = vld [vmem:[%s1781 + $0x4] sm:$0xf]
    %v1784 = vld [vmem:[%s1781 + $0x8] sm:$0xf]
    %v1785 = vld [vmem:[%s1781 + $0xc] sm:$0xf]
    %s1786 = scalar_lea.vmem %s6, 1
    %v1787 = vld [vmem:[%s1786] sm:$0x1]
    %v1789 = vlaneseq
    %v1790 = vshrl.u32 %v1789, 7
    %v1791 = vsub.s32 0, %v1790
    %v1792 = vrot.slane %v1787, %v1791
    %v1798 = vunpack.c.l.b16 %v1782
    %v1799 = vunpack.c.l.b16 %v1783
    %v1800 = vunpack.c.l.b16 %v1784
    %v1801 = vunpack.c.l.b16 %v1785
    %v1802 = vpack.c.b16 %v1799, %v1798
    %v1803 = vpack.c.b16 %v1801, %v1800
    %v1807 = vsel %vm191, %v1780, 0
    %1809 = vmatprep.subr.bf16.mxu0 0
    %1810 = vmatpush1.bf16.msra.mxu0 0
    %1811 = vmatprep.subr.bf16.mxu0 0
    %1812 = vmatpush1.bf16.msra.mxu0 0
    %1813 = vmatprep.subr.bf16.mxu0 0
    %1814 = vmatpush1.bf16.msra.mxu0 0
    %1815 = vmatprep.subr.bf16.mxu0 0
    %1816 = vmatpush1.bf16.msra.mxu0 0
    %1817 = vmatprep.subr.bf16.mxu0 0
    %1818 = vmatpush1.bf16.msra.mxu0 0
    %1819 = vmatprep.subr.bf16.mxu0 0
    %1820 = vmatpush1.bf16.msra.mxu0 0
    %1821 = vmatprep.subr.bf16.mxu0 0
    %1822 = vmatpush1.bf16.msra.mxu0 %v1803
    %1823 = vmatprep.subr.bf16.mxu0 0
    %1824 = vmatpush1.bf16.msra.mxu0 %v1802
    %1825 = vmatprep.subr.bf16.mxu0 0
    %1826 = vmatpush2.bf16.msra.mxu0 0
    %1827 = vmatprep.subr.bf16.mxu0 0
    %1828 = vmatpush2.bf16.msra.mxu0 0
    %1829 = vmatprep.subr.bf16.mxu0 0
    %1830 = vmatpush2.bf16.msra.mxu0 0
    %1831 = vmatprep.subr.bf16.mxu0 0
    %1832 = vmatpush2.bf16.msra.mxu0 0
    %1833 = vmatprep.subr.bf16.mxu0 0
    %1834 = vmatpush2.bf16.msra.mxu0 0
    %1835 = vmatprep.subr.bf16.mxu0 0
    %1836 = vmatpush2.bf16.msra.mxu0 0
    %1837 = vmatprep.subr.bf16.mxu0 0
    %1838 = vmatpush2.bf16.msra.mxu0 0
    %1839 = vmatprep.subr.bf16.mxu0 0
    %1840 = vmatpush2.bf16.msra.mxu0 0
    %1841 = vmatprep.mubr.bf16.mxu0 0
    %1842 = vmatmul.mubr.bf16.gmra.mxu0 %v1807
    %v1843 = vpop.f32.mrf.mxu0
    %v1844 = vadd.f32 %v1792, %v1843
    %v1845 = vpop.f32.mrf.mxu0
    %v1846 = vpop.f32.mrf.mxu0
    %v1847 = vadd.f32 %v1792, %v1846
    %v1848 = vpop.f32.mrf.mxu0
    %1849 = vdwg.mxu0
    %v1850 = vadd.f32 %v1148, %v1844
    %v1851 = vadd.f32 %v1149, %v1847
    %s1852 = scalar_lea.vmem %s7, 1
    %v1853 = vld [vmem:[%s1852] sm:$0x1]
    %s1854 = scalar_lea.vmem %s8, 1
    %v1855 = vld [vmem:[%s1854] sm:$0x1]
    %v1856 = vsel %vm191, %v1850, 0.0
    %1857 = vadd.xlane.f32.xlu0 %v1856
    %v1858 = vpop.xlane.xlu0 %1857
    %v1859 = vsel %vm191, %v1851, 0.0
    %1860 = vadd.xlane.f32.xlu0 %v1859
    %v1861 = vpop.xlane.xlu0 %1860
    %v1862 = vmul.f32 %v1858, %v876
    %v1863 = vmul.f32 %v1861, %v876
    %v1864 = vsub.f32 %v1850, %v1862
    %v1865 = vsub.f32 %v1851, %v1863
    %v1866 = vmul.f32 %v1864, %v1864
    %v1867 = vmul.f32 %v1865, %v1865
    %v1868 = vsel %vm191, %v1866, 0.0
    %1869 = vadd.xlane.f32.xlu0 %v1868
    %v1870 = vpop.xlane.xlu0 %1869
    %v1871 = vsel %vm191, %v1867, 0.0
    %1872 = vadd.xlane.f32.xlu0 %v1871
    %v1873 = vpop.xlane.xlu0 %1872
    %v1874 = vmul.f32 %v1870, %v876
    %v1875 = vmul.f32 %v1873, %v876
    %v1876 = vadd.f32 %v1874, 1e-05
    %v1877 = vadd.f32 %v1875, 1e-05
    %v1878 = vrsqrt.pop %v1876
    %v1879 = vrsqrt.pop %v1877
    %v1880 = vmul.f32 %v1864, %v1878
    %v1881 = vmul.f32 %v1865, %v1879
    %v1883 = vlaneseq
    %v1884 = vshrl.u32 %v1883, 7
    %v1885 = vsub.s32 0, %v1884
    %v1886 = vrot.slane %v1853, %v1885
    %v1888 = vmul.f32 %v1880, %v1886
    %v1889 = vmul.f32 %v1881, %v1886
    %v1891 = vlaneseq
    %v1892 = vshrl.u32 %v1891, 7
    %v1893 = vsub.s32 0, %v1892
    %v1894 = vrot.slane %v1855, %v1893
    %v1896 = vadd.f32 %v1888, %v1894
    %v1897 = vadd.f32 %v1889, %v1894
    %v1898 = vpack.c.bf16 %v1897, %v1896
    %s1899 = scalar_lea.vmem %s9, 16
    %v1900 = vld [vmem:[%s1899] sm:$0xf]
    %v1901 = vld [vmem:[%s1899 + $0x4] sm:$0xf]
    %v1902 = vld [vmem:[%s1899 + $0x8] sm:$0xf]
    %v1903 = vld [vmem:[%s1899 + $0xc] sm:$0xf]
    %s1904 = scalar_lea.vmem %s10, 1
    %v1905 = vld [vmem:[%s1904] sm:$0x1]
    %v1907 = vlaneseq
    %v1908 = vshrl.u32 %v1907, 7
    %v1909 = vsub.s32 0, %v1908
    %v1910 = vrot.slane %v1905, %v1909
    %v1916 = vunpack.c.l.b16 %v1900
    %v1917 = vunpack.c.l.b16 %v1901
    %v1918 = vunpack.c.l.b16 %v1902
    %v1919 = vunpack.c.l.b16 %v1903
    %v1920 = vpack.c.b16 %v1917, %v1916
    %v1921 = vpack.c.b16 %v1919, %v1918
    %v1925 = vsel %vm191, %v1898, 0
    %1927 = vmatprep.subr.bf16.mxu0 0
    %1928 = vmatpush1.bf16.msra.mxu0 0
    %1929 = vmatprep.subr.bf16.mxu0 0
    %1930 = vmatpush1.bf16.msra.mxu0 0
    %1931 = vmatprep.subr.bf16.mxu0 0
    %1932 = vmatpush1.bf16.msra.mxu0 0
    %1933 = vmatprep.subr.bf16.mxu0 0
    %1934 = vmatpush1.bf16.msra.mxu0 0
    %1935 = vmatprep.subr.bf16.mxu0 0
    %1936 = vmatpush1.bf16.msra.mxu0 0
    %1937 = vmatprep.subr.bf16.mxu0 0
    %1938 = vmatpush1.bf16.msra.mxu0 0
    %1939 = vmatprep.subr.bf16.mxu0 0
    %1940 = vmatpush1.bf16.msra.mxu0 %v1921
    %1941 = vmatprep.subr.bf16.mxu0 0
    %1942 = vmatpush1.bf16.msra.mxu0 %v1920
    %1943 = vmatprep.subr.bf16.mxu0 0
    %1944 = vmatpush2.bf16.msra.mxu0 0
    %1945 = vmatprep.subr.bf16.mxu0 0
    %1946 = vmatpush2.bf16.msra.mxu0 0
    %1947 = vmatprep.subr.bf16.mxu0 0
    %1948 = vmatpush2.bf16.msra.mxu0 0
    %1949 = vmatprep.subr.bf16.mxu0 0
    %1950 = vmatpush2.bf16.msra.mxu0 0
    %1951 = vmatprep.subr.bf16.mxu0 0
    %1952 = vmatpush2.bf16.msra.mxu0 0
    %1953 = vmatprep.subr.bf16.mxu0 0
    %1954 = vmatpush2.bf16.msra.mxu0 0
    %1955 = vmatprep.subr.bf16.mxu0 0
    %1956 = vmatpush2.bf16.msra.mxu0 0
    %1957 = vmatprep.subr.bf16.mxu0 0
    %1958 = vmatpush2.bf16.msra.mxu0 0
    %1959 = vmatprep.mubr.bf16.mxu0 0
    %1960 = vmatmul.mubr.bf16.gmra.mxu0 %v1925
    %v1961 = vpop.f32.mrf.mxu0
    %v1962 = vadd.f32 %v1910, %v1961
    %v1963 = vpop.f32.mrf.mxu0
    %v1964 = vpop.f32.mrf.mxu0
    %v1965 = vadd.f32 %v1910, %v1964
    %v1966 = vpop.f32.mrf.mxu0
    %1967 = vdwg.mxu0
    %v1968 = vmul.f32 %v1962, 0.5
    %v1969 = vmul.f32 %v1965, 0.5
    %v1970 = vmul.f32 %v1962, 0.70710677
    %v1971 = vmul.f32 %v1965, 0.70710677
    %v1972 = verf.f32.pop %v1970
    %v1973 = verf.f32.pop %v1971
    %v1974 = vadd.f32 %v1972, 1.0
    %v1975 = vadd.f32 %v1973, 1.0
    %v1976 = vmul.f32 %v1968, %v1974
    %v1977 = vmul.f32 %v1969, %v1975
    %v1978 = vpack.c.bf16 %v1977, %v1976
    %s1979 = scalar_lea.vmem %s11, 64
    %v1980 = vld [vmem:[%s1979] sm:$0xf]
    %v1981 = vld [vmem:[%s1979 + $0x4] sm:$0xf]
    %v1982 = vld [vmem:[%s1979 + $0x8] sm:$0xf]
    %v1983 = vld [vmem:[%s1979 + $0xc] sm:$0xf]
    %v1984 = vld [vmem:[%s1979 + $0x10] sm:$0xf]
    %v1985 = vld [vmem:[%s1979 + $0x14] sm:$0xf]
    %v1986 = vld [vmem:[%s1979 + $0x18] sm:$0xf]
    %v1987 = vld [vmem:[%s1979 + $0x1c] sm:$0xf]
    %v1988 = vld [vmem:[%s1979 + $0x20] sm:$0xf]
    %v1989 = vld [vmem:[%s1979 + $0x24] sm:$0xf]
    %v1990 = vld [vmem:[%s1979 + $0x28] sm:$0xf]
    %v1991 = vld [vmem:[%s1979 + $0x2c] sm:$0xf]
    %v1992 = vld [vmem:[%s1979 + $0x30] sm:$0xf]
    %v1993 = vld [vmem:[%s1979 + $0x34] sm:$0xf]
    %v1994 = vld [vmem:[%s1979 + $0x38] sm:$0xf]
    %v1995 = vld [vmem:[%s1979 + $0x3c] sm:$0xf]
    %s1996 = scalar_lea.vmem %s12, 1
    %v1997 = vld [vmem:[%s1996] sm:$0x1]
    %v1999 = vlaneseq
    %v2000 = vshrl.u32 %v1999, 7
    %v2001 = vsub.s32 0, %v2000
    %v2002 = vrot.slane %v1997, %v2001
    %v2020 = vunpack.c.l.b16 %v1980
    %v2021 = vunpack.c.l.b16 %v1981
    %v2022 = vunpack.c.l.b16 %v1982
    %v2023 = vunpack.c.l.b16 %v1983
    %v2024 = vunpack.c.l.b16 %v1984
    %v2025 = vunpack.c.l.b16 %v1985
    %v2026 = vunpack.c.l.b16 %v1986
    %v2027 = vunpack.c.l.b16 %v1987
    %v2028 = vunpack.c.l.b16 %v1988
    %v2029 = vunpack.c.l.b16 %v1989
    %v2030 = vunpack.c.l.b16 %v1990
    %v2031 = vunpack.c.l.b16 %v1991
    %v2032 = vunpack.c.l.b16 %v1992
    %v2033 = vunpack.c.l.b16 %v1993
    %v2034 = vunpack.c.l.b16 %v1994
    %v2035 = vunpack.c.l.b16 %v1995
    %v2036 = vpack.c.b16 %v2021, %v2020
    %v2037 = vpack.c.b16 %v2023, %v2022
    %v2038 = vpack.c.b16 %v2025, %v2024
    %v2039 = vpack.c.b16 %v2027, %v2026
    %v2040 = vpack.c.b16 %v2029, %v2028
    %v2041 = vpack.c.b16 %v2031, %v2030
    %v2042 = vpack.c.b16 %v2033, %v2032
    %v2043 = vpack.c.b16 %v2035, %v2034
    %2052 = vmatprep.subr.bf16.mxu0 0
    %2053 = vmatpush1.bf16.msra.mxu0 %v2043
    %2054 = vmatprep.subr.bf16.mxu0 0
    %2055 = vmatpush1.bf16.msra.mxu0 %v2042
    %2056 = vmatprep.subr.bf16.mxu0 0
    %2057 = vmatpush1.bf16.msra.mxu0 %v2041
    %2058 = vmatprep.subr.bf16.mxu0 0
    %2059 = vmatpush1.bf16.msra.mxu0 %v2040
    %2060 = vmatprep.subr.bf16.mxu0 0
    %2061 = vmatpush1.bf16.msra.mxu0 %v2039
    %2062 = vmatprep.subr.bf16.mxu0 0
    %2063 = vmatpush1.bf16.msra.mxu0 %v2038
    %2064 = vmatprep.subr.bf16.mxu0 0
    %2065 = vmatpush1.bf16.msra.mxu0 %v2037
    %2066 = vmatprep.subr.bf16.mxu0 0
    %2067 = vmatpush1.bf16.msra.mxu0 %v2036
    %2068 = vmatprep.subr.bf16.mxu0 0
    %2069 = vmatpush2.bf16.msra.mxu0 0
    %2070 = vmatprep.subr.bf16.mxu0 0
    %2071 = vmatpush2.bf16.msra.mxu0 0
    %2072 = vmatprep.subr.bf16.mxu0 0
    %2073 = vmatpush2.bf16.msra.mxu0 0
    %2074 = vmatprep.subr.bf16.mxu0 0
    %2075 = vmatpush2.bf16.msra.mxu0 0
    %2076 = vmatprep.subr.bf16.mxu0 0
    %2077 = vmatpush2.bf16.msra.mxu0 0
    %2078 = vmatprep.subr.bf16.mxu0 0
    %2079 = vmatpush2.bf16.msra.mxu0 0
    %2080 = vmatprep.subr.bf16.mxu0 0
    %2081 = vmatpush2.bf16.msra.mxu0 0
    %2082 = vmatprep.subr.bf16.mxu0 0
    %2083 = vmatpush2.bf16.msra.mxu0 0
    %2084 = vmatprep.mubr.bf16.mxu0 0
    %2085 = vmatmul.mubr.bf16.gmra.mxu0 %v1978
    %v2086 = vpop.f32.mrf.mxu0
    %v2087 = vadd.f32 %v2002, %v2086
    %v2088 = vpop.f32.mrf.mxu0
    %v2089 = vpop.f32.mrf.mxu0
    %v2090 = vadd.f32 %v2002, %v2089
    %v2091 = vpop.f32.mrf.mxu0
    %2092 = vdwg.mxu0
    %v2093 = vadd.f32 %v1896, %v2087
    %v2094 = vadd.f32 %v1897, %v2090
    %s2095 = scalar_lea.vmem %s13, 1
    %v2096 = vld [vmem:[%s2095] sm:$0x1]
    %s2097 = scalar_lea.vmem %s14, 1
    %v2098 = vld [vmem:[%s2097] sm:$0x1]
    %v2099 = vsel %vm191, %v2093, 0.0
    %2100 = vadd.xlane.f32.xlu0 %v2099
    %v2101 = vpop.xlane.xlu0 %2100
    %v2102 = vsel %vm191, %v2094, 0.0
    %2103 = vadd.xlane.f32.xlu0 %v2102
    %v2104 = vpop.xlane.xlu0 %2103
    %v2105 = vmul.f32 %v2101, %v876
    %v2106 = vmul.f32 %v2104, %v876
    %v2107 = vsub.f32 %v2093, %v2105
    %v2108 = vsub.f32 %v2094, %v2106
    %v2109 = vmul.f32 %v2107, %v2107
    %v2110 = vmul.f32 %v2108, %v2108
    %v2111 = vsel %vm191, %v2109, 0.0
    %2112 = vadd.xlane.f32.xlu0 %v2111
    %v2113 = vpop.xlane.xlu0 %2112
    %v2114 = vsel %vm191, %v2110, 0.0
    %2115 = vadd.xlane.f32.xlu0 %v2114
    %v2116 = vpop.xlane.xlu0 %2115
    %v2117 = vmul.f32 %v2113, %v876
    %v2118 = vmul.f32 %v2116, %v876
    %v2119 = vadd.f32 %v2117, 1e-05
    %v2120 = vadd.f32 %v2118, 1e-05
    %v2121 = vrsqrt.pop %v2119
    %v2122 = vrsqrt.pop %v2120
    %v2123 = vmul.f32 %v2107, %v2121
    %v2124 = vmul.f32 %v2108, %v2122
    %v2126 = vlaneseq
    %v2127 = vshrl.u32 %v2126, 7
    %v2128 = vsub.s32 0, %v2127
    %v2129 = vrot.slane %v2096, %v2128
    %v2131 = vmul.f32 %v2123, %v2129
    %v2132 = vmul.f32 %v2124, %v2129
    %v2134 = vlaneseq
    %v2135 = vshrl.u32 %v2134, 7
    %v2136 = vsub.s32 0, %v2135
    %v2137 = vrot.slane %v2098, %v2136
    %v2139 = vadd.f32 %v2131, %v2137
    %v2140 = vadd.f32 %v2132, %v2137
    %v2141 = vld [vmem:[%s15] sm:$0x1]
    %v2142 = vld [vmem:[%s16] sm:$0x1]
    %v2145 = vrot.slane %v2140, 7
    %vm2146 = vcmask 1041409
    %v2147 = vsel %vm2146, %v2145, %v2139
    %vm2149 = vcmask 254976
    %v2150 = vsel %vm2149, %v2147, 0.0
    %2151 = vadd.xlane.f32.xlu0 %v2150
    %v2152 = vpop.xlane.xlu0 %2151
    %v2153 = vmul.f32 %v2152, %v876
    %v2155 = vrot.slane %v2153, 1
    %v2158 = vsub.f32 %v2139, %v2153
    %v2159 = vsub.f32 %v2140, %v2155
    %v2160 = vmul.f32 %v2158, %v2158
    %v2161 = vmul.f32 %v2159, %v2159
    %v2164 = vrot.slane %v2161, 7
    %v2165 = vsel %vm2146, %v2164, %v2160
    %v2167 = vsel %vm2149, %v2165, 0.0
    %2168 = vadd.xlane.f32.xlu0 %v2167
    %v2169 = vpop.xlane.xlu0 %2168
    %v2170 = vmul.f32 %v2169, %v876
    %v2171 = vadd.f32 %v2170, 1e-05
    %v2172 = vrsqrt.pop %v2171
    %v2174 = vrot.slane %v2172, 1
    %v2177 = vmul.f32 %v2158, %v2172
    %v2178 = vmul.f32 %v2159, %v2174
    %v2180 = vlaneseq
    %v2181 = vshrl.u32 %v2180, 7
    %v2182 = vsub.s32 0, %v2181
    %v2183 = vrot.slane %v2141, %v2182
    %v2185 = vmul.f32 %v2177, %v2183
    %v2186 = vmul.f32 %v2178, %v2183
    %v2188 = vlaneseq
    %v2189 = vshrl.u32 %v2188, 7
    %v2190 = vsub.s32 0, %v2189
    %v2191 = vrot.slane %v2142, %v2190
    %v2193 = vadd.f32 %v2185, %v2191
    %v2194 = vadd.f32 %v2186, %v2191
    %v2195 = vpack.c.bf16 %v2193, %v2193
    %v2196 = vpack.c.bf16 %v2194, %v2194
    %v2197 = vld [vmem:[%s17] sm:$0xf]
    %v2198 = vld [vmem:[%s17 + $0x4] sm:$0xf]
    %v2199 = vld [vmem:[%s17 + $0x8] sm:$0xf]
    %v2200 = vld [vmem:[%s17 + $0xc] sm:$0xf]
    %v2201 = vld [vmem:[%s18] sm:$0x1]
    %v2203 = vlaneseq
    %v2204 = vshrl.u32 %v2203, 7
    %v2205 = vsub.s32 0, %v2204
    %v2206 = vrot.slane %v2201, %v2205
    %v2210 = vunpack.c.l.b16 %v2195
    %v2211 = vunpack.c.l.b16 %v2196
    %v2212 = vrot.slane %v2211, 7
    %v2213 = vsel %vm2146, %v2212, %v2210
    %v2214 = vpack.c.b16 %v2213, %v2213
    %v2219 = vunpack.c.l.b16 %v2197
    %v2220 = vunpack.c.l.b16 %v2198
    %v2221 = vunpack.c.l.b16 %v2199
    %v2222 = vunpack.c.l.b16 %v2200
    %v2223 = vpack.c.b16 %v2220, %v2219
    %v2224 = vpack.c.b16 %v2222, %v2221
    %v2228 = vsel %vm191, %v2214, 0
    %2230 = vmatprep.subr.bf16.mxu0 0
    %2231 = vmatpush1.bf16.msra.mxu0 0
    %2232 = vmatprep.subr.bf16.mxu0 0
    %2233 = vmatpush1.bf16.msra.mxu0 0
    %2234 = vmatprep.subr.bf16.mxu0 0
    %2235 = vmatpush1.bf16.msra.mxu0 0
    %2236 = vmatprep.subr.bf16.mxu0 0
    %2237 = vmatpush1.bf16.msra.mxu0 0
    %2238 = vmatprep.subr.bf16.mxu0 0
    %2239 = vmatpush1.bf16.msra.mxu0 0
    %2240 = vmatprep.subr.bf16.mxu0 0
    %2241 = vmatpush1.bf16.msra.mxu0 0
    %2242 = vmatprep.subr.bf16.mxu0 0
    %2243 = vmatpush1.bf16.msra.mxu0 %v2224
    %2244 = vmatprep.subr.bf16.mxu0 0
    %2245 = vmatpush1.bf16.msra.mxu0 %v2223
    %2246 = vmatprep.subr.bf16.mxu0 0
    %2247 = vmatpush2.bf16.msra.mxu0 0
    %2248 = vmatprep.subr.bf16.mxu0 0
    %2249 = vmatpush2.bf16.msra.mxu0 0
    %2250 = vmatprep.subr.bf16.mxu0 0
    %2251 = vmatpush2.bf16.msra.mxu0 0
    %2252 = vmatprep.subr.bf16.mxu0 0
    %2253 = vmatpush2.bf16.msra.mxu0 0
    %2254 = vmatprep.subr.bf16.mxu0 0
    %2255 = vmatpush2.bf16.msra.mxu0 0
    %2256 = vmatprep.subr.bf16.mxu0 0
    %2257 = vmatpush2.bf16.msra.mxu0 0
    %2258 = vmatprep.subr.bf16.mxu0 0
    %2259 = vmatpush2.bf16.msra.mxu0 0
    %2260 = vmatprep.subr.bf16.mxu0 0
    %2261 = vmatpush2.bf16.msra.mxu0 0
    %2262 = vmatprep.mubr.bf16.mxu0 0
    %2263 = vmatmul.mubr.bf16.gmra.mxu0 %v2228
    %v2264 = vpop.f32.mrf.mxu0
    %v2265 = vadd.f32 %v2206, %v2264
    %v2266 = vpop.f32.mrf.mxu0
    %v2267 = vpop.f32.mrf.mxu0
    %v2268 = vpop.f32.mrf.mxu0
    %2269 = vdwg.mxu0
    %2270 = vst [vmem:[#allocation6] sm:$0x3] %v2265
    // Predicated region
    $region82: #{tpu_custom_call.1} parent=1 // pred_check
      _
    $region83: #{tpu_custom_call.1} parent=1 // pred_check_branch
      %2272 = sbr.rel (0) target = $region85
    $region84: #{tpu_custom_call.1} parent=1 // pred_region
      %s2274 = ssub.s32 32, 32
      %2275 = vsyncadd [#allocation4], %s2274
      %s2277 = sshll.u32 [#allocation6], 4
      %s2278 = int_to_ptr.vmem [resolvable:$true] %s2277
      %2280 = dma.vmem_to_hbm [thread:$0]  %s2278, 32, %s19, [#allocation4]
    $region85: #{tpu_custom_call.1} parent=1 // pred_fallthru
      _
    // Predicated region
    $region86: #{tpu_custom_call.1} parent=1 // pred_check
      _
    $region87: #{tpu_custom_call.1} parent=1 // pred_check_branch
      %2282 = sbr.rel (0) target = $region89
    $region88: #{tpu_custom_call.1} parent=1 // pred_region
      %2283 = dma.done [#allocation4], 32
    $region89: #{tpu_custom_call.1} parent=1 // pred_fallthru
      _
    %2284 = vsyncpa [#allocation4], 1
    %2285 = vsyncpa [#allocation5], 1

</llo_original>
